<compile_context>
chip_gen: v6e
topology: v6e:2x2x1
jax: 0.10.0
libtpu: 0.0.40
codegen_flags: <defaults>
</compile_context>

<pallas_src>
import math

import jax
import jax.numpy as jnp
from jax import lax
from jax.experimental import pallas as pl
from jax.experimental.pallas import tpu as pltpu


# ---------------------------------------------------------------------------
# Fused conv stack kernel (per batch block, everything stays in VMEM):
#   conv1(k=3, s=2, p=1)+ReLU -> depthwise(k=3, p=1, groups=32)+ReLU ->
#   pointwise(1x1)+ReLU -> maxpool(2)
# Layout: channels on sublanes, length (L4) on lanes; conv1 output positions
# are split into even/odd planes so maxpool pairs are exactly (even, odd).
# ---------------------------------------------------------------------------

def conv_stack_kernel(xc_ref, w1_ref, b1_ref, wdw_ref, bdw_ref,
                      wpw_ref, bpw_ref, o_ref):
    """xc_ref : (Bblk, 2, 3*Cin, L4)  im2col'd input; plane 0 feeds even conv1
               positions l=2p, plane 1 feeds odd positions l=2p+1 (k = ci*3+tap)
    w1_ref : (C1, 3*Cin)   conv1 weight
    b1_ref : (C1, 1)
    wdw_ref: (C1, 3)       depthwise taps
    bdw_ref: (C1, 1)
    wpw_ref: (C2, C1)      pointwise weight
    bpw_ref: (C2, 1)
    o_ref  : (Bblk, C2, L4) pooled features, channel-major (torch flatten order)
    """
    Bblk, _two, K1, L4 = xc_ref.shape
    C1 = w1_ref.shape[0]
    C2 = wpw_ref.shape[0]

    xc = xc_ref[...]
    b1 = b1_ref[...]                                        # (C1, 1)

    # --- conv1 (stride 2) + ReLU, even / odd output planes -------------------
    w1b = jnp.broadcast_to(w1_ref[...], (Bblk, C1, K1))
    h_e = jnp.einsum('bck,bkp->bcp', w1b, xc[:, 0],
                     preferred_element_type=jnp.float32)
    h_o = jnp.einsum('bck,bkp->bcp', w1b, xc[:, 1],
                     preferred_element_type=jnp.float32)
    h_e = jnp.maximum(h_e + b1, 0.0)                        # h[2p]
    h_o = jnp.maximum(h_o + b1, 0.0)                        # h[2p+1]

    # --- depthwise conv (k=3, pad=1, groups=C1) + ReLU ------------------------
    #   hd[2p]   = w0*h[2p-1] + w1*h[2p]   + w2*h[2p+1]
    #   hd[2p+1] = w0*h[2p]   + w1*h[2p+1] + w2*h[2p+2]
    w_t0 = wdw_ref[:, 0:1]                                  # (C1, 1)
    w_t1 = wdw_ref[:, 1:2]
    w_t2 = wdw_ref[:, 2:3]
    bdw = bdw_ref[...]
    zcol = jnp.zeros((Bblk, C1, 1), jnp.float32)
    h_o_prev = jnp.concatenate([zcol, h_o[:, :, :L4 - 1]], axis=2)   # h[2p-1]
    h_e_next = jnp.concatenate([h_e[:, :, 1:], zcol], axis=2)        # h[2p+2]
    hd_e = jnp.maximum(w_t0 * h_o_prev + w_t1 * h_e + w_t2 * h_o + bdw, 0.0)
    hd_o = jnp.maximum(w_t0 * h_e + w_t1 * h_o + w_t2 * h_e_next + bdw, 0.0)

    # --- pointwise 1x1 conv + ReLU --------------------------------------------
    wpwb = jnp.broadcast_to(wpw_ref[...], (Bblk, C2, C1))
    bpw = bpw_ref[...]
    hp_e = jnp.einsum('boc,bcp->bop', wpwb, hd_e,
                      preferred_element_type=jnp.float32)
    hp_o = jnp.einsum('boc,bcp->bop', wpwb, hd_o,
                      preferred_element_type=jnp.float32)
    hp_e = jnp.maximum(hp_e + bpw, 0.0)
    hp_o = jnp.maximum(hp_o + bpw, 0.0)

    # --- maxpool(kernel=2, stride=2): pairs are exactly (even, odd) -----------
    o_ref[...] = jnp.maximum(hp_e, hp_o)


# ---------------------------------------------------------------------------
# Fused MLP + heads kernel: grid = (batch blocks, fc1 K tiles)
# ---------------------------------------------------------------------------

def mlp_kernel(feats_ref, w1_ref, b1_ref, w2_ref, b2_ref, wh_ref, bh_ref,
               out_ref, acc_ref):
    """acc_ref: (Bb, H1) f32 VMEM accumulator for the tiled fc1 reduction."""
    k = pl.program_id(1)
    nk = pl.num_programs(1)

    @pl.when(k == 0)
    def _():
        acc_ref[...] = jnp.zeros_like(acc_ref)

    acc_ref[...] += jnp.dot(feats_ref[...], w1_ref[...].astype(jnp.float32),
                            preferred_element_type=jnp.float32)

    @pl.when(k == nk - 1)
    def _():
        # TODO(synk): nn.Dropout is identity here (eval-mode semantics).
        h1 = jnp.maximum(acc_ref[...] + b1_ref[...], 0.0)
        h2 = jnp.dot(h1, w2_ref[...], preferred_element_type=jnp.float32) + b2_ref[...]
        h2 = jnp.maximum(h2, 0.0)
        z = jnp.dot(h2, wh_ref[...], preferred_element_type=jnp.float32) + bh_ref[...]
        ncol = z.shape[1]
        col = lax.broadcasted_iota(jnp.int32, z.shape, 1)
        sig = 1.0 / (1.0 + jnp.exp(-z))
        # torch softplus (beta=1, threshold=20)
        sp = jnp.where(z > 20.0, z, jnp.log1p(jnp.exp(jnp.minimum(z, 20.0))))
        out_ref[...] = jnp.where(col == 0, sig,
                                 jnp.where(col == ncol - 1, sp, z))


# ---------------------------------------------------------------------------
# Wrappers
# ---------------------------------------------------------------------------

def _im2col_split(x_ncl):
    """(B, Cin, L) -> (B, 2, 3*Cin, L4) for stride-2 / pad-1 conv1.

    Plane t (0=even, 1=odd) row ci*3+tap, column p holds the padded input
    sample at index 4p + 2t + tap (pad offset already included)."""
    B, Cin, L = x_ncl.shape
    assert L % 4 == 0, "input_size must be divisible by 4"
    L4 = L // 4
    xp = jnp.pad(x_ncl, ((0, 0), (0, 0), (1, 1)))            # padding=1 on length
    planes = []
    for t in range(2):
        taps = []
        for tap in range(3):
            start = 2 * t + tap
            stop = start + 4 * (L4 - 1) + 1                  # <= L + 1
            taps.append(lax.slice_in_dim(xp, start, stop, stride=4, axis=2))
        planes.append(jnp.stack(taps, axis=2).reshape(B, Cin * 3, L4))
    return jnp.stack(planes, axis=1)


def conv_stack(x_col, p):
    """x_col: (B, 2, 3*Cin, L4) -> (B, 64, L4) pooled features (channel-major)."""
    B, _two, K1, L4 = x_col.shape
    C1 = p["c1_w"].shape[0]
    C2 = p["pw_w"].shape[0]

    # Size the batch block so roughly 8 MiB of intermediates live per grid step
    # (safe under the scoped-VMEM defaults on v5e/v6e/v7x), and keep >= 2 grid
    # steps whenever possible so the v7x megacore has work on both cores.
    per_elem_bytes = 4 * L4 * (2 * K1 + 6 * C1 + 4 * C2)
    Bblk = max(1, min(B, (8 << 20) // max(per_elem_bytes, 1), 128))
    if B > 1:
        Bblk = min(Bblk, pl.cdiv(B, 2))
    nb = pl.cdiv(B, Bblk)

    L1 = 2 * L4
    flops = 2 * B * L1 * (C1 * K1 + 3 * C1 + C1 * C2)
    bytes_accessed = 4 * (B * 2 * K1 * L4 + B * C2 * L4
                          + C1 * K1 + 3 * C1 + C1 * C2 + 2 * C1 + 2 * C2)

    return pl.pallas_call(
        conv_stack_kernel,
        out_shape=jax.ShapeDtypeStruct((B, C2, L4), jnp.float32),
        grid=(nb,),
        in_specs=[
            pl.BlockSpec((Bblk, 2, K1, L4), lambda i: (i, 0, 0, 0)),
            pl.BlockSpec((C1, K1), lambda i: (0, 0)),
            pl.BlockSpec((C1, 1), lambda i: (0, 0)),
            pl.BlockSpec((C1, 3), lambda i: (0, 0)),
            pl.BlockSpec((C1, 1), lambda i: (0, 0)),
            pl.BlockSpec((C2, C1), lambda i: (0, 0)),
            pl.BlockSpec((C2, 1), lambda i: (0, 0)),
        ],
        out_specs=pl.BlockSpec((Bblk, C2, L4), lambda i: (i, 0, 0)),
        compiler_params=pltpu.CompilerParams(
            dimension_semantics=("parallel",),
            vmem_limit_bytes=48 * 1024 * 1024),
        cost_estimate=pl.CostEstimate(flops=flops, transcendentals=0,
                                      bytes_accessed=bytes_accessed),
    )(x_col, p["c1_w"], p["c1_b"], p["dw_w"], p["dw_b"], p["pw_w"], p["pw_b"])


def _round_up(x, m):
    return (x + m - 1) // m * m


def _choose_tk(F, target=2048):
    """K tile for the fc1 reduction: ~target wide, never the full weight."""
    if F <= target:
        return _round_up(F, 128)
    for tk in (2048, 1024, 512, 256, 128):
        if F % tk == 0:
            return tk
    return target          # caller zero-pads F up to a multiple of target


def mlp_heads(feats, p):
    """feats: (B, F) channel-major conv features -> (B, 25) fused head outputs."""
    B, F = feats.shape
    w1 = p["fc1_w"]
    H1 = w1.shape[1]
    H2 = p["fc2_w"].shape[1]
    NH = p["head_w"].shape[1]

    tk = _choose_tk(F)
    F_pad = _round_up(F, tk)
    if F_pad != F:
        # TODO(synk): pre-pad fc1_w at parameter-build time to avoid this
        # per-call weight pad (extra HBM pass); the math is exact either way.
        feats = jnp.pad(feats, ((0, 0), (0, F_pad - F)))
        w1 = jnp.pad(w1, ((0, F_pad - F), (0, 0)))
    nk = F_pad // tk

    Bb = min(B, 256)                 # feats block <= 2 MiB at tk=2048
    nb = pl.cdiv(B, Bb)

    flops = 2 * B * (F * H1 + H1 * H2 + H2 * NH)
    bytes_accessed = int(feats.size * feats.dtype.itemsize
                         + w1.size * w1.dtype.itemsize
                         + 4 * (H1 * H2 + H2 * NH + H1 + H2 + NH + B * NH))

    return pl.pallas_call(
        mlp_kernel,
        out_shape=jax.ShapeDtypeStruct((B, NH), jnp.float32),
        grid=(nb, nk),
        in_specs=[
            pl.BlockSpec((Bb, tk), lambda i, k: (i, k)),
            pl.BlockSpec((tk, H1), lambda i, k: (k, 0)),
            pl.BlockSpec((1, H1), lambda i, k: (0, 0)),
            pl.BlockSpec((H1, H2), lambda i, k: (0, 0)),
            pl.BlockSpec((1, H2), lambda i, k: (0, 0)),
            pl.BlockSpec((H2, NH), lambda i, k: (0, 0)),
            pl.BlockSpec((1, NH), lambda i, k: (0, 0)),
        ],
        out_specs=pl.BlockSpec((Bb, NH), lambda i, k: (i, 0)),
        scratch_shapes=[pltpu.VMEM((Bb, H1), jnp.float32)],
        compiler_params=pltpu.CompilerParams(
            dimension_semantics=("parallel", "arbitrary"),
            vmem_limit_bytes=48 * 1024 * 1024),
        cost_estimate=pl.CostEstimate(flops=flops, transcendentals=4 * B * NH,
                                      bytes_accessed=bytes_accessed),
    )(feats, w1, p["fc1_b"], p["fc2_w"], p["fc2_b"], p["head_w"], p["head_b"])


def forward(x_ncl, params):
    """x_ncl: (B, Cin, L) like PyTorch. Returns the 5-tuple of head outputs."""
    x = x_ncl.astype(jnp.float32)
    x_col = _im2col_split(x)                           # (B, 2, 3*Cin, L/4), tiny
    conv_out = conv_stack(x_col, params)               # (B, 64, L/4)
    feats = conv_out.reshape(conv_out.shape[0], -1)    # == torch x.view(B,-1); free reshape
    heads = mlp_heads(feats, params)                   # (B, 25)
    out_check = heads[:, 0:1]
    out_type = heads[:, 1:4]
    out_size_cls = heads[:, 4:11]
    out_type_size = heads[:, 11:24]
    out_size_reg = heads[:, 24:25]
    return out_check, out_type, out_size_cls, out_type_size, out_size_reg


# ---------------------------------------------------------------------------
# Deterministic parameter init (xavier_uniform weights, zero biases),
# laid out for the kernels above.
# ---------------------------------------------------------------------------

def xavier_uniform(key, shape, fan_in, fan_out):
    limit = math.sqrt(6.0 / (fan_in + fan_out))
    return jax.random.uniform(key, shape, jnp.float32, -limit, limit)


def make_params(key, input_channels=3, input_size=1024,
                num_type_classes=3, num_size_classes=7,
                num_type_size_classes=13, fc1_weight_dtype=jnp.float32):
    """fc1_weight_dtype=jnp.bfloat16 halves the dominant HBM stream on v6e/v7x
    (accumulation stays f32; small numeric deviation from the f32 reference)."""
    assert input_size % 4 == 0
    C1, C2 = 32, 64
    L4 = input_size // 4
    F = C2 * L4
    ks = jax.random.split(key, 6)
    p = {}

    # conv1: torch (32, Cin, 3) -> (32, Cin*3), column k = ci*3 + tap
    w = xavier_uniform(ks[0], (C1, input_channels, 3),
                       input_channels * 3, C1 * 3)
    p["c1_w"] = w.reshape(C1, input_channels * 3)
    p["c1_b"] = jnp.zeros((C1, 1), jnp.float32)

    # dwconv1 (groups=32): torch (32, 1, 3) -> (32, 3)
    w = xavier_uniform(ks[1], (C1, 1, 3), 3, 3 * C1)
    p["dw_w"] = w.reshape(C1, 3)
    p["dw_b"] = jnp.zeros((C1, 1), jnp.float32)

    # pointwise1: torch (64, 32, 1) -> (64, 32)
    w = xavier_uniform(ks[2], (C2, C1, 1), C1, C2)
    p["pw_w"] = w.reshape(C2, C1)
    p["pw_b"] = jnp.zeros((C2, 1), jnp.float32)

    # fc1: torch (512, F); the conv kernel emits channel-major features
    # (col = c*L4 + p), exactly torch's x.view(B, -1) order -> plain transpose.
    w = xavier_uniform(ks[3], (512, F), F, 512)
    p["fc1_w"] = w.T.astype(fc1_weight_dtype)
    p["fc1_b"] = jnp.zeros((1, 512), jnp.float32)

    # fc2: torch (256, 512) -> (512, 256)
    w = xavier_uniform(ks[4], (256, 512), 512, 256)
    p["fc2_w"] = w.T
    p["fc2_b"] = jnp.zeros((1, 256), jnp.float32)

    # Five heads fused into one (256, 25) matrix.
    # Columns: [check(1), type(3), size_cls(7), type_size(13), size_reg(1)]
    head_dims = (1, num_type_classes, num_size_classes, num_type_size_classes, 1)
    hkeys = jax.random.split(ks[5], len(head_dims))
    hw = [xavier_uniform(k, (d, 256), 256, d).T for k, d in zip(hkeys, head_dims)]
    p["head_w"] = jnp.concatenate(hw, axis=1)
    p["head_b"] = jnp.zeros((1, sum(head_dims)), jnp.float32)
    return p


if __name__ == "__main__":
    B, Cin, Lin = 2, 3, 64   # small shapes; module default is input_size=1024

    key = jax.random.PRNGKey(0)
    kx, kp = jax.random.split(key)
    x = jax.random.normal(kx, (B, Cin, Lin), jnp.float32)   # PyTorch NCL layout
    params = make_params(kp, input_channels=Cin, input_size=Lin)

    outs = jax.jit(forward)(x, params)
    outs = jax.block_until_ready(outs)

    out_check, out_type, out_size_cls, out_type_size, out_size_reg = outs
    assert out_check.shape == (B, 1)
    assert out_type.shape == (B, 3)
    assert out_size_cls.shape == (B, 7)
    assert out_type_size.shape == (B, 13)
    assert out_size_reg.shape == (B, 1)
    all_out = jnp.concatenate(
        [out_check, out_type, out_size_cls, out_type_size, out_size_reg], axis=1)
    assert bool(jnp.all(jnp.isfinite(all_out)))
    assert bool(jnp.all((out_check >= 0.0) & (out_check <= 1.0)))
    assert bool(jnp.all(out_size_reg >= 0.0))
    print("KERNEL_OK")
</pallas_src>

<mosaic_0001>
module attributes {stable_mosaic.version = 11 : i64} {
  func.func @conv_stack_kernel(%arg0: i32, %arg1: memref<1x2x9x16xf32, #tpu.memory_space<vmem>>, %arg2: memref<32x9xf32, #tpu.memory_space<vmem>>, %arg3: memref<32x1xf32, #tpu.memory_space<vmem>>, %arg4: memref<32x3xf32, #tpu.memory_space<vmem>>, %arg5: memref<32x1xf32, #tpu.memory_space<vmem>>, %arg6: memref<64x32xf32, #tpu.memory_space<vmem>>, %arg7: memref<64x1xf32, #tpu.memory_space<vmem>>, %arg8: memref<1x64x16xf32, #tpu.memory_space<vmem>>) attributes {dimension_semantics = [#tpu.dimension_semantics<parallel>], iteration_bounds = array<i64: 2>, scalar_prefetch = 0 : i64, scratch_operands = 0 : i64, tpu.core_type = #tpu.core_type<tc>, window_params = [{transform_indices = @transform_0, window_bounds = array<i64: 1, 2, 9, 16>}, {pipeline_mode = #tpu.pipeline_mode<synchronous>, transform_indices = @transform_1, window_bounds = array<i64: 32, 9>}, {pipeline_mode = #tpu.pipeline_mode<synchronous>, transform_indices = @transform_2, window_bounds = array<i64: 32, 1>}, {pipeline_mode = #tpu.pipeline_mode<synchronous>, transform_indices = @transform_3, window_bounds = array<i64: 32, 3>}, {pipeline_mode = #tpu.pipeline_mode<synchronous>, transform_indices = @transform_4, window_bounds = array<i64: 32, 1>}, {pipeline_mode = #tpu.pipeline_mode<synchronous>, transform_indices = @transform_5, window_bounds = array<i64: 64, 32>}, {pipeline_mode = #tpu.pipeline_mode<synchronous>, transform_indices = @transform_6, window_bounds = array<i64: 64, 1>}, {transform_indices = @transform_7, window_bounds = array<i64: 1, 64, 16>}]} {
    %c0 = arith.constant 0 : index
    %c0_0 = arith.constant 0 : index
    %c0_1 = arith.constant 0 : index
    %c0_2 = arith.constant 0 : index
    %0 = vector.load %arg1[%c0, %c0_0, %c0_1, %c0_2] : memref<1x2x9x16xf32, #tpu.memory_space<vmem>>, vector<1x2x9x16xf32>
    %c0_3 = arith.constant 0 : index
    %c0_4 = arith.constant 0 : index
    %1 = vector.load %arg3[%c0_3, %c0_4] : memref<32x1xf32, #tpu.memory_space<vmem>>, vector<32x1xf32>
    %c0_5 = arith.constant 0 : index
    %c0_6 = arith.constant 0 : index
    %2 = vector.load %arg2[%c0_5, %c0_6] : memref<32x9xf32, #tpu.memory_space<vmem>>, vector<32x9xf32>
    %3 = vector.shape_cast %2 : vector<32x9xf32> to vector<1x32x9xf32>
    %4 = vector.extract_strided_slice %0 {offsets = [0, 0, 0, 0], sizes = [1, 1, 9, 16], strides = [1, 1, 1, 1]} : vector<1x2x9x16xf32> to vector<1x1x9x16xf32>
    %5 = vector.shape_cast %4 : vector<1x1x9x16xf32> to vector<1x9x16xf32>
    "tpu.trace_start"() <{level = 10 : i32, message = "bck,bkp->bcp"}> : () -> ()
    %cst = arith.constant dense<0.000000e+00> : vector<1x32x16xf32>
    %6 = tpu.matmul %3, %5, %cst {dimension_numbers = #tpu.dot_dimension_numbers<[2], [1], [1], [2], [0, 0, 0, 1, 1, 2], [0], [0]>} : vector<1x32x9xf32>, vector<1x9x16xf32>, vector<1x32x16xf32> -> vector<1x32x16xf32>
    "tpu.trace_stop"() : () -> ()
    %7 = vector.extract_strided_slice %0 {offsets = [0, 1, 0, 0], sizes = [1, 1, 9, 16], strides = [1, 1, 1, 1]} : vector<1x2x9x16xf32> to vector<1x1x9x16xf32>
    %8 = vector.shape_cast %7 : vector<1x1x9x16xf32> to vector<1x9x16xf32>
    "tpu.trace_start"() <{level = 10 : i32, message = "bck,bkp->bcp"}> : () -> ()
    %cst_7 = arith.constant dense<0.000000e+00> : vector<1x32x16xf32>
    %9 = tpu.matmul %3, %8, %cst_7 {dimension_numbers = #tpu.dot_dimension_numbers<[2], [1], [1], [2], [0, 0, 0, 1, 1, 2], [0], [0]>} : vector<1x32x9xf32>, vector<1x9x16xf32>, vector<1x32x16xf32> -> vector<1x32x16xf32>
    "tpu.trace_stop"() : () -> ()
    %10 = vector.shape_cast %1 : vector<32x1xf32> to vector<1x32x1xf32>
    %11 = vector.broadcast %10 : vector<1x32x1xf32> to vector<1x32x16xf32>
    %12 = arith.addf %6, %11 : vector<1x32x16xf32>
    %cst_8 = arith.constant 0.000000e+00 : f32
    %13 = vector.broadcast %cst_8 : f32 to vector<1x32x16xf32>
    %14 = arith.maximumf %12, %13 : vector<1x32x16xf32>
    %15 = vector.shape_cast %1 : vector<32x1xf32> to vector<1x32x1xf32>
    %16 = vector.broadcast %15 : vector<1x32x1xf32> to vector<1x32x16xf32>
    %17 = arith.addf %9, %16 : vector<1x32x16xf32>
    %cst_9 = arith.constant 0.000000e+00 : f32
    %18 = vector.broadcast %cst_9 : f32 to vector<1x32x16xf32>
    %19 = arith.maximumf %17, %18 : vector<1x32x16xf32>
    %c0_10 = arith.constant 0 : index
    %c0_11 = arith.constant 0 : index
    %20 = vector.load %arg4[%c0_10, %c0_11] : memref<32x3xf32, #tpu.memory_space<vmem>>, vector<32x1xf32>
    %c0_12 = arith.constant 0 : index
    %c1 = arith.constant 1 : index
    %21 = vector.load %arg4[%c0_12, %c1] : memref<32x3xf32, #tpu.memory_space<vmem>>, vector<32x1xf32>
    %c0_13 = arith.constant 0 : index
    %c2 = arith.constant 2 : index
    %22 = vector.load %arg4[%c0_13, %c2] : memref<32x3xf32, #tpu.memory_space<vmem>>, vector<32x1xf32>
    %c0_14 = arith.constant 0 : index
    %c0_15 = arith.constant 0 : index
    %23 = vector.load %arg5[%c0_14, %c0_15] : memref<32x1xf32, #tpu.memory_space<vmem>>, vector<32x1xf32>
    %cst_16 = arith.constant 0.000000e+00 : f32
    %24 = vector.broadcast %cst_16 : f32 to vector<1x32x1xf32>
    %25 = vector.extract_strided_slice %19 {offsets = [0, 0, 0], sizes = [1, 32, 15], strides = [1, 1, 1]} : vector<1x32x16xf32> to vector<1x32x15xf32>
    %26 = tpu.concatenate %24, %25 in 2 : vector<1x32x1xf32>, vector<1x32x15xf32> -> vector<1x32x16xf32>
    %27 = vector.extract_strided_slice %14 {offsets = [0, 0, 1], sizes = [1, 32, 15], strides = [1, 1, 1]} : vector<1x32x16xf32> to vector<1x32x15xf32>
    %28 = tpu.concatenate %27, %24 in 2 : vector<1x32x15xf32>, vector<1x32x1xf32> -> vector<1x32x16xf32>
    %29 = vector.shape_cast %20 : vector<32x1xf32> to vector<1x32x1xf32>
    %30 = vector.broadcast %29 : vector<1x32x1xf32> to vector<1x32x16xf32>
    %31 = arith.mulf %30, %26 : vector<1x32x16xf32>
    %32 = vector.shape_cast %21 : vector<32x1xf32> to vector<1x32x1xf32>
    %33 = vector.broadcast %32 : vector<1x32x1xf32> to vector<1x32x16xf32>
    %34 = arith.mulf %33, %14 : vector<1x32x16xf32>
    %35 = arith.addf %31, %34 : vector<1x32x16xf32>
    %36 = vector.shape_cast %22 : vector<32x1xf32> to vector<1x32x1xf32>
    %37 = vector.broadcast %36 : vector<1x32x1xf32> to vector<1x32x16xf32>
    %38 = arith.mulf %37, %19 : vector<1x32x16xf32>
    %39 = arith.addf %35, %38 : vector<1x32x16xf32>
    %40 = vector.shape_cast %23 : vector<32x1xf32> to vector<1x32x1xf32>
    %41 = vector.broadcast %40 : vector<1x32x1xf32> to vector<1x32x16xf32>
    %42 = arith.addf %39, %41 : vector<1x32x16xf32>
    %cst_17 = arith.constant 0.000000e+00 : f32
    %43 = vector.broadcast %cst_17 : f32 to vector<1x32x16xf32>
    %44 = arith.maximumf %42, %43 : vector<1x32x16xf32>
    %45 = vector.shape_cast %20 : vector<32x1xf32> to vector<1x32x1xf32>
    %46 = vector.broadcast %45 : vector<1x32x1xf32> to vector<1x32x16xf32>
    %47 = arith.mulf %46, %14 : vector<1x32x16xf32>
    %48 = vector.shape_cast %21 : vector<32x1xf32> to vector<1x32x1xf32>
    %49 = vector.broadcast %48 : vector<1x32x1xf32> to vector<1x32x16xf32>
    %50 = arith.mulf %49, %19 : vector<1x32x16xf32>
    %51 = arith.addf %47, %50 : vector<1x32x16xf32>
    %52 = vector.shape_cast %22 : vector<32x1xf32> to vector<1x32x1xf32>
    %53 = vector.broadcast %52 : vector<1x32x1xf32> to vector<1x32x16xf32>
    %54 = arith.mulf %53, %28 : vector<1x32x16xf32>
    %55 = arith.addf %51, %54 : vector<1x32x16xf32>
    %56 = vector.shape_cast %23 : vector<32x1xf32> to vector<1x32x1xf32>
    %57 = vector.broadcast %56 : vector<1x32x1xf32> to vector<1x32x16xf32>
    %58 = arith.addf %55, %57 : vector<1x32x16xf32>
    %cst_18 = arith.constant 0.000000e+00 : f32
    %59 = vector.broadcast %cst_18 : f32 to vector<1x32x16xf32>
    %60 = arith.maximumf %58, %59 : vector<1x32x16xf32>
    %c0_19 = arith.constant 0 : index
    %c0_20 = arith.constant 0 : index
    %61 = vector.load %arg6[%c0_19, %c0_20] : memref<64x32xf32, #tpu.memory_space<vmem>>, vector<64x32xf32>
    %62 = vector.shape_cast %61 : vector<64x32xf32> to vector<1x64x32xf32>
    %c0_21 = arith.constant 0 : index
    %c0_22 = arith.constant 0 : index
    %63 = vector.load %arg7[%c0_21, %c0_22] : memref<64x1xf32, #tpu.memory_space<vmem>>, vector<64x1xf32>
    "tpu.trace_start"() <{level = 10 : i32, message = "boc,bcp->bop"}> : () -> ()
    %cst_23 = arith.constant dense<0.000000e+00> : vector<1x64x16xf32>
    %64 = tpu.matmul %62, %44, %cst_23 {dimension_numbers = #tpu.dot_dimension_numbers<[2], [1], [1], [2], [0, 0, 0, 1, 1, 2], [0], [0]>} : vector<1x64x32xf32>, vector<1x32x16xf32>, vector<1x64x16xf32> -> vector<1x64x16xf32>
    %cst_24 = arith.constant dense<0.000000e+00> : vector<1x64x16xf32>
    %65 = tpu.matmul %62, %60, %cst_24 {dimension_numbers = #tpu.dot_dimension_numbers<[2], [1], [1], [2], [0, 0, 0, 1, 1, 2], [0], [0]>} : vector<1x64x32xf32>, vector<1x32x16xf32>, vector<1x64x16xf32> -> vector<1x64x16xf32>
    "tpu.trace_stop"() : () -> ()
    %66 = vector.shape_cast %63 : vector<64x1xf32> to vector<1x64x1xf32>
    %67 = vector.broadcast %66 : vector<1x64x1xf32> to vector<1x64x16xf32>
    %68 = arith.addf %64, %67 : vector<1x64x16xf32>
    %cst_25 = arith.constant 0.000000e+00 : f32
    %69 = vector.broadcast %cst_25 : f32 to vector<1x64x16xf32>
    %70 = arith.maximumf %68, %69 : vector<1x64x16xf32>
    %71 = vector.shape_cast %63 : vector<64x1xf32> to vector<1x64x1xf32>
    %72 = vector.broadcast %71 : vector<1x64x1xf32> to vector<1x64x16xf32>
    %73 = arith.addf %65, %72 : vector<1x64x16xf32>
    %cst_26 = arith.constant 0.000000e+00 : f32
    %74 = vector.broadcast %cst_26 : f32 to vector<1x64x16xf32>
    %75 = arith.maximumf %73, %74 : vector<1x64x16xf32>
    %76 = arith.maximumf %70, %75 : vector<1x64x16xf32>
    %c0_27 = arith.constant 0 : index
    %c0_28 = arith.constant 0 : index
    %c0_29 = arith.constant 0 : index
    %77 = vector.load %arg8[%c0_27, %c0_28, %c0_29] : memref<1x64x16xf32, #tpu.memory_space<vmem>>, vector<1x64x16xf32>
    tpu.vector_store %arg8[%c0_27, %c0_28, %c0_29], %76 {strides = array<i32>} : memref<1x64x16xf32, #tpu.memory_space<vmem>>, vector<1x64x16xf32>,
    return
  }
  func.func @transform_0(%arg0: i32) -> (i32, i32, i32, i32) {
    %c0_i32 = arith.constant 0 : i32
    %c0_i32_0 = arith.constant 0 : i32
    %c0_i32_1 = arith.constant 0 : i32
    %c0_i32_2 = arith.constant 0 : i32
    return %arg0, %c0_i32, %c0_i32_0, %c0_i32_1 : i32, i32, i32, i32
  }
  func.func @transform_1(%arg0: i32) -> (i32, i32) {
    %c0_i32 = arith.constant 0 : i32
    %c0_i32_0 = arith.constant 0 : i32
    %c0_i32_1 = arith.constant 0 : i32
    return %c0_i32, %c0_i32_0 : i32, i32
  }
  func.func @transform_2(%arg0: i32) -> (i32, i32) {
    %c0_i32 = arith.constant 0 : i32
    %c0_i32_0 = arith.constant 0 : i32
    %c0_i32_1 = arith.constant 0 : i32
    return %c0_i32, %c0_i32_0 : i32, i32
  }
  func.func @transform_3(%arg0: i32) -> (i32, i32) {
    %c0_i32 = arith.constant 0 : i32
    %c0_i32_0 = arith.constant 0 : i32
    %c0_i32_1 = arith.constant 0 : i32
    return %c0_i32, %c0_i32_0 : i32, i32
  }
  func.func @transform_4(%arg0: i32) -> (i32, i32) {
    %c0_i32 = arith.constant 0 : i32
    %c0_i32_0 = arith.constant 0 : i32
    %c0_i32_1 = arith.constant 0 : i32
    return %c0_i32, %c0_i32_0 : i32, i32
  }
  func.func @transform_5(%arg0: i32) -> (i32, i32) {
    %c0_i32 = arith.constant 0 : i32
    %c0_i32_0 = arith.constant 0 : i32
    %c0_i32_1 = arith.constant 0 : i32
    return %c0_i32, %c0_i32_0 : i32, i32
  }
  func.func @transform_6(%arg0: i32) -> (i32, i32) {
    %c0_i32 = arith.constant 0 : i32
    %c0_i32_0 = arith.constant 0 : i32
    %c0_i32_1 = arith.constant 0 : i32
    return %c0_i32, %c0_i32_0 : i32, i32
  }
  func.func @transform_7(%arg0: i32) -> (i32, i32, i32) {
    %c0_i32 = arith.constant 0 : i32
    %c0_i32_0 = arith.constant 0 : i32
    %c0_i32_1 = arith.constant 0 : i32
    return %arg0, %c0_i32, %c0_i32_0 : i32, i32, i32
  }
}

module attributes {stable_mosaic.version = 11 : i64} {
  func.func @mlp_kernel(%arg0: i32, %arg1: i32, %arg2: memref<2x1024xf32, #tpu.memory_space<vmem>>, %arg3: memref<1024x512xf32, #tpu.memory_space<vmem>>, %arg4: memref<1x512xf32, #tpu.memory_space<vmem>>, %arg5: memref<512x256xf32, #tpu.memory_space<vmem>>, %arg6: memref<1x256xf32, #tpu.memory_space<vmem>>, %arg7: memref<256x25xf32, #tpu.memory_space<vmem>>, %arg8: memref<1x25xf32, #tpu.memory_space<vmem>>, %arg9: memref<2x25xf32, #tpu.memory_space<vmem>>, %arg10: memref<2x512xf32, #tpu.memory_space<vmem>>) attributes {dimension_semantics = [#tpu.dimension_semantics<parallel>, #tpu.dimension_semantics<arbitrary>], iteration_bounds = array<i64: 1, 1>, scalar_prefetch = 0 : i64, scratch_operands = 1 : i64, tpu.core_type = #tpu.core_type<tc>, window_params = [{transform_indices = @transform_0, window_bounds = array<i64: 2, 1024>}, {transform_indices = @transform_1, window_bounds = array<i64: 1024, 512>}, {pipeline_mode = #tpu.pipeline_mode<synchronous>, transform_indices = @transform_2, window_bounds = array<i64: 1, 512>}, {pipeline_mode = #tpu.pipeline_mode<synchronous>, transform_indices = @transform_3, window_bounds = array<i64: 512, 256>}, {pipeline_mode = #tpu.pipeline_mode<synchronous>, transform_indices = @transform_4, window_bounds = array<i64: 1, 256>}, {pipeline_mode = #tpu.pipeline_mode<synchronous>, transform_indices = @transform_5, window_bounds = array<i64: 256, 25>}, {pipeline_mode = #tpu.pipeline_mode<synchronous>, transform_indices = @transform_6, window_bounds = array<i64: 1, 25>}, {transform_indices = @transform_7, window_bounds = array<i64: 2, 25>}]} {
    %c0_i32 = arith.constant 0 : i32
    %0 = arith.cmpi eq, %arg1, %c0_i32 : i32
    %1 = arith.extui %0 : i1 to i32
    %c0_i32_0 = arith.constant 0 : i32
    %2 = arith.cmpi ne, %1, %c0_i32_0 : i32
    scf.if %2 {
      %cst_10 = arith.constant 0.000000e+00 : f32
      %12 = vector.broadcast %cst_10 : f32 to vector<2x512xf32>
      %c0_11 = arith.constant 0 : index
      %c0_12 = arith.constant 0 : index
      %13 = vector.load %arg10[%c0_11, %c0_12] : memref<2x512xf32, #tpu.memory_space<vmem>>, vector<2x512xf32>
      tpu.vector_store %arg10[%c0_11, %c0_12], %12 {strides = array<i32>} : memref<2x512xf32, #tpu.memory_space<vmem>>, vector<2x512xf32>,
    } else {
    }
    %c0 = arith.constant 0 : index
    %c0_1 = arith.constant 0 : index
    %3 = vector.load %arg10[%c0, %c0_1] : memref<2x512xf32, #tpu.memory_space<vmem>>, vector<2x512xf32>
    %c0_2 = arith.constant 0 : index
    %c0_3 = arith.constant 0 : index
    %4 = vector.load %arg2[%c0_2, %c0_3] : memref<2x1024xf32, #tpu.memory_space<vmem>>, vector<2x1024xf32>
    %c0_4 = arith.constant 0 : index
    %c0_5 = arith.constant 0 : index
    %5 = vector.load %arg3[%c0_4, %c0_5] : memref<1024x512xf32, #tpu.memory_space<vmem>>, vector<1024x512xf32>
    %cst = arith.constant dense<0.000000e+00> : vector<2x512xf32>
    %6 = tpu.matmul %4, %5, %cst {dimension_numbers = #tpu.dot_dimension_numbers<[1], [0], [0], [1], [0, 0, 1, 1], [], []>} : vector<2x1024xf32>, vector<1024x512xf32>, vector<2x512xf32> -> vector<2x512xf32>
    %7 = arith.addf %3, %6 : vector<2x512xf32>
    %c0_6 = arith.constant 0 : index
    %c0_7 = arith.constant 0 : index
    %8 = vector.load %arg10[%c0_6, %c0_7] : memref<2x512xf32, #tpu.memory_space<vmem>>, vector<2x512xf32>
    tpu.vector_store %arg10[%c0_6, %c0_7], %7 {strides = array<i32>} : memref<2x512xf32, #tpu.memory_space<vmem>>, vector<2x512xf32>,
    %c0_i32_8 = arith.constant 0 : i32
    %9 = arith.cmpi eq, %arg1, %c0_i32_8 : i32
    %10 = arith.extui %9 : i1 to i32
    %c0_i32_9 = arith.constant 0 : i32
    %11 = arith.cmpi ne, %10, %c0_i32_9 : i32
    scf.if %11 {
      %c0_10 = arith.constant 0 : index
      %c0_11 = arith.constant 0 : index
      %12 = vector.load %arg10[%c0_10, %c0_11] : memref<2x512xf32, #tpu.memory_space<vmem>>, vector<2x512xf32>
      %c0_12 = arith.constant 0 : index
      %c0_13 = arith.constant 0 : index
      %13 = vector.load %arg4[%c0_12, %c0_13] : memref<1x512xf32, #tpu.memory_space<vmem>>, vector<1x512xf32>
      %14 = vector.broadcast %13 : vector<1x512xf32> to vector<2x512xf32>
      %15 = arith.addf %12, %14 : vector<2x512xf32>
      %cst_14 = arith.constant 0.000000e+00 : f32
      %16 = vector.broadcast %cst_14 : f32 to vector<2x512xf32>
      %17 = arith.maximumf %15, %16 : vector<2x512xf32>
      %c0_15 = arith.constant 0 : index
      %c0_16 = arith.constant 0 : index
      %18 = vector.load %arg5[%c0_15, %c0_16] : memref<512x256xf32, #tpu.memory_space<vmem>>, vector<512x256xf32>
      %cst_17 = arith.constant dense<0.000000e+00> : vector<2x256xf32>
      %19 = tpu.matmul %17, %18, %cst_17 {dimension_numbers = #tpu.dot_dimension_numbers<[1], [0], [0], [1], [0, 0, 1, 1], [], []>} : vector<2x512xf32>, vector<512x256xf32>, vector<2x256xf32> -> vector<2x256xf32>
      %c0_18 = arith.constant 0 : index
      %c0_19 = arith.constant 0 : index
      %20 = vector.load %arg6[%c0_18, %c0_19] : memref<1x256xf32, #tpu.memory_space<vmem>>, vector<1x256xf32>
      %21 = vector.broadcast %20 : vector<1x256xf32> to vector<2x256xf32>
      %22 = arith.addf %19, %21 : vector<2x256xf32>
      %cst_20 = arith.constant 0.000000e+00 : f32
      %23 = vector.broadcast %cst_20 : f32 to vector<2x256xf32>
      %24 = arith.maximumf %22, %23 : vector<2x256xf32>
      %c0_21 = arith.constant 0 : index
      %c0_22 = arith.constant 0 : index
      %25 = vector.load %arg7[%c0_21, %c0_22] : memref<256x25xf32, #tpu.memory_space<vmem>>, vector<256x25xf32>
      %cst_23 = arith.constant dense<0.000000e+00> : vector<2x25xf32>
      %26 = tpu.matmul %24, %25, %cst_23 {dimension_numbers = #tpu.dot_dimension_numbers<[1], [0], [0], [1], [0, 0, 1, 1], [], []>} : vector<2x256xf32>, vector<256x25xf32>, vector<2x25xf32> -> vector<2x25xf32>
      %c0_24 = arith.constant 0 : index
      %c0_25 = arith.constant 0 : index
      %27 = vector.load %arg8[%c0_24, %c0_25] : memref<1x25xf32, #tpu.memory_space<vmem>>, vector<1x25xf32>
      %28 = vector.broadcast %27 : vector<1x25xf32> to vector<2x25xf32>
      %29 = arith.addf %26, %28 : vector<2x25xf32>
      %30 = tpu.iota {dimensions = array<i32: 1>} : vector<2x25xi32>
      %cst_26 = arith.constant 0.000000e+00 : f32
      %31 = vector.broadcast %cst_26 : f32 to vector<2x25xf32>
      %32 = arith.subf %31, %29 : vector<2x25xf32>
      %33 = math.exp %32 : vector<2x25xf32>
      %cst_27 = arith.constant 1.000000e+00 : f32
      %34 = vector.broadcast %cst_27 : f32 to vector<2x25xf32>
      %35 = arith.addf %34, %33 : vector<2x25xf32>
      %cst_28 = arith.constant 1.000000e+00 : f32
      %36 = vector.broadcast %cst_28 : f32 to vector<2x25xf32>
      %37 = arith.divf %36, %35 : vector<2x25xf32>
      %cst_29 = arith.constant 2.000000e+01 : f32
      %38 = vector.broadcast %cst_29 : f32 to vector<2x25xf32>
      %39 = arith.cmpf ogt, %29, %38 : vector<2x25xf32>
      %cst_30 = arith.constant 2.000000e+01 : f32
      %40 = vector.broadcast %cst_30 : f32 to vector<2x25xf32>
      %41 = arith.minimumf %29, %40 : vector<2x25xf32>
      %42 = math.exp %41 : vector<2x25xf32>
      %43 = math.log1p %42 : vector<2x25xf32>
      %44 = arith.select %39, %29, %43 : vector<2x25xi1>, vector<2x25xf32>
      %c0_i32_31 = arith.constant 0 : i32
      %45 = vector.broadcast %c0_i32_31 : i32 to vector<2x25xi32>
      %46 = arith.cmpi eq, %30, %45 : vector<2x25xi32>
      %c24_i32 = arith.constant 24 : i32
      %47 = vector.broadcast %c24_i32 : i32 to vector<2x25xi32>
      %48 = arith.cmpi eq, %30, %47 : vector<2x25xi32>
      %49 = arith.select %48, %44, %29 : vector<2x25xi1>, vector<2x25xf32>
      %50 = arith.select %46, %37, %49 : vector<2x25xi1>, vector<2x25xf32>
      %c0_32 = arith.constant 0 : index
      %c0_33 = arith.constant 0 : index
      %51 = vector.load %arg9[%c0_32, %c0_33] : memref<2x25xf32, #tpu.memory_space<vmem>>, vector<2x25xf32>
      tpu.vector_store %arg9[%c0_32, %c0_33], %50 {strides = array<i32>} : memref<2x25xf32, #tpu.memory_space<vmem>>, vector<2x25xf32>,
    } else {
    }
    return
  }
  func.func @transform_0(%arg0: i32, %arg1: i32) -> (i32, i32) {
    %c0_i32 = arith.constant 0 : i32
    return %arg0, %arg1 : i32, i32
  }
  func.func @transform_1(%arg0: i32, %arg1: i32) -> (i32, i32) {
    %c0_i32 = arith.constant 0 : i32
    %c0_i32_0 = arith.constant 0 : i32
    return %arg1, %c0_i32 : i32, i32
  }
  func.func @transform_2(%arg0: i32, %arg1: i32) -> (i32, i32) {
    %c0_i32 = arith.constant 0 : i32
    %c0_i32_0 = arith.constant 0 : i32
    %c0_i32_1 = arith.constant 0 : i32
    return %c0_i32, %c0_i32_0 : i32, i32
  }
  func.func @transform_3(%arg0: i32, %arg1: i32) -> (i32, i32) {
    %c0_i32 = arith.constant 0 : i32
    %c0_i32_0 = arith.constant 0 : i32
    %c0_i32_1 = arith.constant 0 : i32
    return %c0_i32, %c0_i32_0 : i32, i32
  }
  func.func @transform_4(%arg0: i32, %arg1: i32) -> (i32, i32) {
    %c0_i32 = arith.constant 0 : i32
    %c0_i32_0 = arith.constant 0 : i32
    %c0_i32_1 = arith.constant 0 : i32
    return %c0_i32, %c0_i32_0 : i32, i32
  }
  func.func @transform_5(%arg0: i32, %arg1: i32) -> (i32, i32) {
    %c0_i32 = arith.constant 0 : i32
    %c0_i32_0 = arith.constant 0 : i32
    %c0_i32_1 = arith.constant 0 : i32
    return %c0_i32, %c0_i32_0 : i32, i32
  }
  func.func @transform_6(%arg0: i32, %arg1: i32) -> (i32, i32) {
    %c0_i32 = arith.constant 0 : i32
    %c0_i32_0 = arith.constant 0 : i32
    %c0_i32_1 = arith.constant 0 : i32
    return %c0_i32, %c0_i32_0 : i32, i32
  }
  func.func @transform_7(%arg0: i32, %arg1: i32) -> (i32, i32) {
    %c0_i32 = arith.constant 0 : i32
    %c0_i32_0 = arith.constant 0 : i32
    return %arg0, %c0_i32 : i32, i32
  }
}

</mosaic_0001>

<llo_original>
// kernel: forward.2
$region0: #{forward.2}
  #allocation0 [shape = 'u32[]', space=smem, size = 0x4, offset = 0x4, fixed_abs, tag = 'smem constant byte address 0x4 - core index']
  #allocation1 [shape = 'u32[144,128]{1,0:T(1,128)}', space=vmem, size = 0x12000, scoped, tag = 'internal scratch']
  %s0 = inlined_call_operand.vmem [shape: f32[2,2,9,16], index: 0, kind: input, shape index: {}]
  %s1 = inlined_call_operand.vmem [shape: f32[32,9], index: 1, kind: input, shape index: {}]
  %s2 = inlined_call_operand.vmem [shape: f32[32,1], index: 2, kind: input, shape index: {}]
  %s3 = inlined_call_operand.vmem [shape: f32[32,3], index: 3, kind: input, shape index: {}]
  %s4 = inlined_call_operand.vmem [shape: f32[32,1], index: 4, kind: input, shape index: {}]
  %s5 = inlined_call_operand.vmem [shape: f32[64,32], index: 5, kind: input, shape index: {}]
  %s6 = inlined_call_operand.vmem [shape: f32[64,1], index: 6, kind: input, shape index: {}]
  %s7 = inlined_call_operand.vmem [shape: f32[2,64,16], index: 7, kind: output, shape index: {}]
  %s8 = sld [smem:[#allocation0]]
  $region61: #{forward.2} parent=0
    _
  %s10 = ssub.s32 1, %s8
  %s11 = scalar_select 0, %s10, %s8
  loop: start=0, step=1, limit=4
  $region2: #{forward.2} parent=0 // loop_pre_header
    _
  $region3: #{forward.2} parent=0 // loop_header
    %s13 = sphi 0, %s17
    %p14 = scmp.ge.s32.totalorder %s13, 4
    %s23 = sphi 0, %s25
    %s26 = sphi 0, %s23
    %s27 = sphi 0, %s26
    %s43 = sphi 0, %s27
    %s47 = sphi 0, %s47
    %s49 = sphi 0, %s47
    %s50 = sphi 0, %s49
    %s64 = sphi 0, %s50
    %s68 = sphi 0, %s68
    %s70 = sphi 0, %s68
    %s71 = sphi 0, %s70
    %s85 = sphi 0, %s71
    %s89 = sphi 0, %s89
    %s91 = sphi 0, %s89
    %s92 = sphi 0, %s91
    %s106 = sphi 0, %s92
    %s110 = sphi 0, %s110
    %s112 = sphi 0, %s110
    %s113 = sphi 0, %s112
    %s127 = sphi 0, %s113
    %s131 = sphi 0, %s131
    %s133 = sphi 0, %s131
    %s134 = sphi 0, %s133
    %s148 = sphi 0, %s134
    %s152 = sphi 0, %s152
    %s154 = sphi 0, %s152
    %s155 = sphi 0, %s154
    %s169 = sphi 0, %s155
    %s175 = sphi 0, %s177
    %s178 = sphi 0, %s175
    %s179 = sphi 0, %s178
    %s195 = sphi 0, %s179
  $region4: #{forward.2} parent=0 // loop_header_branch
    %16 = sbr.rel (%p14) target = $region8
  $region5: #{forward.2} parent=0 // loop_body
    %s18 = ssub.s32 %s13, 1
    %s19 = ssub.s32 %s13, 2
    %s20 = sadd.s32 %s13, 1
    %s21 = ssub.s32 %s13, %s20
    %p22 = scmp.eq.s32.totalorder %s21, 0
    %s24 = sadd.s32 %s23, 1
    %s25 = scalar_select %p22, %s23, %s24
    %p28 = pneg %p22
    %p29 = scmp.eq.s32.totalorder %s13, 1
    %p30 = por %p28, %p29
    %p31 = scmp.ne.s32.totalorder %s23, %s26
    %p32 = scmp.eq.s32.totalorder %s13, 0
    %p33 = por %p31, %p32
    %p34 = scmp.ne.s32.totalorder %s23, %s26
    %p35 = scmp.eq.s32.totalorder %s18, 1
    %p36 = por %p34, %p35
    %p37 = scmp.ne.s32.totalorder %s26, %s27
    %p38 = scmp.eq.s32.totalorder %s18, 0
    %p39 = por %p37, %p38
    %p40 = scmp.ne.s32.totalorder %s26, %s27
    %p41 = scmp.eq.s32.totalorder %s19, 1
    %p42 = por %p40, %p41
    %p44 = scmp.ne.s32.totalorder %s27, %s43
    %p45 = scmp.eq.s32.totalorder %s19, 0
    %p46 = por %p44, %p45
    %s48 = sadd.s32 %s47, 1
    %p51 = scmp.eq.s32.totalorder %s13, 1
    %p52 = scmp.ne.s32.totalorder %s47, %s49
    %p53 = scmp.eq.s32.totalorder %s13, 0
    %p54 = por %p52, %p53
    %p55 = scmp.ne.s32.totalorder %s47, %s49
    %p56 = scmp.eq.s32.totalorder %s18, 1
    %p57 = por %p55, %p56
    %p58 = scmp.ne.s32.totalorder %s49, %s50
    %p59 = scmp.eq.s32.totalorder %s18, 0
    %p60 = por %p58, %p59
    %p61 = scmp.ne.s32.totalorder %s49, %s50
    %p62 = scmp.eq.s32.totalorder %s19, 1
    %p63 = por %p61, %p62
    %p65 = scmp.ne.s32.totalorder %s50, %s64
    %p66 = scmp.eq.s32.totalorder %s19, 0
    %p67 = por %p65, %p66
    %s69 = sadd.s32 %s68, 1
    %p72 = scmp.eq.s32.totalorder %s13, 1
    %p73 = scmp.ne.s32.totalorder %s68, %s70
    %p74 = scmp.eq.s32.totalorder %s13, 0
    %p75 = por %p73, %p74
    %p76 = scmp.ne.s32.totalorder %s68, %s70
    %p77 = scmp.eq.s32.totalorder %s18, 1
    %p78 = por %p76, %p77
    %p79 = scmp.ne.s32.totalorder %s70, %s71
    %p80 = scmp.eq.s32.totalorder %s18, 0
    %p81 = por %p79, %p80
    %p82 = scmp.ne.s32.totalorder %s70, %s71
    %p83 = scmp.eq.s32.totalorder %s19, 1
    %p84 = por %p82, %p83
    %p86 = scmp.ne.s32.totalorder %s71, %s85
    %p87 = scmp.eq.s32.totalorder %s19, 0
    %p88 = por %p86, %p87
    %s90 = sadd.s32 %s89, 1
    %p93 = scmp.eq.s32.totalorder %s13, 1
    %p94 = scmp.ne.s32.totalorder %s89, %s91
    %p95 = scmp.eq.s32.totalorder %s13, 0
    %p96 = por %p94, %p95
    %p97 = scmp.ne.s32.totalorder %s89, %s91
    %p98 = scmp.eq.s32.totalorder %s18, 1
    %p99 = por %p97, %p98
    %p100 = scmp.ne.s32.totalorder %s91, %s92
    %p101 = scmp.eq.s32.totalorder %s18, 0
    %p102 = por %p100, %p101
    %p103 = scmp.ne.s32.totalorder %s91, %s92
    %p104 = scmp.eq.s32.totalorder %s19, 1
    %p105 = por %p103, %p104
    %p107 = scmp.ne.s32.totalorder %s92, %s106
    %p108 = scmp.eq.s32.totalorder %s19, 0
    %p109 = por %p107, %p108
    %s111 = sadd.s32 %s110, 1
    %p114 = scmp.eq.s32.totalorder %s13, 1
    %p115 = scmp.ne.s32.totalorder %s110, %s112
    %p116 = scmp.eq.s32.totalorder %s13, 0
    %p117 = por %p115, %p116
    %p118 = scmp.ne.s32.totalorder %s110, %s112
    %p119 = scmp.eq.s32.totalorder %s18, 1
    %p120 = por %p118, %p119
    %p121 = scmp.ne.s32.totalorder %s112, %s113
    %p122 = scmp.eq.s32.totalorder %s18, 0
    %p123 = por %p121, %p122
    %p124 = scmp.ne.s32.totalorder %s112, %s113
    %p125 = scmp.eq.s32.totalorder %s19, 1
    %p126 = por %p124, %p125
    %p128 = scmp.ne.s32.totalorder %s113, %s127
    %p129 = scmp.eq.s32.totalorder %s19, 0
    %p130 = por %p128, %p129
    %s132 = sadd.s32 %s131, 1
    %p135 = scmp.eq.s32.totalorder %s13, 1
    %p136 = scmp.ne.s32.totalorder %s131, %s133
    %p137 = scmp.eq.s32.totalorder %s13, 0
    %p138 = por %p136, %p137
    %p139 = scmp.ne.s32.totalorder %s131, %s133
    %p140 = scmp.eq.s32.totalorder %s18, 1
    %p141 = por %p139, %p140
    %p142 = scmp.ne.s32.totalorder %s133, %s134
    %p143 = scmp.eq.s32.totalorder %s18, 0
    %p144 = por %p142, %p143
    %p145 = scmp.ne.s32.totalorder %s133, %s134
    %p146 = scmp.eq.s32.totalorder %s19, 1
    %p147 = por %p145, %p146
    %p149 = scmp.ne.s32.totalorder %s134, %s148
    %p150 = scmp.eq.s32.totalorder %s19, 0
    %p151 = por %p149, %p150
    %s153 = sadd.s32 %s152, 1
    %p156 = scmp.eq.s32.totalorder %s13, 1
    %p157 = scmp.ne.s32.totalorder %s152, %s154
    %p158 = scmp.eq.s32.totalorder %s13, 0
    %p159 = por %p157, %p158
    %p160 = scmp.ne.s32.totalorder %s152, %s154
    %p161 = scmp.eq.s32.totalorder %s18, 1
    %p162 = por %p160, %p161
    %p163 = scmp.ne.s32.totalorder %s154, %s155
    %p164 = scmp.eq.s32.totalorder %s18, 0
    %p165 = por %p163, %p164
    %p166 = scmp.ne.s32.totalorder %s154, %s155
    %p167 = scmp.eq.s32.totalorder %s19, 1
    %p168 = por %p166, %p167
    %p170 = scmp.ne.s32.totalorder %s155, %s169
    %p171 = scmp.eq.s32.totalorder %s19, 0
    %p172 = por %p170, %p171
    %s173 = ssub.s32 %s13, %s20
    %p174 = scmp.eq.s32.totalorder %s173, 0
    %s176 = sadd.s32 %s175, 1
    %s177 = scalar_select %p174, %s175, %s176
    %p180 = pneg %p174
    %p181 = scmp.eq.s32.totalorder %s13, 1
    %p182 = por %p180, %p181
    %p183 = scmp.ne.s32.totalorder %s175, %s178
    %p184 = scmp.eq.s32.totalorder %s13, 0
    %p185 = por %p183, %p184
    %p186 = scmp.ne.s32.totalorder %s175, %s178
    %p187 = scmp.eq.s32.totalorder %s18, 1
    %p188 = por %p186, %p187
    %p189 = scmp.ne.s32.totalorder %s178, %s179
    %p190 = scmp.eq.s32.totalorder %s18, 0
    %p191 = por %p189, %p190
    %p192 = scmp.ne.s32.totalorder %s178, %s179
    %p193 = scmp.eq.s32.totalorder %s19, 1
    %p194 = por %p192, %p193
    %p196 = scmp.ne.s32.totalorder %s179, %s195
    %p197 = scmp.eq.s32.totalorder %s19, 0
    %p198 = por %p196, %p197
    %p199 = scmp.le.s32.totalorder 1, %s13
    %p200 = scmp.lt.s32.totalorder %s13, 3
    %p201 = pnand %p199, %p200
    %p202 = pneg %p201
    // Predicated region
    $region9: #{forward.2} parent=5 // pred_check
      _
    $region10: #{forward.2} parent=5 // pred_check_branch
      %204 = sbr.rel (%p201) target = $region12
    $region11: #{forward.2} parent=5 // pred_region
      %s205 = ssub.s32 %s13, 1
      // Predicated region
      $region13: #{forward.2} parent=11 // pred_check
        %p206 = pneg %p60
      $region14: #{forward.2} parent=11 // pred_check_branch
        %208 = sbr.rel (%p206) target = $region16
      $region15: #{forward.2} parent=11 // pred_region
        _
      $region16: #{forward.2} parent=11 // pred_fallthru
        _
      // Predicated region
      $region17: #{forward.2} parent=11 // pred_check
        %p209 = pneg %p81
      $region18: #{forward.2} parent=11 // pred_check_branch
        %211 = sbr.rel (%p209) target = $region20
      $region19: #{forward.2} parent=11 // pred_region
        _
      $region20: #{forward.2} parent=11 // pred_fallthru
        _
      // Predicated region
      $region21: #{forward.2} parent=11 // pred_check
        %p212 = pneg %p102
      $region22: #{forward.2} parent=11 // pred_check_branch
        %214 = sbr.rel (%p212) target = $region24
      $region23: #{forward.2} parent=11 // pred_region
        _
      $region24: #{forward.2} parent=11 // pred_fallthru
        _
      // Predicated region
      $region25: #{forward.2} parent=11 // pred_check
        %p215 = pneg %p123
      $region26: #{forward.2} parent=11 // pred_check_branch
        %217 = sbr.rel (%p215) target = $region28
      $region27: #{forward.2} parent=11 // pred_region
        _
      $region28: #{forward.2} parent=11 // pred_fallthru
        _
      // Predicated region
      $region29: #{forward.2} parent=11 // pred_check
        %p218 = pneg %p144
      $region30: #{forward.2} parent=11 // pred_check_branch
        %220 = sbr.rel (%p218) target = $region32
      $region31: #{forward.2} parent=11 // pred_region
        _
      $region32: #{forward.2} parent=11 // pred_fallthru
        _
      // Predicated region
      $region33: #{forward.2} parent=11 // pred_check
        %p221 = pneg %p165
      $region34: #{forward.2} parent=11 // pred_check_branch
        %223 = sbr.rel (%p221) target = $region36
      $region35: #{forward.2} parent=11 // pred_region
        _
      $region36: #{forward.2} parent=11 // pred_fallthru
        _
    $region12: #{forward.2} parent=5 // pred_fallthru
      _
    %p224 = scmp.lt.s32.totalorder %s13, 2
    // Predicated region
    $region37: #{forward.2} parent=5 // pred_check
      %p225 = pneg %p224
    $region38: #{forward.2} parent=5 // pred_check_branch
      %227 = sbr.rel (%p225) target = $region40
    $region39: #{forward.2} parent=5 // pred_region
      // Predicated region
      $region41: #{forward.2} parent=39 // pred_check
        %p228 = pneg %p33
      $region42: #{forward.2} parent=39 // pred_check_branch
        %230 = sbr.rel (%p228) target = $region44
      $region43: #{forward.2} parent=39 // pred_region
        %p231 = scmp.lt.s32.totalorder %s13, 1
        %s232 = scalar_select %p231, %s13, 1
        %s233 = smul.addr %s232, 4
        %s234 = smul.addr %s233, 8
        %s235 = scalar_lea.vmem %s0, %s234
      $region44: #{forward.2} parent=39 // pred_fallthru
        _
    $region40: #{forward.2} parent=5 // pred_fallthru
      _
    %p236 = scmp.le.s32.totalorder 1, %s13
    %p237 = scmp.lt.s32.totalorder %s13, 3
    %p238 = pnand %p236, %p237
    %p239 = pneg %p238
    // Predicated region
    $region45: #{forward.2} parent=5 // pred_check
      _
    $region46: #{forward.2} parent=5 // pred_check_branch
      %241 = sbr.rel (%p238) target = $region48
    $region47: #{forward.2} parent=5 // pred_region
      %s242 = ssub.s32 %s13, 1
      %p243 = scmp.lt.s32.totalorder %s18, 1
      %s244 = scalar_select %p243, %s18, 1
      %s245 = smul.addr %s244, 4
      %s246 = smul.addr %s245, 8
      %s247 = scalar_lea.vmem %s0, %s246
      %p248 = pneg %p39
      %p249 = pneg %p36
      %p250 = pneg %p60
      %p251 = pneg %p57
      %p252 = pneg %p81
      %p253 = pneg %p78
      %p254 = pneg %p102
      %p255 = pneg %p99
      %p256 = pneg %p123
      %p257 = pneg %p120
      %p258 = pneg %p144
      %p259 = pneg %p141
      %p260 = pneg %p165
      %p261 = pneg %p162
      %p262 = pneg %p191
      %p263 = pneg %p188
      %p264 = scmp.lt.s32.totalorder %s18, 1
      %s265 = scalar_select %p264, %s18, 1
      %s266 = smul.addr %s265, 8
      %s267 = smul.addr %s266, 8
      %s268 = scalar_lea.vmem %s7, %s267
      %p269 = scmp.lt.s32.totalorder %s18, 1
      %s270 = scalar_select %p269, %s18, 1
      %s271 = smul.addr %s270, 4
      %s272 = smul.addr %s271, 8
      %s273 = scalar_lea.vmem %s0, %s272
      %p274 = scmp.lt.s32.totalorder %s18, 1
      %s275 = scalar_select %p274, %s18, 1
      %s276 = smul.addr %s275, 8
      %s277 = smul.addr %s276, 8
      %s278 = scalar_lea.vmem %s7, %s277
      %v279 = vld [vmem:[%s273] sm:$0xff]
      %v280 = vld [vmem:[%s273 + $0x8] sm:$0x1]
      %v281 = vld [vmem:[%s273 + $0x10] sm:$0xff]
      %v282 = vld [vmem:[%s273 + $0x18] sm:$0x1]
      %v283 = vld [vmem:[%s2] sm:$0xff]
      %v284 = vld [vmem:[%s2 + $0x8] sm:$0xff]
      %v285 = vld [vmem:[%s2 + $0x10] sm:$0xff]
      %v286 = vld [vmem:[%s2 + $0x18] sm:$0xff]
      %v287 = vld [vmem:[%s1] sm:$0xff]
      %v288 = vld [vmem:[%s1 + $0x8] sm:$0xff]
      %v289 = vld [vmem:[%s1 + $0x10] sm:$0xff]
      %v290 = vld [vmem:[%s1 + $0x18] sm:$0xff]
      %292 = vset.pattern.permute.xlu0 0
      %293 = vperm.xlu0 %292, %v283
      %v294 = vpop.permute.xlu0 %293
      %297 = vset.pattern.permute.xlu0 0
      %298 = vperm.xlu0 %297, %v284
      %v299 = vpop.permute.xlu0 %298
      %302 = vset.pattern.permute.xlu0 0
      %303 = vperm.xlu0 %302, %v285
      %v304 = vpop.permute.xlu0 %303
      %307 = vset.pattern.permute.xlu0 0
      %308 = vperm.xlu0 %307, %v286
      %v309 = vpop.permute.xlu0 %308
      %vm311 = vcmask 72704
      %v313 = vsel %vm311, %v287, 0
      %v316 = vsel %vm311, %v288, 0
      %v319 = vsel %vm311, %v289, 0
      %v322 = vsel %vm311, %v290, 0
      %vm324 = vcmask 1040384
      %v326 = vsel %vm324, %v280, 0
      %328 = vmatprep.subr.mxu0 0.0
      %329 = vmatpush1.msra.mxu0 0.0
      %330 = vmatprep.subr.mxu0 0.0
      %331 = vmatpush1.msra.mxu0 0.0
      %332 = vmatprep.subr.mxu0 0.0
      %333 = vmatpush1.msra.mxu0 0.0
      %334 = vmatprep.subr.mxu0 0.0
      %335 = vmatpush1.msra.mxu0 0.0
      %336 = vmatprep.subr.mxu0 0.0
      %337 = vmatpush1.msra.mxu0 0.0
      %338 = vmatprep.subr.mxu0 0.0
      %339 = vmatpush1.msra.mxu0 0.0
      %340 = vmatprep.subr.mxu0 0.0
      %341 = vmatpush1.msra.mxu0 0.0
      %342 = vmatprep.subr.mxu0 0.0
      %343 = vmatpush1.msra.mxu0 0.0
      %344 = vmatprep.subr.mxu0 0.0
      %345 = vmatpush1.msra.mxu0 0.0
      %346 = vmatprep.subr.mxu0 0.0
      %347 = vmatpush1.msra.mxu0 0.0
      %348 = vmatprep.subr.mxu0 0.0
      %349 = vmatpush1.msra.mxu0 0.0
      %350 = vmatprep.subr.mxu0 0.0
      %351 = vmatpush1.msra.mxu0 0.0
      %352 = vmatprep.subr.mxu0 0.0
      %353 = vmatpush1.msra.mxu0 0.0
      %354 = vmatprep.subr.mxu0 0.0
      %355 = vmatpush1.msra.mxu0 0.0
      %356 = vmatprep.subr.mxu0 0.0
      %357 = vmatpush1.msra.mxu0 %v326
      %358 = vmatprep.subr.mxu0 0.0
      %359 = vmatpush1.msra.mxu0 %v279
      %360 = vmatprep.subr.mxu0 0.0
      %361 = vmatpush2.msra.mxu0 0.0
      %362 = vmatprep.subr.mxu0 0.0
      %363 = vmatpush2.msra.mxu0 0.0
      %364 = vmatprep.subr.mxu0 0.0
      %365 = vmatpush2.msra.mxu0 0.0
      %366 = vmatprep.subr.mxu0 0.0
      %367 = vmatpush2.msra.mxu0 0.0
      %368 = vmatprep.subr.mxu0 0.0
      %369 = vmatpush2.msra.mxu0 0.0
      %370 = vmatprep.subr.mxu0 0.0
      %371 = vmatpush2.msra.mxu0 0.0
      %372 = vmatprep.subr.mxu0 0.0
      %373 = vmatpush2.msra.mxu0 0.0
      %374 = vmatprep.subr.mxu0 0.0
      %375 = vmatpush2.msra.mxu0 0.0
      %376 = vmatprep.subr.mxu0 0.0
      %377 = vmatpush2.msra.mxu0 0.0
      %378 = vmatprep.subr.mxu0 0.0
      %379 = vmatpush2.msra.mxu0 0.0
      %380 = vmatprep.subr.mxu0 0.0
      %381 = vmatpush2.msra.mxu0 0.0
      %382 = vmatprep.subr.mxu0 0.0
      %383 = vmatpush2.msra.mxu0 0.0
      %384 = vmatprep.subr.mxu0 0.0
      %385 = vmatpush2.msra.mxu0 0.0
      %386 = vmatprep.subr.mxu0 0.0
      %387 = vmatpush2.msra.mxu0 0.0
      %388 = vmatprep.subr.mxu0 0.0
      %389 = vmatpush2.msra.mxu0 0.0
      %390 = vmatprep.subr.mxu0 0.0
      %391 = vmatpush2.msra.mxu0 0.0
      %392 = vmatprep.mubr.f32.mxu0 0.0
      %393 = vmatmul.mubr.f32.gmra.mxu0 %v313
      %v394 = vpop.f32.mrf.mxu0
      %v395 = vadd.f32 %v294, %v394
      %v396 = vpop.f32.mrf.mxu0
      %397 = vmatprep.mubr.f32.mxu0 0.0
      %398 = vmatmul.mubr.f32.gmra.mxu0 %v316
      %v399 = vpop.f32.mrf.mxu0
      %v400 = vadd.f32 %v299, %v399
      %v401 = vpop.f32.mrf.mxu0
      %402 = vmatprep.mubr.f32.mxu0 0.0
      %403 = vmatmul.mubr.f32.gmra.mxu0 %v319
      %v404 = vpop.f32.mrf.mxu0
      %v405 = vadd.f32 %v304, %v404
      %v406 = vpop.f32.mrf.mxu0
      %407 = vmatprep.mubr.f32.mxu0 0.0
      %408 = vmatmul.mubr.f32.gmra.mxu0 %v322
      %v409 = vpop.f32.mrf.mxu0
      %v410 = vadd.f32 %v309, %v409
      %v411 = vpop.f32.mrf.mxu0
      %412 = vdwg.mxu0
      %v413 = vmax.f32 %v395, 0.0
      %v414 = vmax.f32 %v400, 0.0
      %v415 = vmax.f32 %v405, 0.0
      %v416 = vmax.f32 %v410, 0.0
      %v418 = vsel %vm324, %v282, 0
      %420 = vmatprep.subr.mxu0 0.0
      %421 = vmatpush1.msra.mxu0 0.0
      %422 = vmatprep.subr.mxu0 0.0
      %423 = vmatpush1.msra.mxu0 0.0
      %424 = vmatprep.subr.mxu0 0.0
      %425 = vmatpush1.msra.mxu0 0.0
      %426 = vmatprep.subr.mxu0 0.0
      %427 = vmatpush1.msra.mxu0 0.0
      %428 = vmatprep.subr.mxu0 0.0
      %429 = vmatpush1.msra.mxu0 0.0
      %430 = vmatprep.subr.mxu0 0.0
      %431 = vmatpush1.msra.mxu0 0.0
      %432 = vmatprep.subr.mxu0 0.0
      %433 = vmatpush1.msra.mxu0 0.0
      %434 = vmatprep.subr.mxu0 0.0
      %435 = vmatpush1.msra.mxu0 0.0
      %436 = vmatprep.subr.mxu0 0.0
      %437 = vmatpush1.msra.mxu0 0.0
      %438 = vmatprep.subr.mxu0 0.0
      %439 = vmatpush1.msra.mxu0 0.0
      %440 = vmatprep.subr.mxu0 0.0
      %441 = vmatpush1.msra.mxu0 0.0
      %442 = vmatprep.subr.mxu0 0.0
      %443 = vmatpush1.msra.mxu0 0.0
      %444 = vmatprep.subr.mxu0 0.0
      %445 = vmatpush1.msra.mxu0 0.0
      %446 = vmatprep.subr.mxu0 0.0
      %447 = vmatpush1.msra.mxu0 0.0
      %448 = vmatprep.subr.mxu0 0.0
      %449 = vmatpush1.msra.mxu0 %v418
      %450 = vmatprep.subr.mxu0 0.0
      %451 = vmatpush1.msra.mxu0 %v281
      %452 = vmatprep.subr.mxu0 0.0
      %453 = vmatpush2.msra.mxu0 0.0
      %454 = vmatprep.subr.mxu0 0.0
      %455 = vmatpush2.msra.mxu0 0.0
      %456 = vmatprep.subr.mxu0 0.0
      %457 = vmatpush2.msra.mxu0 0.0
      %458 = vmatprep.subr.mxu0 0.0
      %459 = vmatpush2.msra.mxu0 0.0
      %460 = vmatprep.subr.mxu0 0.0
      %461 = vmatpush2.msra.mxu0 0.0
      %462 = vmatprep.subr.mxu0 0.0
      %463 = vmatpush2.msra.mxu0 0.0
      %464 = vmatprep.subr.mxu0 0.0
      %465 = vmatpush2.msra.mxu0 0.0
      %466 = vmatprep.subr.mxu0 0.0
      %467 = vmatpush2.msra.mxu0 0.0
      %468 = vmatprep.subr.mxu0 0.0
      %469 = vmatpush2.msra.mxu0 0.0
      %470 = vmatprep.subr.mxu0 0.0
      %471 = vmatpush2.msra.mxu0 0.0
      %472 = vmatprep.subr.mxu0 0.0
      %473 = vmatpush2.msra.mxu0 0.0
      %474 = vmatprep.subr.mxu0 0.0
      %475 = vmatpush2.msra.mxu0 0.0
      %476 = vmatprep.subr.mxu0 0.0
      %477 = vmatpush2.msra.mxu0 0.0
      %478 = vmatprep.subr.mxu0 0.0
      %479 = vmatpush2.msra.mxu0 0.0
      %480 = vmatprep.subr.mxu0 0.0
      %481 = vmatpush2.msra.mxu0 0.0
      %482 = vmatprep.subr.mxu0 0.0
      %483 = vmatpush2.msra.mxu0 0.0
      %484 = vmatprep.mubr.f32.mxu0 0.0
      %485 = vmatmul.mubr.f32.gmra.mxu0 %v313
      %v486 = vpop.f32.mrf.mxu0
      %v487 = vadd.f32 %v294, %v486
      %v488 = vpop.f32.mrf.mxu0
      %489 = vmatprep.mubr.f32.mxu0 0.0
      %490 = vmatmul.mubr.f32.gmra.mxu0 %v316
      %v491 = vpop.f32.mrf.mxu0
      %v492 = vadd.f32 %v299, %v491
      %v493 = vpop.f32.mrf.mxu0
      %494 = vmatprep.mubr.f32.mxu0 0.0
      %495 = vmatmul.mubr.f32.gmra.mxu0 %v319
      %v496 = vpop.f32.mrf.mxu0
      %v497 = vadd.f32 %v304, %v496
      %v498 = vpop.f32.mrf.mxu0
      %499 = vmatprep.mubr.f32.mxu0 0.0
      %500 = vmatmul.mubr.f32.gmra.mxu0 %v322
      %v501 = vpop.f32.mrf.mxu0
      %v502 = vadd.f32 %v309, %v501
      %v503 = vpop.f32.mrf.mxu0
      %504 = vdwg.mxu0
      %v505 = vmax.f32 %v487, 0.0
      %v506 = vmax.f32 %v492, 0.0
      %v507 = vmax.f32 %v497, 0.0
      %v508 = vmax.f32 %v502, 0.0
      %v509 = vld [vmem:[%s3] sm:$0xff]
      %v510 = vld [vmem:[%s3 + $0x8] sm:$0xff]
      %v511 = vld [vmem:[%s3 + $0x10] sm:$0xff]
      %v512 = vld [vmem:[%s3 + $0x18] sm:$0xff]
      %v513 = vld [vmem:[%s4] sm:$0xff]
      %v514 = vld [vmem:[%s4 + $0x8] sm:$0xff]
      %v515 = vld [vmem:[%s4 + $0x10] sm:$0xff]
      %v516 = vld [vmem:[%s4 + $0x18] sm:$0xff]
      %521 = vrot.lane.b32.xlu0 %v505, 1
      %v522 = vpop.permute.xlu0 %521
      %523 = vrot.lane.b32.xlu0 %v506, 1
      %v524 = vpop.permute.xlu0 %523
      %525 = vrot.lane.b32.xlu0 %v507, 1
      %v526 = vpop.permute.xlu0 %525
      %527 = vrot.lane.b32.xlu0 %v508, 1
      %v528 = vpop.permute.xlu0 %527
      %vm533 = vcmask 7168
      %v534 = vsel %vm533, 0.0, %v522
      %v535 = vsel %vm533, 0.0, %v524
      %v536 = vsel %vm533, 0.0, %v526
      %v537 = vsel %vm533, 0.0, %v528
      %542 = vrot.lane.b32.xlu0 %v413, 127
      %v543 = vpop.permute.xlu0 %542
      %544 = vrot.lane.b32.xlu0 %v414, 127
      %v545 = vpop.permute.xlu0 %544
      %546 = vrot.lane.b32.xlu0 %v415, 127
      %v547 = vpop.permute.xlu0 %546
      %548 = vrot.lane.b32.xlu0 %v416, 127
      %v549 = vpop.permute.xlu0 %548
      %vm554 = vcmask 121856
      %v555 = vsel %vm554, %v543, 0.0
      %v556 = vsel %vm554, %v545, 0.0
      %v557 = vsel %vm554, %v547, 0.0
      %v558 = vsel %vm554, %v549, 0.0
      %560 = vset.pattern.permute.xlu0 0
      %561 = vperm.xlu0 %560, %v509
      %v562 = vpop.permute.xlu0 %561
      %565 = vset.pattern.permute.xlu0 0
      %566 = vperm.xlu0 %565, %v510
      %v567 = vpop.permute.xlu0 %566
      %570 = vset.pattern.permute.xlu0 0
      %571 = vperm.xlu0 %570, %v511
      %v572 = vpop.permute.xlu0 %571
      %575 = vset.pattern.permute.xlu0 0
      %576 = vperm.xlu0 %575, %v512
      %v577 = vpop.permute.xlu0 %576
      %v579 = vmul.f32 %v562, %v534
      %v580 = vmul.f32 %v567, %v535
      %v581 = vmul.f32 %v572, %v536
      %v582 = vmul.f32 %v577, %v537
      %583 = vset.pattern.permute.xlu0 1
      %584 = vperm.xlu0 %583, %v509
      %v585 = vpop.permute.xlu0 %584
      %587 = vset.pattern.permute.xlu0 1
      %588 = vperm.xlu0 %587, %v510
      %v589 = vpop.permute.xlu0 %588
      %591 = vset.pattern.permute.xlu0 1
      %592 = vperm.xlu0 %591, %v511
      %v593 = vpop.permute.xlu0 %592
      %595 = vset.pattern.permute.xlu0 1
      %596 = vperm.xlu0 %595, %v512
      %v597 = vpop.permute.xlu0 %596
      %v599 = vmul.f32 %v585, %v413
      %v600 = vmul.f32 %v589, %v414
      %v601 = vmul.f32 %v593, %v415
      %v602 = vmul.f32 %v597, %v416
      %v603 = vadd.f32 %v579, %v599
      %v604 = vadd.f32 %v580, %v600
      %v605 = vadd.f32 %v581, %v601
      %v606 = vadd.f32 %v582, %v602
      %607 = vset.pattern.permute.xlu0 2
      %608 = vperm.xlu0 %607, %v509
      %v609 = vpop.permute.xlu0 %608
      %611 = vset.pattern.permute.xlu0 2
      %612 = vperm.xlu0 %611, %v510
      %v613 = vpop.permute.xlu0 %612
      %615 = vset.pattern.permute.xlu0 2
      %616 = vperm.xlu0 %615, %v511
      %v617 = vpop.permute.xlu0 %616
      %619 = vset.pattern.permute.xlu0 2
      %620 = vperm.xlu0 %619, %v512
      %v621 = vpop.permute.xlu0 %620
      %v623 = vmul.f32 %v609, %v505
      %v624 = vmul.f32 %v613, %v506
      %v625 = vmul.f32 %v617, %v507
      %v626 = vmul.f32 %v621, %v508
      %v627 = vadd.f32 %v603, %v623
      %v628 = vadd.f32 %v604, %v624
      %v629 = vadd.f32 %v605, %v625
      %v630 = vadd.f32 %v606, %v626
      %632 = vset.pattern.permute.xlu0 0
      %633 = vperm.xlu0 %632, %v513
      %v634 = vpop.permute.xlu0 %633
      %637 = vset.pattern.permute.xlu0 0
      %638 = vperm.xlu0 %637, %v514
      %v639 = vpop.permute.xlu0 %638
      %642 = vset.pattern.permute.xlu0 0
      %643 = vperm.xlu0 %642, %v515
      %v644 = vpop.permute.xlu0 %643
      %647 = vset.pattern.permute.xlu0 0
      %648 = vperm.xlu0 %647, %v516
      %v649 = vpop.permute.xlu0 %648
      %v651 = vadd.f32 %v627, %v634
      %v652 = vadd.f32 %v628, %v639
      %v653 = vadd.f32 %v629, %v644
      %v654 = vadd.f32 %v630, %v649
      %v655 = vmax.f32 %v651, 0.0
      %v656 = vmax.f32 %v652, 0.0
      %v657 = vmax.f32 %v653, 0.0
      %v658 = vmax.f32 %v654, 0.0
      %v659 = vmul.f32 %v562, %v413
      %v660 = vmul.f32 %v567, %v414
      %v661 = vmul.f32 %v572, %v415
      %v662 = vmul.f32 %v577, %v416
      %v663 = vmul.f32 %v585, %v505
      %v664 = vmul.f32 %v589, %v506
      %v665 = vmul.f32 %v593, %v507
      %v666 = vmul.f32 %v597, %v508
      %v667 = vadd.f32 %v659, %v663
      %v668 = vadd.f32 %v660, %v664
      %v669 = vadd.f32 %v661, %v665
      %v670 = vadd.f32 %v662, %v666
      %v671 = vmul.f32 %v609, %v555
      %v672 = vmul.f32 %v613, %v556
      %v673 = vmul.f32 %v617, %v557
      %v674 = vmul.f32 %v621, %v558
      %v675 = vadd.f32 %v667, %v671
      %v676 = vadd.f32 %v668, %v672
      %v677 = vadd.f32 %v669, %v673
      %v678 = vadd.f32 %v670, %v674
      %v679 = vadd.f32 %v675, %v634
      %v680 = vadd.f32 %v676, %v639
      %v681 = vadd.f32 %v677, %v644
      %v682 = vadd.f32 %v678, %v649
      %v683 = vmax.f32 %v679, 0.0
      %v684 = vmax.f32 %v680, 0.0
      %v685 = vmax.f32 %v681, 0.0
      %v686 = vmax.f32 %v682, 0.0
      %v687 = vld [vmem:[%s5] sm:$0xff]
      %v688 = vld [vmem:[%s5 + $0x8] sm:$0xff]
      %v689 = vld [vmem:[%s5 + $0x10] sm:$0xff]
      %v690 = vld [vmem:[%s5 + $0x18] sm:$0xff]
      %v691 = vld [vmem:[%s5 + $0x20] sm:$0xff]
      %v692 = vld [vmem:[%s5 + $0x28] sm:$0xff]
      %v693 = vld [vmem:[%s5 + $0x30] sm:$0xff]
      %v694 = vld [vmem:[%s5 + $0x38] sm:$0xff]
      %v695 = vld [vmem:[%s6] sm:$0xff]
      %v696 = vld [vmem:[%s6 + $0x8] sm:$0xff]
      %v697 = vld [vmem:[%s6 + $0x10] sm:$0xff]
      %v698 = vld [vmem:[%s6 + $0x18] sm:$0xff]
      %v699 = vld [vmem:[%s6 + $0x20] sm:$0xff]
      %v700 = vld [vmem:[%s6 + $0x28] sm:$0xff]
      %v701 = vld [vmem:[%s6 + $0x30] sm:$0xff]
      %v702 = vld [vmem:[%s6 + $0x38] sm:$0xff]
      %704 = vset.pattern.permute.xlu0 0
      %705 = vperm.xlu0 %704, %v695
      %v706 = vpop.permute.xlu0 %705
      %709 = vset.pattern.permute.xlu0 0
      %710 = vperm.xlu0 %709, %v696
      %v711 = vpop.permute.xlu0 %710
      %714 = vset.pattern.permute.xlu0 0
      %715 = vperm.xlu0 %714, %v697
      %v716 = vpop.permute.xlu0 %715
      %719 = vset.pattern.permute.xlu0 0
      %720 = vperm.xlu0 %719, %v698
      %v721 = vpop.permute.xlu0 %720
      %724 = vset.pattern.permute.xlu0 0
      %725 = vperm.xlu0 %724, %v699
      %v726 = vpop.permute.xlu0 %725
      %729 = vset.pattern.permute.xlu0 0
      %730 = vperm.xlu0 %729, %v700
      %v731 = vpop.permute.xlu0 %730
      %734 = vset.pattern.permute.xlu0 0
      %735 = vperm.xlu0 %734, %v701
      %v736 = vpop.permute.xlu0 %735
      %739 = vset.pattern.permute.xlu0 0
      %740 = vperm.xlu0 %739, %v702
      %v741 = vpop.permute.xlu0 %740
      %vm743 = vcmask 261120
      %v745 = vsel %vm743, %v687, 0
      %v748 = vsel %vm743, %v688, 0
      %v751 = vsel %vm743, %v689, 0
      %v754 = vsel %vm743, %v690, 0
      %v757 = vsel %vm743, %v691, 0
      %v760 = vsel %vm743, %v692, 0
      %v763 = vsel %vm743, %v693, 0
      %v766 = vsel %vm743, %v694, 0
      %768 = vmatprep.subr.mxu0 0.0
      %769 = vmatpush1.msra.mxu0 0.0
      %770 = vmatprep.subr.mxu0 0.0
      %771 = vmatpush1.msra.mxu0 0.0
      %772 = vmatprep.subr.mxu0 0.0
      %773 = vmatpush1.msra.mxu0 0.0
      %774 = vmatprep.subr.mxu0 0.0
      %775 = vmatpush1.msra.mxu0 0.0
      %776 = vmatprep.subr.mxu0 0.0
      %777 = vmatpush1.msra.mxu0 0.0
      %778 = vmatprep.subr.mxu0 0.0
      %779 = vmatpush1.msra.mxu0 0.0
      %780 = vmatprep.subr.mxu0 0.0
      %781 = vmatpush1.msra.mxu0 0.0
      %782 = vmatprep.subr.mxu0 0.0
      %783 = vmatpush1.msra.mxu0 0.0
      %784 = vmatprep.subr.mxu0 0.0
      %785 = vmatpush1.msra.mxu0 0.0
      %786 = vmatprep.subr.mxu0 0.0
      %787 = vmatpush1.msra.mxu0 0.0
      %788 = vmatprep.subr.mxu0 0.0
      %789 = vmatpush1.msra.mxu0 0.0
      %790 = vmatprep.subr.mxu0 0.0
      %791 = vmatpush1.msra.mxu0 0.0
      %792 = vmatprep.subr.mxu0 0.0
      %793 = vmatpush1.msra.mxu0 %v658
      %794 = vmatprep.subr.mxu0 0.0
      %795 = vmatpush1.msra.mxu0 %v657
      %796 = vmatprep.subr.mxu0 0.0
      %797 = vmatpush1.msra.mxu0 %v656
      %798 = vmatprep.subr.mxu0 0.0
      %799 = vmatpush1.msra.mxu0 %v655
      %800 = vmatprep.subr.mxu0 0.0
      %801 = vmatpush2.msra.mxu0 0.0
      %802 = vmatprep.subr.mxu0 0.0
      %803 = vmatpush2.msra.mxu0 0.0
      %804 = vmatprep.subr.mxu0 0.0
      %805 = vmatpush2.msra.mxu0 0.0
      %806 = vmatprep.subr.mxu0 0.0
      %807 = vmatpush2.msra.mxu0 0.0
      %808 = vmatprep.subr.mxu0 0.0
      %809 = vmatpush2.msra.mxu0 0.0
      %810 = vmatprep.subr.mxu0 0.0
      %811 = vmatpush2.msra.mxu0 0.0
      %812 = vmatprep.subr.mxu0 0.0
      %813 = vmatpush2.msra.mxu0 0.0
      %814 = vmatprep.subr.mxu0 0.0
      %815 = vmatpush2.msra.mxu0 0.0
      %816 = vmatprep.subr.mxu0 0.0
      %817 = vmatpush2.msra.mxu0 0.0
      %818 = vmatprep.subr.mxu0 0.0
      %819 = vmatpush2.msra.mxu0 0.0
      %820 = vmatprep.subr.mxu0 0.0
      %821 = vmatpush2.msra.mxu0 0.0
      %822 = vmatprep.subr.mxu0 0.0
      %823 = vmatpush2.msra.mxu0 0.0
      %824 = vmatprep.subr.mxu0 0.0
      %825 = vmatpush2.msra.mxu0 0.0
      %826 = vmatprep.subr.mxu0 0.0
      %827 = vmatpush2.msra.mxu0 0.0
      %828 = vmatprep.subr.mxu0 0.0
      %829 = vmatpush2.msra.mxu0 0.0
      %830 = vmatprep.subr.mxu0 0.0
      %831 = vmatpush2.msra.mxu0 0.0
      %832 = vmatprep.mubr.f32.mxu0 0.0
      %833 = vmatmul.mubr.f32.gmra.mxu0 %v745
      %v834 = vpop.f32.mrf.mxu0
      %v835 = vadd.f32 %v706, %v834
      %v836 = vpop.f32.mrf.mxu0
      %837 = vmatprep.mubr.f32.mxu0 0.0
      %838 = vmatmul.mubr.f32.gmra.mxu0 %v748
      %v839 = vpop.f32.mrf.mxu0
      %v840 = vadd.f32 %v711, %v839
      %v841 = vpop.f32.mrf.mxu0
      %842 = vmatprep.mubr.f32.mxu0 0.0
      %843 = vmatmul.mubr.f32.gmra.mxu0 %v751
      %v844 = vpop.f32.mrf.mxu0
      %v845 = vadd.f32 %v716, %v844
      %v846 = vpop.f32.mrf.mxu0
      %847 = vmatprep.mubr.f32.mxu0 0.0
      %848 = vmatmul.mubr.f32.gmra.mxu0 %v754
      %v849 = vpop.f32.mrf.mxu0
      %v850 = vadd.f32 %v721, %v849
      %v851 = vpop.f32.mrf.mxu0
      %852 = vmatprep.mubr.f32.mxu0 0.0
      %853 = vmatmul.mubr.f32.gmra.mxu0 %v757
      %v854 = vpop.f32.mrf.mxu0
      %v855 = vadd.f32 %v726, %v854
      %v856 = vpop.f32.mrf.mxu0
      %857 = vmatprep.mubr.f32.mxu0 0.0
      %858 = vmatmul.mubr.f32.gmra.mxu0 %v760
      %v859 = vpop.f32.mrf.mxu0
      %v860 = vadd.f32 %v731, %v859
      %v861 = vpop.f32.mrf.mxu0
      %862 = vmatprep.mubr.f32.mxu0 0.0
      %863 = vmatmul.mubr.f32.gmra.mxu0 %v763
      %v864 = vpop.f32.mrf.mxu0
      %v865 = vadd.f32 %v736, %v864
      %v866 = vpop.f32.mrf.mxu0
      %867 = vmatprep.mubr.f32.mxu0 0.0
      %868 = vmatmul.mubr.f32.gmra.mxu0 %v766
      %v869 = vpop.f32.mrf.mxu0
      %v870 = vadd.f32 %v741, %v869
      %v871 = vpop.f32.mrf.mxu0
      %872 = vdwg.mxu0
      %v873 = vmax.f32 %v835, 0.0
      %v874 = vmax.f32 %v840, 0.0
      %v875 = vmax.f32 %v845, 0.0
      %v876 = vmax.f32 %v850, 0.0
      %v877 = vmax.f32 %v855, 0.0
      %v878 = vmax.f32 %v860, 0.0
      %v879 = vmax.f32 %v865, 0.0
      %v880 = vmax.f32 %v870, 0.0
      %881 = vmatprep.subr.mxu0 0.0
      %882 = vmatpush1.msra.mxu0 0.0
      %883 = vmatprep.subr.mxu0 0.0
      %884 = vmatpush1.msra.mxu0 0.0
      %885 = vmatprep.subr.mxu0 0.0
      %886 = vmatpush1.msra.mxu0 0.0
      %887 = vmatprep.subr.mxu0 0.0
      %888 = vmatpush1.msra.mxu0 0.0
      %889 = vmatprep.subr.mxu0 0.0
      %890 = vmatpush1.msra.mxu0 0.0
      %891 = vmatprep.subr.mxu0 0.0
      %892 = vmatpush1.msra.mxu0 0.0
      %893 = vmatprep.subr.mxu0 0.0
      %894 = vmatpush1.msra.mxu0 0.0
      %895 = vmatprep.subr.mxu0 0.0
      %896 = vmatpush1.msra.mxu0 0.0
      %897 = vmatprep.subr.mxu0 0.0
      %898 = vmatpush1.msra.mxu0 0.0
      %899 = vmatprep.subr.mxu0 0.0
      %900 = vmatpush1.msra.mxu0 0.0
      %901 = vmatprep.subr.mxu0 0.0
      %902 = vmatpush1.msra.mxu0 0.0
      %903 = vmatprep.subr.mxu0 0.0
      %904 = vmatpush1.msra.mxu0 0.0
      %905 = vmatprep.subr.mxu0 0.0
      %906 = vmatpush1.msra.mxu0 %v686
      %907 = vmatprep.subr.mxu0 0.0
      %908 = vmatpush1.msra.mxu0 %v685
      %909 = vmatprep.subr.mxu0 0.0
      %910 = vmatpush1.msra.mxu0 %v684
      %911 = vmatprep.subr.mxu0 0.0
      %912 = vmatpush1.msra.mxu0 %v683
      %913 = vmatprep.subr.mxu0 0.0
      %914 = vmatpush2.msra.mxu0 0.0
      %915 = vmatprep.subr.mxu0 0.0
      %916 = vmatpush2.msra.mxu0 0.0
      %917 = vmatprep.subr.mxu0 0.0
      %918 = vmatpush2.msra.mxu0 0.0
      %919 = vmatprep.subr.mxu0 0.0
      %920 = vmatpush2.msra.mxu0 0.0
      %921 = vmatprep.subr.mxu0 0.0
      %922 = vmatpush2.msra.mxu0 0.0
      %923 = vmatprep.subr.mxu0 0.0
      %924 = vmatpush2.msra.mxu0 0.0
      %925 = vmatprep.subr.mxu0 0.0
      %926 = vmatpush2.msra.mxu0 0.0
      %927 = vmatprep.subr.mxu0 0.0
      %928 = vmatpush2.msra.mxu0 0.0
      %929 = vmatprep.subr.mxu0 0.0
      %930 = vmatpush2.msra.mxu0 0.0
      %931 = vmatprep.subr.mxu0 0.0
      %932 = vmatpush2.msra.mxu0 0.0
      %933 = vmatprep.subr.mxu0 0.0
      %934 = vmatpush2.msra.mxu0 0.0
      %935 = vmatprep.subr.mxu0 0.0
      %936 = vmatpush2.msra.mxu0 0.0
      %937 = vmatprep.subr.mxu0 0.0
      %938 = vmatpush2.msra.mxu0 0.0
      %939 = vmatprep.subr.mxu0 0.0
      %940 = vmatpush2.msra.mxu0 0.0
      %941 = vmatprep.subr.mxu0 0.0
      %942 = vmatpush2.msra.mxu0 0.0
      %943 = vmatprep.subr.mxu0 0.0
      %944 = vmatpush2.msra.mxu0 0.0
      %945 = vmatprep.mubr.f32.mxu0 0.0
      %946 = vmatmul.mubr.f32.gmra.mxu0 %v745
      %v947 = vpop.f32.mrf.mxu0
      %v948 = vadd.f32 %v706, %v947
      %v949 = vpop.f32.mrf.mxu0
      %950 = vmatprep.mubr.f32.mxu0 0.0
      %951 = vmatmul.mubr.f32.gmra.mxu0 %v748
      %v952 = vpop.f32.mrf.mxu0
      %v953 = vadd.f32 %v711, %v952
      %v954 = vpop.f32.mrf.mxu0
      %955 = vmatprep.mubr.f32.mxu0 0.0
      %956 = vmatmul.mubr.f32.gmra.mxu0 %v751
      %v957 = vpop.f32.mrf.mxu0
      %v958 = vadd.f32 %v716, %v957
      %v959 = vpop.f32.mrf.mxu0
      %960 = vmatprep.mubr.f32.mxu0 0.0
      %961 = vmatmul.mubr.f32.gmra.mxu0 %v754
      %v962 = vpop.f32.mrf.mxu0
      %v963 = vadd.f32 %v721, %v962
      %v964 = vpop.f32.mrf.mxu0
      %965 = vmatprep.mubr.f32.mxu0 0.0
      %966 = vmatmul.mubr.f32.gmra.mxu0 %v757
      %v967 = vpop.f32.mrf.mxu0
      %v968 = vadd.f32 %v726, %v967
      %v969 = vpop.f32.mrf.mxu0
      %970 = vmatprep.mubr.f32.mxu0 0.0
      %971 = vmatmul.mubr.f32.gmra.mxu0 %v760
      %v972 = vpop.f32.mrf.mxu0
      %v973 = vadd.f32 %v731, %v972
      %v974 = vpop.f32.mrf.mxu0
      %975 = vmatprep.mubr.f32.mxu0 0.0
      %976 = vmatmul.mubr.f32.gmra.mxu0 %v763
      %v977 = vpop.f32.mrf.mxu0
      %v978 = vadd.f32 %v736, %v977
      %v979 = vpop.f32.mrf.mxu0
      %980 = vmatprep.mubr.f32.mxu0 0.0
      %981 = vmatmul.mubr.f32.gmra.mxu0 %v766
      %v982 = vpop.f32.mrf.mxu0
      %v983 = vadd.f32 %v741, %v982
      %v984 = vpop.f32.mrf.mxu0
      %985 = vdwg.mxu0
      %v986 = vmax.f32 %v948, 0.0
      %v987 = vmax.f32 %v953, 0.0
      %v988 = vmax.f32 %v958, 0.0
      %v989 = vmax.f32 %v963, 0.0
      %v990 = vmax.f32 %v968, 0.0
      %v991 = vmax.f32 %v973, 0.0
      %v992 = vmax.f32 %v978, 0.0
      %v993 = vmax.f32 %v983, 0.0
      %v994 = vmax.f32 %v873, %v986
      %v995 = vmax.f32 %v874, %v987
      %v996 = vmax.f32 %v875, %v988
      %v997 = vmax.f32 %v876, %v989
      %v998 = vmax.f32 %v877, %v990
      %v999 = vmax.f32 %v878, %v991
      %v1000 = vmax.f32 %v879, %v992
      %v1001 = vmax.f32 %v880, %v993
      %vm1002 = vcmask 130048
      %1003 = vst.msk [vmem:[%s278] sm:$0xff] %vm1002, %v994
      %1004 = vst.msk [vmem:[%s278 + $0x8] sm:$0xff] %vm1002, %v995
      %1005 = vst.msk [vmem:[%s278 + $0x10] sm:$0xff] %vm1002, %v996
      %1006 = vst.msk [vmem:[%s278 + $0x18] sm:$0xff] %vm1002, %v997
      %1007 = vst.msk [vmem:[%s278 + $0x20] sm:$0xff] %vm1002, %v998
      %1008 = vst.msk [vmem:[%s278 + $0x28] sm:$0xff] %vm1002, %v999
      %1009 = vst.msk [vmem:[%s278 + $0x30] sm:$0xff] %vm1002, %v1000
      %1010 = vst.msk [vmem:[%s278 + $0x38] sm:$0xff] %vm1002, %v1001
      %p1011 = scmp.lt.s32.totalorder %s18, 1
      %s1012 = scalar_select %p1011, %s18, 1
      %s1013 = smul.addr %s1012, 8
      %s1014 = smul.addr %s1013, 8
      %s1015 = scalar_lea.vmem %s7, %s1014
      // Predicated region
      $region49: #{forward.2} parent=47 // pred_check
        %p1016 = pneg %p188
      $region50: #{forward.2} parent=47 // pred_check_branch
        %1018 = sbr.rel (%p1016) target = $region52
      $region51: #{forward.2} parent=47 // pred_region
        _
      $region52: #{forward.2} parent=47 // pred_fallthru
        _
    $region48: #{forward.2} parent=5 // pred_fallthru
      _
    %p1019 = scmp.le.s32.totalorder 2, %s13
    // Predicated region
    $region53: #{forward.2} parent=5 // pred_check
      %p1020 = pneg %p1019
    $region54: #{forward.2} parent=5 // pred_check_branch
      %1022 = sbr.rel (%p1020) target = $region56
    $region55: #{forward.2} parent=5 // pred_region
      %s1023 = ssub.s32 %s13, 2
      // Predicated region
      $region57: #{forward.2} parent=55 // pred_check
        %p1024 = pneg %p194
      $region58: #{forward.2} parent=55 // pred_check_branch
        %1026 = sbr.rel (%p1024) target = $region60
      $region59: #{forward.2} parent=55 // pred_region
        %p1027 = scmp.lt.s32.totalorder %s19, 1
        %s1028 = scalar_select %p1027, %s19, 1
        %s1029 = smul.addr %s1028, 8
        %s1030 = smul.addr %s1029, 8
        %s1031 = scalar_lea.vmem %s7, %s1030
      $region60: #{forward.2} parent=55 // pred_fallthru
        _
    $region56: #{forward.2} parent=5 // pred_fallthru
      _
  $region6: #{forward.2} parent=0 // loop_footer
    %s17 = sadd.s32 1, %s13
  $region7: #{forward.2} parent=0 // loop_footer_branch
    %12 = sbr.rel target = $region3
  $region8: #{forward.2} parent=0 // loop_exit
    _

// kernel: forward.3
$region0: #{forward.3}
  #allocation0 [shape = 'u32[]', space=smem, size = 0x4, offset = 0x4, fixed_abs, tag = 'smem constant byte address 0x4 - core index']
  #allocation1 [shape = 'u32[144,128]{1,0:T(1,128)}', space=vmem, size = 0x12000, scoped, tag = 'internal scratch']
  #allocation2 [shape = 'f32[2,512]{1,0:T(2,128)}', space=vmem, size = 0x1000, scoped, tag = 'scratch operand']
  %s0 = inlined_call_operand.vmem [shape: f32[2,1024], index: 0, kind: input, shape index: {}]
  %s1 = inlined_call_operand.hbm [shape: f32[1024,512], index: 1, kind: input, shape index: {}]
  %s2 = inlined_call_operand.hbm [shape: f32[1,512], index: 2, kind: input, shape index: {}]
  %s3 = inlined_call_operand.hbm [shape: f32[512,256], index: 3, kind: input, shape index: {}]
  %s4 = inlined_call_operand.hbm [shape: f32[1,256], index: 4, kind: input, shape index: {}]
  %s5 = inlined_call_operand.vmem [shape: f32[256,25], index: 5, kind: input, shape index: {}]
  %s6 = inlined_call_operand.hbm [shape: f32[1,25], index: 6, kind: input, shape index: {}]
  %s7 = inlined_call_operand.vmem [shape: f32[2,25], index: 7, kind: output, shape index: {}]
  %s8 = sld [smem:[#allocation0]]
  $region66: #{forward.3} parent=0
    _
  %s10 = ssub.s32 1, %s8
  %s11 = scalar_select 0, %s10, %s8
  $region1: #{forward.3} parent=0
    #allocation3 [shape = 'u8[2097152]{0}', space=vmem, size = 0x200000, scoped, tag = 'input window, operand 1, single buffered']
    #allocation4 [shape = 's32[1]{0}', space=sflag, size = 0x4, scoped, tag = 'scoped memory for forward.3']
    #allocation5 [shape = 'u8[2048]{0}', space=vmem, size = 0x800, scoped, tag = 'input window, operand 2, single buffered']
    #allocation6 [shape = 's32[1]{0}', space=sflag, size = 0x4, scoped, tag = 'scoped memory for forward.3']
    #allocation7 [shape = 'u8[524288]{0}', space=vmem, size = 0x80000, scoped, tag = 'input window, operand 3, single buffered']
    #allocation8 [shape = 'u8[1024]{0}', space=vmem, size = 0x400, scoped, tag = 'input window, operand 4, single buffered']
    #allocation9 [shape = 's32[1]{0}', space=sflag, size = 0x4, scoped, tag = 'scoped memory for forward.3']
    #allocation10 [shape = 'u8[512]{0}', space=vmem, size = 0x400, scoped, tag = 'input window, operand 6, single buffered']
    %12 = vsyncpa [#allocation4], 0
    %13 = vsyncpa [#allocation6], 0
    %14 = vsyncpa [#allocation9], 0
    // Predicated region
    $region2: #{forward.3} parent=1 // pred_check
      _
    $region3: #{forward.3} parent=1 // pred_check_branch
      %16 = sbr.rel (0) target = $region5
    $region4: #{forward.3} parent=1 // pred_region
      _
    $region5: #{forward.3} parent=1 // pred_fallthru
      _
    // Predicated region
    $region6: #{forward.3} parent=1 // pred_check
      _
    $region7: #{forward.3} parent=1 // pred_check_branch
      %18 = sbr.rel (0) target = $region9
    $region8: #{forward.3} parent=1 // pred_region
      %s20 = ssub.s32 65536, 65536
      %21 = vsyncadd [#allocation4], %s20
      %s22 = sshll.u32 [#allocation3], 4
      %s23 = int_to_ptr.vmem [resolvable:$true] %s22
      %28 = dma.hbm_to_vmem [thread:$0]  %s1, 65536, %s23, [#allocation4], 512, 512, 32
    $region9: #{forward.3} parent=1 // pred_fallthru
      _
    // Predicated region
    $region10: #{forward.3} parent=1 // pred_check
      _
    $region11: #{forward.3} parent=1 // pred_check_branch
      %30 = sbr.rel (0) target = $region13
    $region12: #{forward.3} parent=1 // pred_region
      %s32 = ssub.s32 64, 64
      %33 = vsyncadd [#allocation6], %s32
      %s35 = sshll.u32 [#allocation5], 4
      %s36 = int_to_ptr.vmem [resolvable:$true] %s35
      %38 = dma.hbm_to_vmem [thread:$0]  %s2, 64, %s36, [#allocation6]
    $region13: #{forward.3} parent=1 // pred_fallthru
      _
    // Predicated region
    $region14: #{forward.3} parent=1 // pred_check
      _
    $region15: #{forward.3} parent=1 // pred_check_branch
      %40 = sbr.rel (0) target = $region17
    $region16: #{forward.3} parent=1 // pred_region
      %s42 = ssub.s32 16384, 16384
      %43 = vsyncadd [#allocation6], %s42
      %s44 = sshll.u32 [#allocation7], 4
      %s45 = int_to_ptr.vmem [resolvable:$true] %s44
      %50 = dma.hbm_to_vmem [thread:$0]  %s3, 16384, %s45, [#allocation6], 256, 256, 16
    $region17: #{forward.3} parent=1 // pred_fallthru
      _
    // Predicated region
    $region18: #{forward.3} parent=1 // pred_check
      _
    $region19: #{forward.3} parent=1 // pred_check_branch
      %52 = sbr.rel (0) target = $region21
    $region20: #{forward.3} parent=1 // pred_region
      %s54 = ssub.s32 32, 32
      %55 = vsyncadd [#allocation9], %s54
      %s57 = sshll.u32 [#allocation8], 4
      %s58 = int_to_ptr.vmem [resolvable:$true] %s57
      %60 = dma.hbm_to_vmem [thread:$0]  %s4, 32, %s58, [#allocation9]
    $region21: #{forward.3} parent=1 // pred_fallthru
      _
    // Predicated region
    $region22: #{forward.3} parent=1 // pred_check
      _
    $region23: #{forward.3} parent=1 // pred_check_branch
      %62 = sbr.rel (0) target = $region25
    $region24: #{forward.3} parent=1 // pred_region
      _
    $region25: #{forward.3} parent=1 // pred_fallthru
      _
    // Predicated region
    $region26: #{forward.3} parent=1 // pred_check
      _
    $region27: #{forward.3} parent=1 // pred_check_branch
      %64 = sbr.rel (0) target = $region29
    $region28: #{forward.3} parent=1 // pred_region
      %s66 = ssub.s32 16, 16
      %67 = vsyncadd [#allocation9], %s66
      %s69 = sshll.u32 [#allocation10], 4
      %s70 = int_to_ptr.vmem [resolvable:$true] %s69
      %72 = dma.hbm_to_vmem [thread:$0]  %s6, 16, %s70, [#allocation9]
    $region29: #{forward.3} parent=1 // pred_fallthru
      _
    // Predicated region
    $region30: #{forward.3} parent=1 // pred_check
      _
    $region31: #{forward.3} parent=1 // pred_check_branch
      %74 = sbr.rel (0) target = $region33
    $region32: #{forward.3} parent=1 // pred_region
      %75 = dma.done [#allocation4], 65536
    $region33: #{forward.3} parent=1 // pred_fallthru
      _
    // Predicated region
    $region34: #{forward.3} parent=1 // pred_check
      _
    $region35: #{forward.3} parent=1 // pred_check_branch
      %77 = sbr.rel (0) target = $region37
    $region36: #{forward.3} parent=1 // pred_region
      %78 = dma.done [#allocation6], 64
    $region37: #{forward.3} parent=1 // pred_fallthru
      _
    // Predicated region
    $region38: #{forward.3} parent=1 // pred_check
      _
    $region39: #{forward.3} parent=1 // pred_check_branch
      %80 = sbr.rel (0) target = $region41
    $region40: #{forward.3} parent=1 // pred_region
      %81 = dma.done [#allocation6], 16384
    $region41: #{forward.3} parent=1 // pred_fallthru
      _
    // Predicated region
    $region42: #{forward.3} parent=1 // pred_check
      _
    $region43: #{forward.3} parent=1 // pred_check_branch
      %83 = sbr.rel (0) target = $region45
    $region44: #{forward.3} parent=1 // pred_region
      %84 = dma.done [#allocation9], 32
    $region45: #{forward.3} parent=1 // pred_fallthru
      _
    // Predicated region
    $region46: #{forward.3} parent=1 // pred_check
      _
    $region47: #{forward.3} parent=1 // pred_check_branch
      %86 = sbr.rel (0) target = $region49
    $region48: #{forward.3} parent=1 // pred_region
      %87 = dma.done [#allocation9], 16
    $region49: #{forward.3} parent=1 // pred_fallthru
      _
    %p88 = scmp.eq.s32.totalorder 0, 0
    // Predicated region
    $region50: #{forward.3} parent=1 // pred_check
      %p89 = pneg %p88
    $region51: #{forward.3} parent=1 // pred_check_branch
      %91 = sbr.rel (%p89) target = $region53
    $region52: #{forward.3} parent=1 // pred_region
      %92 = vst [vmem:[#allocation2] sm:$0xff] 0.0
    $region53: #{forward.3} parent=1 // pred_fallthru
      _
    %v93 = vld [vmem:[#allocation2] sm:$0xff]
    %v94 = vld [vmem:[%s0] sm:$0xff]
    %v95 = vld [vmem:[%s0 + $0x8] sm:$0xff]
    %v96 = vld [vmem:[#allocation3] sm:$0xff]
    %v97 = vld [vmem:[#allocation3 + $0x8] sm:$0xff]
    %v98 = vld [vmem:[#allocation3 + $0x10] sm:$0xff]
    %v99 = vld [vmem:[#allocation3 + $0x18] sm:$0xff]
    %v100 = vld [vmem:[#allocation3 + $0x20] sm:$0xff]
    %v101 = vld [vmem:[#allocation3 + $0x28] sm:$0xff]
    %v102 = vld [vmem:[#allocation3 + $0x30] sm:$0xff]
    %v103 = vld [vmem:[#allocation3 + $0x38] sm:$0xff]
    %v104 = vld [vmem:[#allocation3 + $0x40] sm:$0xff]
    %v105 = vld [vmem:[#allocation3 + $0x48] sm:$0xff]
    %v106 = vld [vmem:[#allocation3 + $0x50] sm:$0xff]
    %v107 = vld [vmem:[#allocation3 + $0x58] sm:$0xff]
    %v108 = vld [vmem:[#allocation3 + $0x60] sm:$0xff]
    %v109 = vld [vmem:[#allocation3 + $0x68] sm:$0xff]
    %v110 = vld [vmem:[#allocation3 + $0x70] sm:$0xff]
    %v111 = vld [vmem:[#allocation3 + $0x78] sm:$0xff]
    %v112 = vld [vmem:[#allocation3 + $0x80] sm:$0xff]
    %v113 = vld [vmem:[#allocation3 + $0x88] sm:$0xff]
    %v114 = vld [vmem:[#allocation3 + $0x90] sm:$0xff]
    %v115 = vld [vmem:[#allocation3 + $0x98] sm:$0xff]
    %v116 = vld [vmem:[#allocation3 + $0xa0] sm:$0xff]
    %v117 = vld [vmem:[#allocation3 + $0xa8] sm:$0xff]
    %v118 = vld [vmem:[#allocation3 + $0xb0] sm:$0xff]
    %v119 = vld [vmem:[#allocation3 + $0xb8] sm:$0xff]
    %v120 = vld [vmem:[#allocation3 + $0xc0] sm:$0xff]
    %v121 = vld [vmem:[#allocation3 + $0xc8] sm:$0xff]
    %v122 = vld [vmem:[#allocation3 + $0xd0] sm:$0xff]
    %v123 = vld [vmem:[#allocation3 + $0xd8] sm:$0xff]
    %v124 = vld [vmem:[#allocation3 + $0xe0] sm:$0xff]
    %v125 = vld [vmem:[#allocation3 + $0xe8] sm:$0xff]
    %v126 = vld [vmem:[#allocation3 + $0xf0] sm:$0xff]
    %v127 = vld [vmem:[#allocation3 + $0xf8] sm:$0xff]
    %v128 = vld [vmem:[#allocation3 + $0x100] sm:$0xff]
    %v129 = vld [vmem:[#allocation3 + $0x108] sm:$0xff]
    %v130 = vld [vmem:[#allocation3 + $0x110] sm:$0xff]
    %v131 = vld [vmem:[#allocation3 + $0x118] sm:$0xff]
    %v132 = vld [vmem:[#allocation3 + $0x120] sm:$0xff]
    %v133 = vld [vmem:[#allocation3 + $0x128] sm:$0xff]
    %v134 = vld [vmem:[#allocation3 + $0x130] sm:$0xff]
    %v135 = vld [vmem:[#allocation3 + $0x138] sm:$0xff]
    %v136 = vld [vmem:[#allocation3 + $0x140] sm:$0xff]
    %v137 = vld [vmem:[#allocation3 + $0x148] sm:$0xff]
    %v138 = vld [vmem:[#allocation3 + $0x150] sm:$0xff]
    %v139 = vld [vmem:[#allocation3 + $0x158] sm:$0xff]
    %v140 = vld [vmem:[#allocation3 + $0x160] sm:$0xff]
    %v141 = vld [vmem:[#allocation3 + $0x168] sm:$0xff]
    %v142 = vld [vmem:[#allocation3 + $0x170] sm:$0xff]
    %v143 = vld [vmem:[#allocation3 + $0x178] sm:$0xff]
    %v144 = vld [vmem:[#allocation3 + $0x180] sm:$0xff]
    %v145 = vld [vmem:[#allocation3 + $0x188] sm:$0xff]
    %v146 = vld [vmem:[#allocation3 + $0x190] sm:$0xff]
    %v147 = vld [vmem:[#allocation3 + $0x198] sm:$0xff]
    %v148 = vld [vmem:[#allocation3 + $0x1a0] sm:$0xff]
    %v149 = vld [vmem:[#allocation3 + $0x1a8] sm:$0xff]
    %v150 = vld [vmem:[#allocation3 + $0x1b0] sm:$0xff]
    %v151 = vld [vmem:[#allocation3 + $0x1b8] sm:$0xff]
    %v152 = vld [vmem:[#allocation3 + $0x1c0] sm:$0xff]
    %v153 = vld [vmem:[#allocation3 + $0x1c8] sm:$0xff]
    %v154 = vld [vmem:[#allocation3 + $0x1d0] sm:$0xff]
    %v155 = vld [vmem:[#allocation3 + $0x1d8] sm:$0xff]
    %v156 = vld [vmem:[#allocation3 + $0x1e0] sm:$0xff]
    %v157 = vld [vmem:[#allocation3 + $0x1e8] sm:$0xff]
    %v158 = vld [vmem:[#allocation3 + $0x1f0] sm:$0xff]
    %v159 = vld [vmem:[#allocation3 + $0x1f8] sm:$0xff]
    %v160 = vld [vmem:[#allocation3 + $0x200] sm:$0xff]
    %v161 = vld [vmem:[#allocation3 + $0x208] sm:$0xff]
    %v162 = vld [vmem:[#allocation3 + $0x210] sm:$0xff]
    %v163 = vld [vmem:[#allocation3 + $0x218] sm:$0xff]
    %v164 = vld [vmem:[#allocation3 + $0x220] sm:$0xff]
    %v165 = vld [vmem:[#allocation3 + $0x228] sm:$0xff]
    %v166 = vld [vmem:[#allocation3 + $0x230] sm:$0xff]
    %v167 = vld [vmem:[#allocation3 + $0x238] sm:$0xff]
    %v168 = vld [vmem:[#allocation3 + $0x240] sm:$0xff]
    %v169 = vld [vmem:[#allocation3 + $0x248] sm:$0xff]
    %v170 = vld [vmem:[#allocation3 + $0x250] sm:$0xff]
    %v171 = vld [vmem:[#allocation3 + $0x258] sm:$0xff]
    %v172 = vld [vmem:[#allocation3 + $0x260] sm:$0xff]
    %v173 = vld [vmem:[#allocation3 + $0x268] sm:$0xff]
    %v174 = vld [vmem:[#allocation3 + $0x270] sm:$0xff]
    %v175 = vld [vmem:[#allocation3 + $0x278] sm:$0xff]
    %v176 = vld [vmem:[#allocation3 + $0x280] sm:$0xff]
    %v177 = vld [vmem:[#allocation3 + $0x288] sm:$0xff]
    %v178 = vld [vmem:[#allocation3 + $0x290] sm:$0xff]
    %v179 = vld [vmem:[#allocation3 + $0x298] sm:$0xff]
    %v180 = vld [vmem:[#allocation3 + $0x2a0] sm:$0xff]
    %v181 = vld [vmem:[#allocation3 + $0x2a8] sm:$0xff]
    %v182 = vld [vmem:[#allocation3 + $0x2b0] sm:$0xff]
    %v183 = vld [vmem:[#allocation3 + $0x2b8] sm:$0xff]
    %v184 = vld [vmem:[#allocation3 + $0x2c0] sm:$0xff]
    %v185 = vld [vmem:[#allocation3 + $0x2c8] sm:$0xff]
    %v186 = vld [vmem:[#allocation3 + $0x2d0] sm:$0xff]
    %v187 = vld [vmem:[#allocation3 + $0x2d8] sm:$0xff]
    %v188 = vld [vmem:[#allocation3 + $0x2e0] sm:$0xff]
    %v189 = vld [vmem:[#allocation3 + $0x2e8] sm:$0xff]
    %v190 = vld [vmem:[#allocation3 + $0x2f0] sm:$0xff]
    %v191 = vld [vmem:[#allocation3 + $0x2f8] sm:$0xff]
    %v192 = vld [vmem:[#allocation3 + $0x300] sm:$0xff]
    %v193 = vld [vmem:[#allocation3 + $0x308] sm:$0xff]
    %v194 = vld [vmem:[#allocation3 + $0x310] sm:$0xff]
    %v195 = vld [vmem:[#allocation3 + $0x318] sm:$0xff]
    %v196 = vld [vmem:[#allocation3 + $0x320] sm:$0xff]
    %v197 = vld [vmem:[#allocation3 + $0x328] sm:$0xff]
    %v198 = vld [vmem:[#allocation3 + $0x330] sm:$0xff]
    %v199 = vld [vmem:[#allocation3 + $0x338] sm:$0xff]
    %v200 = vld [vmem:[#allocation3 + $0x340] sm:$0xff]
    %v201 = vld [vmem:[#allocation3 + $0x348] sm:$0xff]
    %v202 = vld [vmem:[#allocation3 + $0x350] sm:$0xff]
    %v203 = vld [vmem:[#allocation3 + $0x358] sm:$0xff]
    %v204 = vld [vmem:[#allocation3 + $0x360] sm:$0xff]
    %v205 = vld [vmem:[#allocation3 + $0x368] sm:$0xff]
    %v206 = vld [vmem:[#allocation3 + $0x370] sm:$0xff]
    %v207 = vld [vmem:[#allocation3 + $0x378] sm:$0xff]
    %v208 = vld [vmem:[#allocation3 + $0x380] sm:$0xff]
    %v209 = vld [vmem:[#allocation3 + $0x388] sm:$0xff]
    %v210 = vld [vmem:[#allocation3 + $0x390] sm:$0xff]
    %v211 = vld [vmem:[#allocation3 + $0x398] sm:$0xff]
    %v212 = vld [vmem:[#allocation3 + $0x3a0] sm:$0xff]
    %v213 = vld [vmem:[#allocation3 + $0x3a8] sm:$0xff]
    %v214 = vld [vmem:[#allocation3 + $0x3b0] sm:$0xff]
    %v215 = vld [vmem:[#allocation3 + $0x3b8] sm:$0xff]
    %v216 = vld [vmem:[#allocation3 + $0x3c0] sm:$0xff]
    %v217 = vld [vmem:[#allocation3 + $0x3c8] sm:$0xff]
    %v218 = vld [vmem:[#allocation3 + $0x3d0] sm:$0xff]
    %v219 = vld [vmem:[#allocation3 + $0x3d8] sm:$0xff]
    %v220 = vld [vmem:[#allocation3 + $0x3e0] sm:$0xff]
    %v221 = vld [vmem:[#allocation3 + $0x3e8] sm:$0xff]
    %v222 = vld [vmem:[#allocation3 + $0x3f0] sm:$0xff]
    %v223 = vld [vmem:[#allocation3 + $0x3f8] sm:$0xff]
    %v224 = vld [vmem:[#allocation3 + $0x400] sm:$0xff]
    %v225 = vld [vmem:[#allocation3 + $0x408] sm:$0xff]
    %v226 = vld [vmem:[#allocation3 + $0x410] sm:$0xff]
    %v227 = vld [vmem:[#allocation3 + $0x418] sm:$0xff]
    %v228 = vld [vmem:[#allocation3 + $0x420] sm:$0xff]
    %v229 = vld [vmem:[#allocation3 + $0x428] sm:$0xff]
    %v230 = vld [vmem:[#allocation3 + $0x430] sm:$0xff]
    %v231 = vld [vmem:[#allocation3 + $0x438] sm:$0xff]
    %v232 = vld [vmem:[#allocation3 + $0x440] sm:$0xff]
    %v233 = vld [vmem:[#allocation3 + $0x448] sm:$0xff]
    %v234 = vld [vmem:[#allocation3 + $0x450] sm:$0xff]
    %v235 = vld [vmem:[#allocation3 + $0x458] sm:$0xff]
    %v236 = vld [vmem:[#allocation3 + $0x460] sm:$0xff]
    %v237 = vld [vmem:[#allocation3 + $0x468] sm:$0xff]
    %v238 = vld [vmem:[#allocation3 + $0x470] sm:$0xff]
    %v239 = vld [vmem:[#allocation3 + $0x478] sm:$0xff]
    %v240 = vld [vmem:[#allocation3 + $0x480] sm:$0xff]
    %v241 = vld [vmem:[#allocation3 + $0x488] sm:$0xff]
    %v242 = vld [vmem:[#allocation3 + $0x490] sm:$0xff]
    %v243 = vld [vmem:[#allocation3 + $0x498] sm:$0xff]
    %v244 = vld [vmem:[#allocation3 + $0x4a0] sm:$0xff]
    %v245 = vld [vmem:[#allocation3 + $0x4a8] sm:$0xff]
    %v246 = vld [vmem:[#allocation3 + $0x4b0] sm:$0xff]
    %v247 = vld [vmem:[#allocation3 + $0x4b8] sm:$0xff]
    %v248 = vld [vmem:[#allocation3 + $0x4c0] sm:$0xff]
    %v249 = vld [vmem:[#allocation3 + $0x4c8] sm:$0xff]
    %v250 = vld [vmem:[#allocation3 + $0x4d0] sm:$0xff]
    %v251 = vld [vmem:[#allocation3 + $0x4d8] sm:$0xff]
    %v252 = vld [vmem:[#allocation3 + $0x4e0] sm:$0xff]
    %v253 = vld [vmem:[#allocation3 + $0x4e8] sm:$0xff]
    %v254 = vld [vmem:[#allocation3 + $0x4f0] sm:$0xff]
    %v255 = vld [vmem:[#allocation3 + $0x4f8] sm:$0xff]
    %v256 = vld [vmem:[#allocation3 + $0x500] sm:$0xff]
    %v257 = vld [vmem:[#allocation3 + $0x508] sm:$0xff]
    %v258 = vld [vmem:[#allocation3 + $0x510] sm:$0xff]
    %v259 = vld [vmem:[#allocation3 + $0x518] sm:$0xff]
    %v260 = vld [vmem:[#allocation3 + $0x520] sm:$0xff]
    %v261 = vld [vmem:[#allocation3 + $0x528] sm:$0xff]
    %v262 = vld [vmem:[#allocation3 + $0x530] sm:$0xff]
    %v263 = vld [vmem:[#allocation3 + $0x538] sm:$0xff]
    %v264 = vld [vmem:[#allocation3 + $0x540] sm:$0xff]
    %v265 = vld [vmem:[#allocation3 + $0x548] sm:$0xff]
    %v266 = vld [vmem:[#allocation3 + $0x550] sm:$0xff]
    %v267 = vld [vmem:[#allocation3 + $0x558] sm:$0xff]
    %v268 = vld [vmem:[#allocation3 + $0x560] sm:$0xff]
    %v269 = vld [vmem:[#allocation3 + $0x568] sm:$0xff]
    %v270 = vld [vmem:[#allocation3 + $0x570] sm:$0xff]
    %v271 = vld [vmem:[#allocation3 + $0x578] sm:$0xff]
    %v272 = vld [vmem:[#allocation3 + $0x580] sm:$0xff]
    %v273 = vld [vmem:[#allocation3 + $0x588] sm:$0xff]
    %v274 = vld [vmem:[#allocation3 + $0x590] sm:$0xff]
    %v275 = vld [vmem:[#allocation3 + $0x598] sm:$0xff]
    %v276 = vld [vmem:[#allocation3 + $0x5a0] sm:$0xff]
    %v277 = vld [vmem:[#allocation3 + $0x5a8] sm:$0xff]
    %v278 = vld [vmem:[#allocation3 + $0x5b0] sm:$0xff]
    %v279 = vld [vmem:[#allocation3 + $0x5b8] sm:$0xff]
    %v280 = vld [vmem:[#allocation3 + $0x5c0] sm:$0xff]
    %v281 = vld [vmem:[#allocation3 + $0x5c8] sm:$0xff]
    %v282 = vld [vmem:[#allocation3 + $0x5d0] sm:$0xff]
    %v283 = vld [vmem:[#allocation3 + $0x5d8] sm:$0xff]
    %v284 = vld [vmem:[#allocation3 + $0x5e0] sm:$0xff]
    %v285 = vld [vmem:[#allocation3 + $0x5e8] sm:$0xff]
    %v286 = vld [vmem:[#allocation3 + $0x5f0] sm:$0xff]
    %v287 = vld [vmem:[#allocation3 + $0x5f8] sm:$0xff]
    %v288 = vld [vmem:[#allocation3 + $0x600] sm:$0xff]
    %v289 = vld [vmem:[#allocation3 + $0x608] sm:$0xff]
    %v290 = vld [vmem:[#allocation3 + $0x610] sm:$0xff]
    %v291 = vld [vmem:[#allocation3 + $0x618] sm:$0xff]
    %v292 = vld [vmem:[#allocation3 + $0x620] sm:$0xff]
    %v293 = vld [vmem:[#allocation3 + $0x628] sm:$0xff]
    %v294 = vld [vmem:[#allocation3 + $0x630] sm:$0xff]
    %v295 = vld [vmem:[#allocation3 + $0x638] sm:$0xff]
    %v296 = vld [vmem:[#allocation3 + $0x640] sm:$0xff]
    %v297 = vld [vmem:[#allocation3 + $0x648] sm:$0xff]
    %v298 = vld [vmem:[#allocation3 + $0x650] sm:$0xff]
    %v299 = vld [vmem:[#allocation3 + $0x658] sm:$0xff]
    %v300 = vld [vmem:[#allocation3 + $0x660] sm:$0xff]
    %v301 = vld [vmem:[#allocation3 + $0x668] sm:$0xff]
    %v302 = vld [vmem:[#allocation3 + $0x670] sm:$0xff]
    %v303 = vld [vmem:[#allocation3 + $0x678] sm:$0xff]
    %v304 = vld [vmem:[#allocation3 + $0x680] sm:$0xff]
    %v305 = vld [vmem:[#allocation3 + $0x688] sm:$0xff]
    %v306 = vld [vmem:[#allocation3 + $0x690] sm:$0xff]
    %v307 = vld [vmem:[#allocation3 + $0x698] sm:$0xff]
    %v308 = vld [vmem:[#allocation3 + $0x6a0] sm:$0xff]
    %v309 = vld [vmem:[#allocation3 + $0x6a8] sm:$0xff]
    %v310 = vld [vmem:[#allocation3 + $0x6b0] sm:$0xff]
    %v311 = vld [vmem:[#allocation3 + $0x6b8] sm:$0xff]
    %v312 = vld [vmem:[#allocation3 + $0x6c0] sm:$0xff]
    %v313 = vld [vmem:[#allocation3 + $0x6c8] sm:$0xff]
    %v314 = vld [vmem:[#allocation3 + $0x6d0] sm:$0xff]
    %v315 = vld [vmem:[#allocation3 + $0x6d8] sm:$0xff]
    %v316 = vld [vmem:[#allocation3 + $0x6e0] sm:$0xff]
    %v317 = vld [vmem:[#allocation3 + $0x6e8] sm:$0xff]
    %v318 = vld [vmem:[#allocation3 + $0x6f0] sm:$0xff]
    %v319 = vld [vmem:[#allocation3 + $0x6f8] sm:$0xff]
    %v320 = vld [vmem:[#allocation3 + $0x700] sm:$0xff]
    %v321 = vld [vmem:[#allocation3 + $0x708] sm:$0xff]
    %v322 = vld [vmem:[#allocation3 + $0x710] sm:$0xff]
    %v323 = vld [vmem:[#allocation3 + $0x718] sm:$0xff]
    %v324 = vld [vmem:[#allocation3 + $0x720] sm:$0xff]
    %v325 = vld [vmem:[#allocation3 + $0x728] sm:$0xff]
    %v326 = vld [vmem:[#allocation3 + $0x730] sm:$0xff]
    %v327 = vld [vmem:[#allocation3 + $0x738] sm:$0xff]
    %v328 = vld [vmem:[#allocation3 + $0x740] sm:$0xff]
    %v329 = vld [vmem:[#allocation3 + $0x748] sm:$0xff]
    %v330 = vld [vmem:[#allocation3 + $0x750] sm:$0xff]
    %v331 = vld [vmem:[#allocation3 + $0x758] sm:$0xff]
    %v332 = vld [vmem:[#allocation3 + $0x760] sm:$0xff]
    %v333 = vld [vmem:[#allocation3 + $0x768] sm:$0xff]
    %v334 = vld [vmem:[#allocation3 + $0x770] sm:$0xff]
    %v335 = vld [vmem:[#allocation3 + $0x778] sm:$0xff]
    %v336 = vld [vmem:[#allocation3 + $0x780] sm:$0xff]
    %v337 = vld [vmem:[#allocation3 + $0x788] sm:$0xff]
    %v338 = vld [vmem:[#allocation3 + $0x790] sm:$0xff]
    %v339 = vld [vmem:[#allocation3 + $0x798] sm:$0xff]
    %v340 = vld [vmem:[#allocation3 + $0x7a0] sm:$0xff]
    %v341 = vld [vmem:[#allocation3 + $0x7a8] sm:$0xff]
    %v342 = vld [vmem:[#allocation3 + $0x7b0] sm:$0xff]
    %v343 = vld [vmem:[#allocation3 + $0x7b8] sm:$0xff]
    %v344 = vld [vmem:[#allocation3 + $0x7c0] sm:$0xff]
    %v345 = vld [vmem:[#allocation3 + $0x7c8] sm:$0xff]
    %v346 = vld [vmem:[#allocation3 + $0x7d0] sm:$0xff]
    %v347 = vld [vmem:[#allocation3 + $0x7d8] sm:$0xff]
    %v348 = vld [vmem:[#allocation3 + $0x7e0] sm:$0xff]
    %v349 = vld [vmem:[#allocation3 + $0x7e8] sm:$0xff]
    %v350 = vld [vmem:[#allocation3 + $0x7f0] sm:$0xff]
    %v351 = vld [vmem:[#allocation3 + $0x7f8] sm:$0xff]
    %v352 = vld [vmem:[#allocation3 + $0x800] sm:$0xff]
    %v353 = vld [vmem:[#allocation3 + $0x808] sm:$0xff]
    %v354 = vld [vmem:[#allocation3 + $0x810] sm:$0xff]
    %v355 = vld [vmem:[#allocation3 + $0x818] sm:$0xff]
    %v356 = vld [vmem:[#allocation3 + $0x820] sm:$0xff]
    %v357 = vld [vmem:[#allocation3 + $0x828] sm:$0xff]
    %v358 = vld [vmem:[#allocation3 + $0x830] sm:$0xff]
    %v359 = vld [vmem:[#allocation3 + $0x838] sm:$0xff]
    %v360 = vld [vmem:[#allocation3 + $0x840] sm:$0xff]
    %v361 = vld [vmem:[#allocation3 + $0x848] sm:$0xff]
    %v362 = vld [vmem:[#allocation3 + $0x850] sm:$0xff]
    %v363 = vld [vmem:[#allocation3 + $0x858] sm:$0xff]
    %v364 = vld [vmem:[#allocation3 + $0x860] sm:$0xff]
    %v365 = vld [vmem:[#allocation3 + $0x868] sm:$0xff]
    %v366 = vld [vmem:[#allocation3 + $0x870] sm:$0xff]
    %v367 = vld [vmem:[#allocation3 + $0x878] sm:$0xff]
    %v368 = vld [vmem:[#allocation3 + $0x880] sm:$0xff]
    %v369 = vld [vmem:[#allocation3 + $0x888] sm:$0xff]
    %v370 = vld [vmem:[#allocation3 + $0x890] sm:$0xff]
    %v371 = vld [vmem:[#allocation3 + $0x898] sm:$0xff]
    %v372 = vld [vmem:[#allocation3 + $0x8a0] sm:$0xff]
    %v373 = vld [vmem:[#allocation3 + $0x8a8] sm:$0xff]
    %v374 = vld [vmem:[#allocation3 + $0x8b0] sm:$0xff]
    %v375 = vld [vmem:[#allocation3 + $0x8b8] sm:$0xff]
    %v376 = vld [vmem:[#allocation3 + $0x8c0] sm:$0xff]
    %v377 = vld [vmem:[#allocation3 + $0x8c8] sm:$0xff]
    %v378 = vld [vmem:[#allocation3 + $0x8d0] sm:$0xff]
    %v379 = vld [vmem:[#allocation3 + $0x8d8] sm:$0xff]
    %v380 = vld [vmem:[#allocation3 + $0x8e0] sm:$0xff]
    %v381 = vld [vmem:[#allocation3 + $0x8e8] sm:$0xff]
    %v382 = vld [vmem:[#allocation3 + $0x8f0] sm:$0xff]
    %v383 = vld [vmem:[#allocation3 + $0x8f8] sm:$0xff]
    %v384 = vld [vmem:[#allocation3 + $0x900] sm:$0xff]
    %v385 = vld [vmem:[#allocation3 + $0x908] sm:$0xff]
    %v386 = vld [vmem:[#allocation3 + $0x910] sm:$0xff]
    %v387 = vld [vmem:[#allocation3 + $0x918] sm:$0xff]
    %v388 = vld [vmem:[#allocation3 + $0x920] sm:$0xff]
    %v389 = vld [vmem:[#allocation3 + $0x928] sm:$0xff]
    %v390 = vld [vmem:[#allocation3 + $0x930] sm:$0xff]
    %v391 = vld [vmem:[#allocation3 + $0x938] sm:$0xff]
    %v392 = vld [vmem:[#allocation3 + $0x940] sm:$0xff]
    %v393 = vld [vmem:[#allocation3 + $0x948] sm:$0xff]
    %v394 = vld [vmem:[#allocation3 + $0x950] sm:$0xff]
    %v395 = vld [vmem:[#allocation3 + $0x958] sm:$0xff]
    %v396 = vld [vmem:[#allocation3 + $0x960] sm:$0xff]
    %v397 = vld [vmem:[#allocation3 + $0x968] sm:$0xff]
    %v398 = vld [vmem:[#allocation3 + $0x970] sm:$0xff]
    %v399 = vld [vmem:[#allocation3 + $0x978] sm:$0xff]
    %v400 = vld [vmem:[#allocation3 + $0x980] sm:$0xff]
    %v401 = vld [vmem:[#allocation3 + $0x988] sm:$0xff]
    %v402 = vld [vmem:[#allocation3 + $0x990] sm:$0xff]
    %v403 = vld [vmem:[#allocation3 + $0x998] sm:$0xff]
    %v404 = vld [vmem:[#allocation3 + $0x9a0] sm:$0xff]
    %v405 = vld [vmem:[#allocation3 + $0x9a8] sm:$0xff]
    %v406 = vld [vmem:[#allocation3 + $0x9b0] sm:$0xff]
    %v407 = vld [vmem:[#allocation3 + $0x9b8] sm:$0xff]
    %v408 = vld [vmem:[#allocation3 + $0x9c0] sm:$0xff]
    %v409 = vld [vmem:[#allocation3 + $0x9c8] sm:$0xff]
    %v410 = vld [vmem:[#allocation3 + $0x9d0] sm:$0xff]
    %v411 = vld [vmem:[#allocation3 + $0x9d8] sm:$0xff]
    %v412 = vld [vmem:[#allocation3 + $0x9e0] sm:$0xff]
    %v413 = vld [vmem:[#allocation3 + $0x9e8] sm:$0xff]
    %v414 = vld [vmem:[#allocation3 + $0x9f0] sm:$0xff]
    %v415 = vld [vmem:[#allocation3 + $0x9f8] sm:$0xff]
    %v416 = vld [vmem:[#allocation3 + $0xa00] sm:$0xff]
    %v417 = vld [vmem:[#allocation3 + $0xa08] sm:$0xff]
    %v418 = vld [vmem:[#allocation3 + $0xa10] sm:$0xff]
    %v419 = vld [vmem:[#allocation3 + $0xa18] sm:$0xff]
    %v420 = vld [vmem:[#allocation3 + $0xa20] sm:$0xff]
    %v421 = vld [vmem:[#allocation3 + $0xa28] sm:$0xff]
    %v422 = vld [vmem:[#allocation3 + $0xa30] sm:$0xff]
    %v423 = vld [vmem:[#allocation3 + $0xa38] sm:$0xff]
    %v424 = vld [vmem:[#allocation3 + $0xa40] sm:$0xff]
    %v425 = vld [vmem:[#allocation3 + $0xa48] sm:$0xff]
    %v426 = vld [vmem:[#allocation3 + $0xa50] sm:$0xff]
    %v427 = vld [vmem:[#allocation3 + $0xa58] sm:$0xff]
    %v428 = vld [vmem:[#allocation3 + $0xa60] sm:$0xff]
    %v429 = vld [vmem:[#allocation3 + $0xa68] sm:$0xff]
    %v430 = vld [vmem:[#allocation3 + $0xa70] sm:$0xff]
    %v431 = vld [vmem:[#allocation3 + $0xa78] sm:$0xff]
    %v432 = vld [vmem:[#allocation3 + $0xa80] sm:$0xff]
    %v433 = vld [vmem:[#allocation3 + $0xa88] sm:$0xff]
    %v434 = vld [vmem:[#allocation3 + $0xa90] sm:$0xff]
    %v435 = vld [vmem:[#allocation3 + $0xa98] sm:$0xff]
    %v436 = vld [vmem:[#allocation3 + $0xaa0] sm:$0xff]
    %v437 = vld [vmem:[#allocation3 + $0xaa8] sm:$0xff]
    %v438 = vld [vmem:[#allocation3 + $0xab0] sm:$0xff]
    %v439 = vld [vmem:[#allocation3 + $0xab8] sm:$0xff]
    %v440 = vld [vmem:[#allocation3 + $0xac0] sm:$0xff]
    %v441 = vld [vmem:[#allocation3 + $0xac8] sm:$0xff]
    %v442 = vld [vmem:[#allocation3 + $0xad0] sm:$0xff]
    %v443 = vld [vmem:[#allocation3 + $0xad8] sm:$0xff]
    %v444 = vld [vmem:[#allocation3 + $0xae0] sm:$0xff]
    %v445 = vld [vmem:[#allocation3 + $0xae8] sm:$0xff]
    %v446 = vld [vmem:[#allocation3 + $0xaf0] sm:$0xff]
    %v447 = vld [vmem:[#allocation3 + $0xaf8] sm:$0xff]
    %v448 = vld [vmem:[#allocation3 + $0xb00] sm:$0xff]
    %v449 = vld [vmem:[#allocation3 + $0xb08] sm:$0xff]
    %v450 = vld [vmem:[#allocation3 + $0xb10] sm:$0xff]
    %v451 = vld [vmem:[#allocation3 + $0xb18] sm:$0xff]
    %v452 = vld [vmem:[#allocation3 + $0xb20] sm:$0xff]
    %v453 = vld [vmem:[#allocation3 + $0xb28] sm:$0xff]
    %v454 = vld [vmem:[#allocation3 + $0xb30] sm:$0xff]
    %v455 = vld [vmem:[#allocation3 + $0xb38] sm:$0xff]
    %v456 = vld [vmem:[#allocation3 + $0xb40] sm:$0xff]
    %v457 = vld [vmem:[#allocation3 + $0xb48] sm:$0xff]
    %v458 = vld [vmem:[#allocation3 + $0xb50] sm:$0xff]
    %v459 = vld [vmem:[#allocation3 + $0xb58] sm:$0xff]
    %v460 = vld [vmem:[#allocation3 + $0xb60] sm:$0xff]
    %v461 = vld [vmem:[#allocation3 + $0xb68] sm:$0xff]
    %v462 = vld [vmem:[#allocation3 + $0xb70] sm:$0xff]
    %v463 = vld [vmem:[#allocation3 + $0xb78] sm:$0xff]
    %v464 = vld [vmem:[#allocation3 + $0xb80] sm:$0xff]
    %v465 = vld [vmem:[#allocation3 + $0xb88] sm:$0xff]
    %v466 = vld [vmem:[#allocation3 + $0xb90] sm:$0xff]
    %v467 = vld [vmem:[#allocation3 + $0xb98] sm:$0xff]
    %v468 = vld [vmem:[#allocation3 + $0xba0] sm:$0xff]
    %v469 = vld [vmem:[#allocation3 + $0xba8] sm:$0xff]
    %v470 = vld [vmem:[#allocation3 + $0xbb0] sm:$0xff]
    %v471 = vld [vmem:[#allocation3 + $0xbb8] sm:$0xff]
    %v472 = vld [vmem:[#allocation3 + $0xbc0] sm:$0xff]
    %v473 = vld [vmem:[#allocation3 + $0xbc8] sm:$0xff]
    %v474 = vld [vmem:[#allocation3 + $0xbd0] sm:$0xff]
    %v475 = vld [vmem:[#allocation3 + $0xbd8] sm:$0xff]
    %v476 = vld [vmem:[#allocation3 + $0xbe0] sm:$0xff]
    %v477 = vld [vmem:[#allocation3 + $0xbe8] sm:$0xff]
    %v478 = vld [vmem:[#allocation3 + $0xbf0] sm:$0xff]
    %v479 = vld [vmem:[#allocation3 + $0xbf8] sm:$0xff]
    %v480 = vld [vmem:[#allocation3 + $0xc00] sm:$0xff]
    %v481 = vld [vmem:[#allocation3 + $0xc08] sm:$0xff]
    %v482 = vld [vmem:[#allocation3 + $0xc10] sm:$0xff]
    %v483 = vld [vmem:[#allocation3 + $0xc18] sm:$0xff]
    %v484 = vld [vmem:[#allocation3 + $0xc20] sm:$0xff]
    %v485 = vld [vmem:[#allocation3 + $0xc28] sm:$0xff]
    %v486 = vld [vmem:[#allocation3 + $0xc30] sm:$0xff]
    %v487 = vld [vmem:[#allocation3 + $0xc38] sm:$0xff]
    %v488 = vld [vmem:[#allocation3 + $0xc40] sm:$0xff]
    %v489 = vld [vmem:[#allocation3 + $0xc48] sm:$0xff]
    %v490 = vld [vmem:[#allocation3 + $0xc50] sm:$0xff]
    %v491 = vld [vmem:[#allocation3 + $0xc58] sm:$0xff]
    %v492 = vld [vmem:[#allocation3 + $0xc60] sm:$0xff]
    %v493 = vld [vmem:[#allocation3 + $0xc68] sm:$0xff]
    %v494 = vld [vmem:[#allocation3 + $0xc70] sm:$0xff]
    %v495 = vld [vmem:[#allocation3 + $0xc78] sm:$0xff]
    %v496 = vld [vmem:[#allocation3 + $0xc80] sm:$0xff]
    %v497 = vld [vmem:[#allocation3 + $0xc88] sm:$0xff]
    %v498 = vld [vmem:[#allocation3 + $0xc90] sm:$0xff]
    %v499 = vld [vmem:[#allocation3 + $0xc98] sm:$0xff]
    %v500 = vld [vmem:[#allocation3 + $0xca0] sm:$0xff]
    %v501 = vld [vmem:[#allocation3 + $0xca8] sm:$0xff]
    %v502 = vld [vmem:[#allocation3 + $0xcb0] sm:$0xff]
    %v503 = vld [vmem:[#allocation3 + $0xcb8] sm:$0xff]
    %v504 = vld [vmem:[#allocation3 + $0xcc0] sm:$0xff]
    %v505 = vld [vmem:[#allocation3 + $0xcc8] sm:$0xff]
    %v506 = vld [vmem:[#allocation3 + $0xcd0] sm:$0xff]
    %v507 = vld [vmem:[#allocation3 + $0xcd8] sm:$0xff]
    %v508 = vld [vmem:[#allocation3 + $0xce0] sm:$0xff]
    %v509 = vld [vmem:[#allocation3 + $0xce8] sm:$0xff]
    %v510 = vld [vmem:[#allocation3 + $0xcf0] sm:$0xff]
    %v511 = vld [vmem:[#allocation3 + $0xcf8] sm:$0xff]
    %v512 = vld [vmem:[#allocation3 + $0xd00] sm:$0xff]
    %v513 = vld [vmem:[#allocation3 + $0xd08] sm:$0xff]
    %v514 = vld [vmem:[#allocation3 + $0xd10] sm:$0xff]
    %v515 = vld [vmem:[#allocation3 + $0xd18] sm:$0xff]
    %v516 = vld [vmem:[#allocation3 + $0xd20] sm:$0xff]
    %v517 = vld [vmem:[#allocation3 + $0xd28] sm:$0xff]
    %v518 = vld [vmem:[#allocation3 + $0xd30] sm:$0xff]
    %v519 = vld [vmem:[#allocation3 + $0xd38] sm:$0xff]
    %v520 = vld [vmem:[#allocation3 + $0xd40] sm:$0xff]
    %v521 = vld [vmem:[#allocation3 + $0xd48] sm:$0xff]
    %v522 = vld [vmem:[#allocation3 + $0xd50] sm:$0xff]
    %v523 = vld [vmem:[#allocation3 + $0xd58] sm:$0xff]
    %v524 = vld [vmem:[#allocation3 + $0xd60] sm:$0xff]
    %v525 = vld [vmem:[#allocation3 + $0xd68] sm:$0xff]
    %v526 = vld [vmem:[#allocation3 + $0xd70] sm:$0xff]
    %v527 = vld [vmem:[#allocation3 + $0xd78] sm:$0xff]
    %v528 = vld [vmem:[#allocation3 + $0xd80] sm:$0xff]
    %v529 = vld [vmem:[#allocation3 + $0xd88] sm:$0xff]
    %v530 = vld [vmem:[#allocation3 + $0xd90] sm:$0xff]
    %v531 = vld [vmem:[#allocation3 + $0xd98] sm:$0xff]
    %v532 = vld [vmem:[#allocation3 + $0xda0] sm:$0xff]
    %v533 = vld [vmem:[#allocation3 + $0xda8] sm:$0xff]
    %v534 = vld [vmem:[#allocation3 + $0xdb0] sm:$0xff]
    %v535 = vld [vmem:[#allocation3 + $0xdb8] sm:$0xff]
    %v536 = vld [vmem:[#allocation3 + $0xdc0] sm:$0xff]
    %v537 = vld [vmem:[#allocation3 + $0xdc8] sm:$0xff]
    %v538 = vld [vmem:[#allocation3 + $0xdd0] sm:$0xff]
    %v539 = vld [vmem:[#allocation3 + $0xdd8] sm:$0xff]
    %v540 = vld [vmem:[#allocation3 + $0xde0] sm:$0xff]
    %v541 = vld [vmem:[#allocation3 + $0xde8] sm:$0xff]
    %v542 = vld [vmem:[#allocation3 + $0xdf0] sm:$0xff]
    %v543 = vld [vmem:[#allocation3 + $0xdf8] sm:$0xff]
    %v544 = vld [vmem:[#allocation3 + $0xe00] sm:$0xff]
    %v545 = vld [vmem:[#allocation3 + $0xe08] sm:$0xff]
    %v546 = vld [vmem:[#allocation3 + $0xe10] sm:$0xff]
    %v547 = vld [vmem:[#allocation3 + $0xe18] sm:$0xff]
    %v548 = vld [vmem:[#allocation3 + $0xe20] sm:$0xff]
    %v549 = vld [vmem:[#allocation3 + $0xe28] sm:$0xff]
    %v550 = vld [vmem:[#allocation3 + $0xe30] sm:$0xff]
    %v551 = vld [vmem:[#allocation3 + $0xe38] sm:$0xff]
    %v552 = vld [vmem:[#allocation3 + $0xe40] sm:$0xff]
    %v553 = vld [vmem:[#allocation3 + $0xe48] sm:$0xff]
    %v554 = vld [vmem:[#allocation3 + $0xe50] sm:$0xff]
    %v555 = vld [vmem:[#allocation3 + $0xe58] sm:$0xff]
    %v556 = vld [vmem:[#allocation3 + $0xe60] sm:$0xff]
    %v557 = vld [vmem:[#allocation3 + $0xe68] sm:$0xff]
    %v558 = vld [vmem:[#allocation3 + $0xe70] sm:$0xff]
    %v559 = vld [vmem:[#allocation3 + $0xe78] sm:$0xff]
    %v560 = vld [vmem:[#allocation3 + $0xe80] sm:$0xff]
    %v561 = vld [vmem:[#allocation3 + $0xe88] sm:$0xff]
    %v562 = vld [vmem:[#allocation3 + $0xe90] sm:$0xff]
    %v563 = vld [vmem:[#allocation3 + $0xe98] sm:$0xff]
    %v564 = vld [vmem:[#allocation3 + $0xea0] sm:$0xff]
    %v565 = vld [vmem:[#allocation3 + $0xea8] sm:$0xff]
    %v566 = vld [vmem:[#allocation3 + $0xeb0] sm:$0xff]
    %v567 = vld [vmem:[#allocation3 + $0xeb8] sm:$0xff]
    %v568 = vld [vmem:[#allocation3 + $0xec0] sm:$0xff]
    %v569 = vld [vmem:[#allocation3 + $0xec8] sm:$0xff]
    %v570 = vld [vmem:[#allocation3 + $0xed0] sm:$0xff]
    %v571 = vld [vmem:[#allocation3 + $0xed8] sm:$0xff]
    %v572 = vld [vmem:[#allocation3 + $0xee0] sm:$0xff]
    %v573 = vld [vmem:[#allocation3 + $0xee8] sm:$0xff]
    %v574 = vld [vmem:[#allocation3 + $0xef0] sm:$0xff]
    %v575 = vld [vmem:[#allocation3 + $0xef8] sm:$0xff]
    %v576 = vld [vmem:[#allocation3 + $0xf00] sm:$0xff]
    %v577 = vld [vmem:[#allocation3 + $0xf08] sm:$0xff]
    %v578 = vld [vmem:[#allocation3 + $0xf10] sm:$0xff]
    %v579 = vld [vmem:[#allocation3 + $0xf18] sm:$0xff]
    %v580 = vld [vmem:[#allocation3 + $0xf20] sm:$0xff]
    %v581 = vld [vmem:[#allocation3 + $0xf28] sm:$0xff]
    %v582 = vld [vmem:[#allocation3 + $0xf30] sm:$0xff]
    %v583 = vld [vmem:[#allocation3 + $0xf38] sm:$0xff]
    %v584 = vld [vmem:[#allocation3 + $0xf40] sm:$0xff]
    %v585 = vld [vmem:[#allocation3 + $0xf48] sm:$0xff]
    %v586 = vld [vmem:[#allocation3 + $0xf50] sm:$0xff]
    %v587 = vld [vmem:[#allocation3 + $0xf58] sm:$0xff]
    %v588 = vld [vmem:[#allocation3 + $0xf60] sm:$0xff]
    %v589 = vld [vmem:[#allocation3 + $0xf68] sm:$0xff]
    %v590 = vld [vmem:[#allocation3 + $0xf70] sm:$0xff]
    %v591 = vld [vmem:[#allocation3 + $0xf78] sm:$0xff]
    %v592 = vld [vmem:[#allocation3 + $0xf80] sm:$0xff]
    %v593 = vld [vmem:[#allocation3 + $0xf88] sm:$0xff]
    %v594 = vld [vmem:[#allocation3 + $0xf90] sm:$0xff]
    %v595 = vld [vmem:[#allocation3 + $0xf98] sm:$0xff]
    %v596 = vld [vmem:[#allocation3 + $0xfa0] sm:$0xff]
    %v597 = vld [vmem:[#allocation3 + $0xfa8] sm:$0xff]
    %v598 = vld [vmem:[#allocation3 + $0xfb0] sm:$0xff]
    %v599 = vld [vmem:[#allocation3 + $0xfb8] sm:$0xff]
    %v600 = vld [vmem:[#allocation3 + $0xfc0] sm:$0xff]
    %v601 = vld [vmem:[#allocation3 + $0xfc8] sm:$0xff]
    %v602 = vld [vmem:[#allocation3 + $0xfd0] sm:$0xff]
    %v603 = vld [vmem:[#allocation3 + $0xfd8] sm:$0xff]
    %v604 = vld [vmem:[#allocation3 + $0xfe0] sm:$0xff]
    %v605 = vld [vmem:[#allocation3 + $0xfe8] sm:$0xff]
    %v606 = vld [vmem:[#allocation3 + $0xff0] sm:$0xff]
    %v607 = vld [vmem:[#allocation3 + $0xff8] sm:$0xff]
    %v610 = vcombine.high %v94, %v94
    %v612 = vunpack.c.l.s4 1983009808
    %v613 = vunpack.c.0.s8 %v612
    %v614 = vlaneseq
    %v615 = vshrl.u32 %v614, 7
    %v616 = vsub.s32 %v613, %v615
    %v617 = vrot.slane %v94, %v616
    %v619 = vunpack.c.l.s4 1983009808
    %v620 = vunpack.c.0.s8 %v619
    %v621 = vlaneseq
    %v622 = vshrl.u32 %v621, 7
    %v623 = vsub.s32 %v620, %v622
    %v624 = vrot.slane %v610, %v623
    %v625 = vcombine.high %v617, %v617
    %v626 = vcombine.high %v624, %v624
    %v627 = vcombine.high %v95, %v95
    %v629 = vunpack.c.l.s4 1983009808
    %v630 = vunpack.c.0.s8 %v629
    %v631 = vlaneseq
    %v632 = vshrl.u32 %v631, 7
    %v633 = vsub.s32 %v630, %v632
    %v634 = vrot.slane %v95, %v633
    %v636 = vunpack.c.l.s4 1983009808
    %v637 = vunpack.c.0.s8 %v636
    %v638 = vlaneseq
    %v639 = vshrl.u32 %v638, 7
    %v640 = vsub.s32 %v637, %v639
    %v641 = vrot.slane %v627, %v640
    %v642 = vcombine.high %v634, %v634
    %v643 = vcombine.high %v641, %v641
    %652 = vmatprep.subr.mxu0 %v157
    %653 = vmatpush1.msra.mxu0 %v156
    %654 = vmatprep.subr.mxu0 %v153
    %655 = vmatpush1.msra.mxu0 %v152
    %656 = vmatprep.subr.mxu0 %v149
    %657 = vmatpush1.msra.mxu0 %v148
    %658 = vmatprep.subr.mxu0 %v145
    %659 = vmatpush1.msra.mxu0 %v144
    %660 = vmatprep.subr.mxu0 %v141
    %661 = vmatpush1.msra.mxu0 %v140
    %662 = vmatprep.subr.mxu0 %v137
    %663 = vmatpush1.msra.mxu0 %v136
    %664 = vmatprep.subr.mxu0 %v133
    %665 = vmatpush1.msra.mxu0 %v132
    %666 = vmatprep.subr.mxu0 %v129
    %667 = vmatpush1.msra.mxu0 %v128
    %668 = vmatprep.subr.mxu0 %v125
    %669 = vmatpush1.msra.mxu0 %v124
    %670 = vmatprep.subr.mxu0 %v121
    %671 = vmatpush1.msra.mxu0 %v120
    %672 = vmatprep.subr.mxu0 %v117
    %673 = vmatpush1.msra.mxu0 %v116
    %674 = vmatprep.subr.mxu0 %v113
    %675 = vmatpush1.msra.mxu0 %v112
    %676 = vmatprep.subr.mxu0 %v109
    %677 = vmatpush1.msra.mxu0 %v108
    %678 = vmatprep.subr.mxu0 %v105
    %679 = vmatpush1.msra.mxu0 %v104
    %680 = vmatprep.subr.mxu0 %v101
    %681 = vmatpush1.msra.mxu0 %v100
    %682 = vmatprep.subr.mxu0 %v97
    %683 = vmatpush1.msra.mxu0 %v96
    %684 = vmatprep.subr.mxu0 %v221
    %685 = vmatpush2.msra.mxu0 %v220
    %686 = vmatprep.subr.mxu0 %v217
    %687 = vmatpush2.msra.mxu0 %v216
    %688 = vmatprep.subr.mxu0 %v213
    %689 = vmatpush2.msra.mxu0 %v212
    %690 = vmatprep.subr.mxu0 %v209
    %691 = vmatpush2.msra.mxu0 %v208
    %692 = vmatprep.subr.mxu0 %v205
    %693 = vmatpush2.msra.mxu0 %v204
    %694 = vmatprep.subr.mxu0 %v201
    %695 = vmatpush2.msra.mxu0 %v200
    %696 = vmatprep.subr.mxu0 %v197
    %697 = vmatpush2.msra.mxu0 %v196
    %698 = vmatprep.subr.mxu0 %v193
    %699 = vmatpush2.msra.mxu0 %v192
    %700 = vmatprep.subr.mxu0 %v189
    %701 = vmatpush2.msra.mxu0 %v188
    %702 = vmatprep.subr.mxu0 %v185
    %703 = vmatpush2.msra.mxu0 %v184
    %704 = vmatprep.subr.mxu0 %v181
    %705 = vmatpush2.msra.mxu0 %v180
    %706 = vmatprep.subr.mxu0 %v177
    %707 = vmatpush2.msra.mxu0 %v176
    %708 = vmatprep.subr.mxu0 %v173
    %709 = vmatpush2.msra.mxu0 %v172
    %710 = vmatprep.subr.mxu0 %v169
    %711 = vmatpush2.msra.mxu0 %v168
    %712 = vmatprep.subr.mxu0 %v165
    %713 = vmatpush2.msra.mxu0 %v164
    %714 = vmatprep.subr.mxu0 %v161
    %715 = vmatpush2.msra.mxu0 %v160
    %716 = vmatprep.mubr.f32.mxu0 %v625
    %717 = vmatmul.mubr.f32.gmra.mxu0 %v617
    %v718 = vpop.f32.mrf.mxu0
    %v719 = vadd.f32 0.0, %v718
    %v720 = vpop.f32.mrf.mxu0
    %v721 = vadd.f32 0.0, %v720
    %722 = vdwg.mxu0
    %723 = vmatprep.subr.mxu0 %v285
    %724 = vmatpush1.msra.mxu0 %v284
    %725 = vmatprep.subr.mxu0 %v281
    %726 = vmatpush1.msra.mxu0 %v280
    %727 = vmatprep.subr.mxu0 %v277
    %728 = vmatpush1.msra.mxu0 %v276
    %729 = vmatprep.subr.mxu0 %v273
    %730 = vmatpush1.msra.mxu0 %v272
    %731 = vmatprep.subr.mxu0 %v269
    %732 = vmatpush1.msra.mxu0 %v268
    %733 = vmatprep.subr.mxu0 %v265
    %734 = vmatpush1.msra.mxu0 %v264
    %735 = vmatprep.subr.mxu0 %v261
    %736 = vmatpush1.msra.mxu0 %v260
    %737 = vmatprep.subr.mxu0 %v257
    %738 = vmatpush1.msra.mxu0 %v256
    %739 = vmatprep.subr.mxu0 %v253
    %740 = vmatpush1.msra.mxu0 %v252
    %741 = vmatprep.subr.mxu0 %v249
    %742 = vmatpush1.msra.mxu0 %v248
    %743 = vmatprep.subr.mxu0 %v245
    %744 = vmatpush1.msra.mxu0 %v244
    %745 = vmatprep.subr.mxu0 %v241
    %746 = vmatpush1.msra.mxu0 %v240
    %747 = vmatprep.subr.mxu0 %v237
    %748 = vmatpush1.msra.mxu0 %v236
    %749 = vmatprep.subr.mxu0 %v233
    %750 = vmatpush1.msra.mxu0 %v232
    %751 = vmatprep.subr.mxu0 %v229
    %752 = vmatpush1.msra.mxu0 %v228
    %753 = vmatprep.subr.mxu0 %v225
    %754 = vmatpush1.msra.mxu0 %v224
    %755 = vmatprep.subr.mxu0 %v349
    %756 = vmatpush2.msra.mxu0 %v348
    %757 = vmatprep.subr.mxu0 %v345
    %758 = vmatpush2.msra.mxu0 %v344
    %759 = vmatprep.subr.mxu0 %v341
    %760 = vmatpush2.msra.mxu0 %v340
    %761 = vmatprep.subr.mxu0 %v337
    %762 = vmatpush2.msra.mxu0 %v336
    %763 = vmatprep.subr.mxu0 %v333
    %764 = vmatpush2.msra.mxu0 %v332
    %765 = vmatprep.subr.mxu0 %v329
    %766 = vmatpush2.msra.mxu0 %v328
    %767 = vmatprep.subr.mxu0 %v325
    %768 = vmatpush2.msra.mxu0 %v324
    %769 = vmatprep.subr.mxu0 %v321
    %770 = vmatpush2.msra.mxu0 %v320
    %771 = vmatprep.subr.mxu0 %v317
    %772 = vmatpush2.msra.mxu0 %v316
    %773 = vmatprep.subr.mxu0 %v313
    %774 = vmatpush2.msra.mxu0 %v312
    %775 = vmatprep.subr.mxu0 %v309
    %776 = vmatpush2.msra.mxu0 %v308
    %777 = vmatprep.subr.mxu0 %v305
    %778 = vmatpush2.msra.mxu0 %v304
    %779 = vmatprep.subr.mxu0 %v301
    %780 = vmatpush2.msra.mxu0 %v300
    %781 = vmatprep.subr.mxu0 %v297
    %782 = vmatpush2.msra.mxu0 %v296
    %783 = vmatprep.subr.mxu0 %v293
    %784 = vmatpush2.msra.mxu0 %v292
    %785 = vmatprep.subr.mxu0 %v289
    %786 = vmatpush2.msra.mxu0 %v288
    %787 = vmatprep.mubr.f32.mxu0 %v626
    %788 = vmatmul.mubr.f32.gmra.mxu0 %v624
    %v789 = vpop.f32.mrf.mxu0
    %v790 = vadd.f32 %v719, %v789
    %v791 = vpop.f32.mrf.mxu0
    %v792 = vadd.f32 %v721, %v791
    %793 = vdwg.mxu0
    %794 = vmatprep.subr.mxu0 %v413
    %795 = vmatpush1.msra.mxu0 %v412
    %796 = vmatprep.subr.mxu0 %v409
    %797 = vmatpush1.msra.mxu0 %v408
    %798 = vmatprep.subr.mxu0 %v405
    %799 = vmatpush1.msra.mxu0 %v404
    %800 = vmatprep.subr.mxu0 %v401
    %801 = vmatpush1.msra.mxu0 %v400
    %802 = vmatprep.subr.mxu0 %v397
    %803 = vmatpush1.msra.mxu0 %v396
    %804 = vmatprep.subr.mxu0 %v393
    %805 = vmatpush1.msra.mxu0 %v392
    %806 = vmatprep.subr.mxu0 %v389
    %807 = vmatpush1.msra.mxu0 %v388
    %808 = vmatprep.subr.mxu0 %v385
    %809 = vmatpush1.msra.mxu0 %v384
    %810 = vmatprep.subr.mxu0 %v381
    %811 = vmatpush1.msra.mxu0 %v380
    %812 = vmatprep.subr.mxu0 %v377
    %813 = vmatpush1.msra.mxu0 %v376
    %814 = vmatprep.subr.mxu0 %v373
    %815 = vmatpush1.msra.mxu0 %v372
    %816 = vmatprep.subr.mxu0 %v369
    %817 = vmatpush1.msra.mxu0 %v368
    %818 = vmatprep.subr.mxu0 %v365
    %819 = vmatpush1.msra.mxu0 %v364
    %820 = vmatprep.subr.mxu0 %v361
    %821 = vmatpush1.msra.mxu0 %v360
    %822 = vmatprep.subr.mxu0 %v357
    %823 = vmatpush1.msra.mxu0 %v356
    %824 = vmatprep.subr.mxu0 %v353
    %825 = vmatpush1.msra.mxu0 %v352
    %826 = vmatprep.subr.mxu0 %v477
    %827 = vmatpush2.msra.mxu0 %v476
    %828 = vmatprep.subr.mxu0 %v473
    %829 = vmatpush2.msra.mxu0 %v472
    %830 = vmatprep.subr.mxu0 %v469
    %831 = vmatpush2.msra.mxu0 %v468
    %832 = vmatprep.subr.mxu0 %v465
    %833 = vmatpush2.msra.mxu0 %v464
    %834 = vmatprep.subr.mxu0 %v461
    %835 = vmatpush2.msra.mxu0 %v460
    %836 = vmatprep.subr.mxu0 %v457
    %837 = vmatpush2.msra.mxu0 %v456
    %838 = vmatprep.subr.mxu0 %v453
    %839 = vmatpush2.msra.mxu0 %v452
    %840 = vmatprep.subr.mxu0 %v449
    %841 = vmatpush2.msra.mxu0 %v448
    %842 = vmatprep.subr.mxu0 %v445
    %843 = vmatpush2.msra.mxu0 %v444
    %844 = vmatprep.subr.mxu0 %v441
    %845 = vmatpush2.msra.mxu0 %v440
    %846 = vmatprep.subr.mxu0 %v437
    %847 = vmatpush2.msra.mxu0 %v436
    %848 = vmatprep.subr.mxu0 %v433
    %849 = vmatpush2.msra.mxu0 %v432
    %850 = vmatprep.subr.mxu0 %v429
    %851 = vmatpush2.msra.mxu0 %v428
    %852 = vmatprep.subr.mxu0 %v425
    %853 = vmatpush2.msra.mxu0 %v424
    %854 = vmatprep.subr.mxu0 %v421
    %855 = vmatpush2.msra.mxu0 %v420
    %856 = vmatprep.subr.mxu0 %v417
    %857 = vmatpush2.msra.mxu0 %v416
    %858 = vmatprep.mubr.f32.mxu0 %v642
    %859 = vmatmul.mubr.f32.gmra.mxu0 %v634
    %v860 = vpop.f32.mrf.mxu0
    %v861 = vadd.f32 %v790, %v860
    %v862 = vpop.f32.mrf.mxu0
    %v863 = vadd.f32 %v792, %v862
    %864 = vdwg.mxu0
    %865 = vmatprep.subr.mxu0 %v541
    %866 = vmatpush1.msra.mxu0 %v540
    %867 = vmatprep.subr.mxu0 %v537
    %868 = vmatpush1.msra.mxu0 %v536
    %869 = vmatprep.subr.mxu0 %v533
    %870 = vmatpush1.msra.mxu0 %v532
    %871 = vmatprep.subr.mxu0 %v529
    %872 = vmatpush1.msra.mxu0 %v528
    %873 = vmatprep.subr.mxu0 %v525
    %874 = vmatpush1.msra.mxu0 %v524
    %875 = vmatprep.subr.mxu0 %v521
    %876 = vmatpush1.msra.mxu0 %v520
    %877 = vmatprep.subr.mxu0 %v517
    %878 = vmatpush1.msra.mxu0 %v516
    %879 = vmatprep.subr.mxu0 %v513
    %880 = vmatpush1.msra.mxu0 %v512
    %881 = vmatprep.subr.mxu0 %v509
    %882 = vmatpush1.msra.mxu0 %v508
    %883 = vmatprep.subr.mxu0 %v505
    %884 = vmatpush1.msra.mxu0 %v504
    %885 = vmatprep.subr.mxu0 %v501
    %886 = vmatpush1.msra.mxu0 %v500
    %887 = vmatprep.subr.mxu0 %v497
    %888 = vmatpush1.msra.mxu0 %v496
    %889 = vmatprep.subr.mxu0 %v493
    %890 = vmatpush1.msra.mxu0 %v492
    %891 = vmatprep.subr.mxu0 %v489
    %892 = vmatpush1.msra.mxu0 %v488
    %893 = vmatprep.subr.mxu0 %v485
    %894 = vmatpush1.msra.mxu0 %v484
    %895 = vmatprep.subr.mxu0 %v481
    %896 = vmatpush1.msra.mxu0 %v480
    %897 = vmatprep.subr.mxu0 %v605
    %898 = vmatpush2.msra.mxu0 %v604
    %899 = vmatprep.subr.mxu0 %v601
    %900 = vmatpush2.msra.mxu0 %v600
    %901 = vmatprep.subr.mxu0 %v597
    %902 = vmatpush2.msra.mxu0 %v596
    %903 = vmatprep.subr.mxu0 %v593
    %904 = vmatpush2.msra.mxu0 %v592
    %905 = vmatprep.subr.mxu0 %v589
    %906 = vmatpush2.msra.mxu0 %v588
    %907 = vmatprep.subr.mxu0 %v585
    %908 = vmatpush2.msra.mxu0 %v584
    %909 = vmatprep.subr.mxu0 %v581
    %910 = vmatpush2.msra.mxu0 %v580
    %911 = vmatprep.subr.mxu0 %v577
    %912 = vmatpush2.msra.mxu0 %v576
    %913 = vmatprep.subr.mxu0 %v573
    %914 = vmatpush2.msra.mxu0 %v572
    %915 = vmatprep.subr.mxu0 %v569
    %916 = vmatpush2.msra.mxu0 %v568
    %917 = vmatprep.subr.mxu0 %v565
    %918 = vmatpush2.msra.mxu0 %v564
    %919 = vmatprep.subr.mxu0 %v561
    %920 = vmatpush2.msra.mxu0 %v560
    %921 = vmatprep.subr.mxu0 %v557
    %922 = vmatpush2.msra.mxu0 %v556
    %923 = vmatprep.subr.mxu0 %v553
    %924 = vmatpush2.msra.mxu0 %v552
    %925 = vmatprep.subr.mxu0 %v549
    %926 = vmatpush2.msra.mxu0 %v548
    %927 = vmatprep.subr.mxu0 %v545
    %928 = vmatpush2.msra.mxu0 %v544
    %929 = vmatprep.mubr.f32.mxu0 %v643
    %930 = vmatmul.mubr.f32.gmra.mxu0 %v641
    %v931 = vpop.f32.mrf.mxu0
    %v932 = vadd.f32 %v861, %v931
    %v933 = vpop.f32.mrf.mxu0
    %v934 = vadd.f32 %v863, %v933
    %935 = vdwg.mxu0
    %936 = vmatprep.subr.mxu0 %v159
    %937 = vmatpush1.msra.mxu0 %v158
    %938 = vmatprep.subr.mxu0 %v155
    %939 = vmatpush1.msra.mxu0 %v154
    %940 = vmatprep.subr.mxu0 %v151
    %941 = vmatpush1.msra.mxu0 %v150
    %942 = vmatprep.subr.mxu0 %v147
    %943 = vmatpush1.msra.mxu0 %v146
    %944 = vmatprep.subr.mxu0 %v143
    %945 = vmatpush1.msra.mxu0 %v142
    %946 = vmatprep.subr.mxu0 %v139
    %947 = vmatpush1.msra.mxu0 %v138
    %948 = vmatprep.subr.mxu0 %v135
    %949 = vmatpush1.msra.mxu0 %v134
    %950 = vmatprep.subr.mxu0 %v131
    %951 = vmatpush1.msra.mxu0 %v130
    %952 = vmatprep.subr.mxu0 %v127
    %953 = vmatpush1.msra.mxu0 %v126
    %954 = vmatprep.subr.mxu0 %v123
    %955 = vmatpush1.msra.mxu0 %v122
    %956 = vmatprep.subr.mxu0 %v119
    %957 = vmatpush1.msra.mxu0 %v118
    %958 = vmatprep.subr.mxu0 %v115
    %959 = vmatpush1.msra.mxu0 %v114
    %960 = vmatprep.subr.mxu0 %v111
    %961 = vmatpush1.msra.mxu0 %v110
    %962 = vmatprep.subr.mxu0 %v107
    %963 = vmatpush1.msra.mxu0 %v106
    %964 = vmatprep.subr.mxu0 %v103
    %965 = vmatpush1.msra.mxu0 %v102
    %966 = vmatprep.subr.mxu0 %v99
    %967 = vmatpush1.msra.mxu0 %v98
    %968 = vmatprep.subr.mxu0 %v223
    %969 = vmatpush2.msra.mxu0 %v222
    %970 = vmatprep.subr.mxu0 %v219
    %971 = vmatpush2.msra.mxu0 %v218
    %972 = vmatprep.subr.mxu0 %v215
    %973 = vmatpush2.msra.mxu0 %v214
    %974 = vmatprep.subr.mxu0 %v211
    %975 = vmatpush2.msra.mxu0 %v210
    %976 = vmatprep.subr.mxu0 %v207
    %977 = vmatpush2.msra.mxu0 %v206
    %978 = vmatprep.subr.mxu0 %v203
    %979 = vmatpush2.msra.mxu0 %v202
    %980 = vmatprep.subr.mxu0 %v199
    %981 = vmatpush2.msra.mxu0 %v198
    %982 = vmatprep.subr.mxu0 %v195
    %983 = vmatpush2.msra.mxu0 %v194
    %984 = vmatprep.subr.mxu0 %v191
    %985 = vmatpush2.msra.mxu0 %v190
    %986 = vmatprep.subr.mxu0 %v187
    %987 = vmatpush2.msra.mxu0 %v186
    %988 = vmatprep.subr.mxu0 %v183
    %989 = vmatpush2.msra.mxu0 %v182
    %990 = vmatprep.subr.mxu0 %v179
    %991 = vmatpush2.msra.mxu0 %v178
    %992 = vmatprep.subr.mxu0 %v175
    %993 = vmatpush2.msra.mxu0 %v174
    %994 = vmatprep.subr.mxu0 %v171
    %995 = vmatpush2.msra.mxu0 %v170
    %996 = vmatprep.subr.mxu0 %v167
    %997 = vmatpush2.msra.mxu0 %v166
    %998 = vmatprep.subr.mxu0 %v163
    %999 = vmatpush2.msra.mxu0 %v162
    %1000 = vmatprep.mubr.f32.mxu0 %v625
    %1001 = vmatmul.mubr.f32.gmra.mxu0 %v617
    %v1002 = vpop.f32.mrf.mxu0
    %v1003 = vadd.f32 0.0, %v1002
    %v1004 = vpop.f32.mrf.mxu0
    %v1005 = vadd.f32 0.0, %v1004
    %1006 = vdwg.mxu0
    %1007 = vmatprep.subr.mxu0 %v287
    %1008 = vmatpush1.msra.mxu0 %v286
    %1009 = vmatprep.subr.mxu0 %v283
    %1010 = vmatpush1.msra.mxu0 %v282
    %1011 = vmatprep.subr.mxu0 %v279
    %1012 = vmatpush1.msra.mxu0 %v278
    %1013 = vmatprep.subr.mxu0 %v275
    %1014 = vmatpush1.msra.mxu0 %v274
    %1015 = vmatprep.subr.mxu0 %v271
    %1016 = vmatpush1.msra.mxu0 %v270
    %1017 = vmatprep.subr.mxu0 %v267
    %1018 = vmatpush1.msra.mxu0 %v266
    %1019 = vmatprep.subr.mxu0 %v263
    %1020 = vmatpush1.msra.mxu0 %v262
    %1021 = vmatprep.subr.mxu0 %v259
    %1022 = vmatpush1.msra.mxu0 %v258
    %1023 = vmatprep.subr.mxu0 %v255
    %1024 = vmatpush1.msra.mxu0 %v254
    %1025 = vmatprep.subr.mxu0 %v251
    %1026 = vmatpush1.msra.mxu0 %v250
    %1027 = vmatprep.subr.mxu0 %v247
    %1028 = vmatpush1.msra.mxu0 %v246
    %1029 = vmatprep.subr.mxu0 %v243
    %1030 = vmatpush1.msra.mxu0 %v242
    %1031 = vmatprep.subr.mxu0 %v239
    %1032 = vmatpush1.msra.mxu0 %v238
    %1033 = vmatprep.subr.mxu0 %v235
    %1034 = vmatpush1.msra.mxu0 %v234
    %1035 = vmatprep.subr.mxu0 %v231
    %1036 = vmatpush1.msra.mxu0 %v230
    %1037 = vmatprep.subr.mxu0 %v227
    %1038 = vmatpush1.msra.mxu0 %v226
    %1039 = vmatprep.subr.mxu0 %v351
    %1040 = vmatpush2.msra.mxu0 %v350
    %1041 = vmatprep.subr.mxu0 %v347
    %1042 = vmatpush2.msra.mxu0 %v346
    %1043 = vmatprep.subr.mxu0 %v343
    %1044 = vmatpush2.msra.mxu0 %v342
    %1045 = vmatprep.subr.mxu0 %v339
    %1046 = vmatpush2.msra.mxu0 %v338
    %1047 = vmatprep.subr.mxu0 %v335
    %1048 = vmatpush2.msra.mxu0 %v334
    %1049 = vmatprep.subr.mxu0 %v331
    %1050 = vmatpush2.msra.mxu0 %v330
    %1051 = vmatprep.subr.mxu0 %v327
    %1052 = vmatpush2.msra.mxu0 %v326
    %1053 = vmatprep.subr.mxu0 %v323
    %1054 = vmatpush2.msra.mxu0 %v322
    %1055 = vmatprep.subr.mxu0 %v319
    %1056 = vmatpush2.msra.mxu0 %v318
    %1057 = vmatprep.subr.mxu0 %v315
    %1058 = vmatpush2.msra.mxu0 %v314
    %1059 = vmatprep.subr.mxu0 %v311
    %1060 = vmatpush2.msra.mxu0 %v310
    %1061 = vmatprep.subr.mxu0 %v307
    %1062 = vmatpush2.msra.mxu0 %v306
    %1063 = vmatprep.subr.mxu0 %v303
    %1064 = vmatpush2.msra.mxu0 %v302
    %1065 = vmatprep.subr.mxu0 %v299
    %1066 = vmatpush2.msra.mxu0 %v298
    %1067 = vmatprep.subr.mxu0 %v295
    %1068 = vmatpush2.msra.mxu0 %v294
    %1069 = vmatprep.subr.mxu0 %v291
    %1070 = vmatpush2.msra.mxu0 %v290
    %1071 = vmatprep.mubr.f32.mxu0 %v626
    %1072 = vmatmul.mubr.f32.gmra.mxu0 %v624
    %v1073 = vpop.f32.mrf.mxu0
    %v1074 = vadd.f32 %v1003, %v1073
    %v1075 = vpop.f32.mrf.mxu0
    %v1076 = vadd.f32 %v1005, %v1075
    %1077 = vdwg.mxu0
    %1078 = vmatprep.subr.mxu0 %v415
    %1079 = vmatpush1.msra.mxu0 %v414
    %1080 = vmatprep.subr.mxu0 %v411
    %1081 = vmatpush1.msra.mxu0 %v410
    %1082 = vmatprep.subr.mxu0 %v407
    %1083 = vmatpush1.msra.mxu0 %v406
    %1084 = vmatprep.subr.mxu0 %v403
    %1085 = vmatpush1.msra.mxu0 %v402
    %1086 = vmatprep.subr.mxu0 %v399
    %1087 = vmatpush1.msra.mxu0 %v398
    %1088 = vmatprep.subr.mxu0 %v395
    %1089 = vmatpush1.msra.mxu0 %v394
    %1090 = vmatprep.subr.mxu0 %v391
    %1091 = vmatpush1.msra.mxu0 %v390
    %1092 = vmatprep.subr.mxu0 %v387
    %1093 = vmatpush1.msra.mxu0 %v386
    %1094 = vmatprep.subr.mxu0 %v383
    %1095 = vmatpush1.msra.mxu0 %v382
    %1096 = vmatprep.subr.mxu0 %v379
    %1097 = vmatpush1.msra.mxu0 %v378
    %1098 = vmatprep.subr.mxu0 %v375
    %1099 = vmatpush1.msra.mxu0 %v374
    %1100 = vmatprep.subr.mxu0 %v371
    %1101 = vmatpush1.msra.mxu0 %v370
    %1102 = vmatprep.subr.mxu0 %v367
    %1103 = vmatpush1.msra.mxu0 %v366
    %1104 = vmatprep.subr.mxu0 %v363
    %1105 = vmatpush1.msra.mxu0 %v362
    %1106 = vmatprep.subr.mxu0 %v359
    %1107 = vmatpush1.msra.mxu0 %v358
    %1108 = vmatprep.subr.mxu0 %v355
    %1109 = vmatpush1.msra.mxu0 %v354
    %1110 = vmatprep.subr.mxu0 %v479
    %1111 = vmatpush2.msra.mxu0 %v478
    %1112 = vmatprep.subr.mxu0 %v475
    %1113 = vmatpush2.msra.mxu0 %v474
    %1114 = vmatprep.subr.mxu0 %v471
    %1115 = vmatpush2.msra.mxu0 %v470
    %1116 = vmatprep.subr.mxu0 %v467
    %1117 = vmatpush2.msra.mxu0 %v466
    %1118 = vmatprep.subr.mxu0 %v463
    %1119 = vmatpush2.msra.mxu0 %v462
    %1120 = vmatprep.subr.mxu0 %v459
    %1121 = vmatpush2.msra.mxu0 %v458
    %1122 = vmatprep.subr.mxu0 %v455
    %1123 = vmatpush2.msra.mxu0 %v454
    %1124 = vmatprep.subr.mxu0 %v451
    %1125 = vmatpush2.msra.mxu0 %v450
    %1126 = vmatprep.subr.mxu0 %v447
    %1127 = vmatpush2.msra.mxu0 %v446
    %1128 = vmatprep.subr.mxu0 %v443
    %1129 = vmatpush2.msra.mxu0 %v442
    %1130 = vmatprep.subr.mxu0 %v439
    %1131 = vmatpush2.msra.mxu0 %v438
    %1132 = vmatprep.subr.mxu0 %v435
    %1133 = vmatpush2.msra.mxu0 %v434
    %1134 = vmatprep.subr.mxu0 %v431
    %1135 = vmatpush2.msra.mxu0 %v430
    %1136 = vmatprep.subr.mxu0 %v427
    %1137 = vmatpush2.msra.mxu0 %v426
    %1138 = vmatprep.subr.mxu0 %v423
    %1139 = vmatpush2.msra.mxu0 %v422
    %1140 = vmatprep.subr.mxu0 %v419
    %1141 = vmatpush2.msra.mxu0 %v418
    %1142 = vmatprep.mubr.f32.mxu0 %v642
    %1143 = vmatmul.mubr.f32.gmra.mxu0 %v634
    %v1144 = vpop.f32.mrf.mxu0
    %v1145 = vadd.f32 %v1074, %v1144
    %v1146 = vpop.f32.mrf.mxu0
    %v1147 = vadd.f32 %v1076, %v1146
    %1148 = vdwg.mxu0
    %1149 = vmatprep.subr.mxu0 %v543
    %1150 = vmatpush1.msra.mxu0 %v542
    %1151 = vmatprep.subr.mxu0 %v539
    %1152 = vmatpush1.msra.mxu0 %v538
    %1153 = vmatprep.subr.mxu0 %v535
    %1154 = vmatpush1.msra.mxu0 %v534
    %1155 = vmatprep.subr.mxu0 %v531
    %1156 = vmatpush1.msra.mxu0 %v530
    %1157 = vmatprep.subr.mxu0 %v527
    %1158 = vmatpush1.msra.mxu0 %v526
    %1159 = vmatprep.subr.mxu0 %v523
    %1160 = vmatpush1.msra.mxu0 %v522
    %1161 = vmatprep.subr.mxu0 %v519
    %1162 = vmatpush1.msra.mxu0 %v518
    %1163 = vmatprep.subr.mxu0 %v515
    %1164 = vmatpush1.msra.mxu0 %v514
    %1165 = vmatprep.subr.mxu0 %v511
    %1166 = vmatpush1.msra.mxu0 %v510
    %1167 = vmatprep.subr.mxu0 %v507
    %1168 = vmatpush1.msra.mxu0 %v506
    %1169 = vmatprep.subr.mxu0 %v503
    %1170 = vmatpush1.msra.mxu0 %v502
    %1171 = vmatprep.subr.mxu0 %v499
    %1172 = vmatpush1.msra.mxu0 %v498
    %1173 = vmatprep.subr.mxu0 %v495
    %1174 = vmatpush1.msra.mxu0 %v494
    %1175 = vmatprep.subr.mxu0 %v491
    %1176 = vmatpush1.msra.mxu0 %v490
    %1177 = vmatprep.subr.mxu0 %v487
    %1178 = vmatpush1.msra.mxu0 %v486
    %1179 = vmatprep.subr.mxu0 %v483
    %1180 = vmatpush1.msra.mxu0 %v482
    %1181 = vmatprep.subr.mxu0 %v607
    %1182 = vmatpush2.msra.mxu0 %v606
    %1183 = vmatprep.subr.mxu0 %v603
    %1184 = vmatpush2.msra.mxu0 %v602
    %1185 = vmatprep.subr.mxu0 %v599
    %1186 = vmatpush2.msra.mxu0 %v598
    %1187 = vmatprep.subr.mxu0 %v595
    %1188 = vmatpush2.msra.mxu0 %v594
    %1189 = vmatprep.subr.mxu0 %v591
    %1190 = vmatpush2.msra.mxu0 %v590
    %1191 = vmatprep.subr.mxu0 %v587
    %1192 = vmatpush2.msra.mxu0 %v586
    %1193 = vmatprep.subr.mxu0 %v583
    %1194 = vmatpush2.msra.mxu0 %v582
    %1195 = vmatprep.subr.mxu0 %v579
    %1196 = vmatpush2.msra.mxu0 %v578
    %1197 = vmatprep.subr.mxu0 %v575
    %1198 = vmatpush2.msra.mxu0 %v574
    %1199 = vmatprep.subr.mxu0 %v571
    %1200 = vmatpush2.msra.mxu0 %v570
    %1201 = vmatprep.subr.mxu0 %v567
    %1202 = vmatpush2.msra.mxu0 %v566
    %1203 = vmatprep.subr.mxu0 %v563
    %1204 = vmatpush2.msra.mxu0 %v562
    %1205 = vmatprep.subr.mxu0 %v559
    %1206 = vmatpush2.msra.mxu0 %v558
    %1207 = vmatprep.subr.mxu0 %v555
    %1208 = vmatpush2.msra.mxu0 %v554
    %1209 = vmatprep.subr.mxu0 %v551
    %1210 = vmatpush2.msra.mxu0 %v550
    %1211 = vmatprep.subr.mxu0 %v547
    %1212 = vmatpush2.msra.mxu0 %v546
    %1213 = vmatprep.mubr.f32.mxu0 %v643
    %1214 = vmatmul.mubr.f32.gmra.mxu0 %v641
    %v1215 = vpop.f32.mrf.mxu0
    %v1216 = vadd.f32 %v1145, %v1215
    %v1217 = vpop.f32.mrf.mxu0
    %v1218 = vadd.f32 %v1147, %v1217
    %1219 = vdwg.mxu0
    %v1224 = vcombine.low %v932, %v934
    %v1225 = vcombine.low %v1216, %v1218
    %v1227 = vunpack.c.l.s4 1983009808
    %v1228 = vunpack.c.0.s8 %v1227
    %v1229 = vlaneseq
    %v1230 = vshrl.u32 %v1229, 7
    %v1231 = vsub.s32 %v1228, %v1230
    %v1232 = vrot.slane %v1224, %v1231
    %v1234 = vunpack.c.l.s4 1983009808
    %v1235 = vunpack.c.0.s8 %v1234
    %v1236 = vlaneseq
    %v1237 = vshrl.u32 %v1236, 7
    %v1238 = vsub.s32 %v1235, %v1237
    %v1239 = vrot.slane %v1225, %v1238
    %v1240 = vcombine.low %v1232, %v1239
    %v1242 = vadd.f32 %v93, %v1240
    %1243 = vst [vmem:[#allocation2] sm:$0xff] %v1242
    // Predicated region
    $region54: #{forward.3} parent=1 // pred_check
      %p1244 = pneg %p88
    $region55: #{forward.3} parent=1 // pred_check_branch
      %1246 = sbr.rel (%p1244) target = $region57
    $region56: #{forward.3} parent=1 // pred_region
      %v1247 = vld [vmem:[#allocation2] sm:$0xff]
      %v1248 = vld [vmem:[#allocation5] sm:$0xf]
      %v1250 = vlaneseq
      %v1251 = vshrl.u32 %v1250, 7
      %v1252 = vsub.s32 0, %v1251
      %v1253 = vrot.slane %v1248, %v1252
      %v1254 = vlaneseq
      %v1255 = vshrl.u32 %v1254, 7
      %v1256 = vsub.s32 1, %v1255
      %v1257 = vrot.slane %v1248, %v1256
      %v1258 = vlaneseq
      %v1259 = vshrl.u32 %v1258, 7
      %v1260 = vsub.s32 2, %v1259
      %v1261 = vrot.slane %v1248, %v1260
      %v1262 = vlaneseq
      %v1263 = vshrl.u32 %v1262, 7
      %v1264 = vsub.s32 3, %v1263
      %v1265 = vrot.slane %v1248, %v1264
      %v1266 = vcombine.low %v1253, %v1257
      %v1267 = vcombine.low %v1261, %v1265
      %v1269 = vunpack.c.l.s4 1983009808
      %v1270 = vunpack.c.0.s8 %v1269
      %v1271 = vlaneseq
      %v1272 = vshrl.u32 %v1271, 7
      %v1273 = vsub.s32 %v1270, %v1272
      %v1274 = vrot.slane %v1266, %v1273
      %v1276 = vunpack.c.l.s4 1983009808
      %v1277 = vunpack.c.0.s8 %v1276
      %v1278 = vlaneseq
      %v1279 = vshrl.u32 %v1278, 7
      %v1280 = vsub.s32 %v1277, %v1279
      %v1281 = vrot.slane %v1267, %v1280
      %v1282 = vcombine.low %v1274, %v1281
      %v1284 = vadd.f32 %v1247, %v1282
      %v1285 = vmax.f32 %v1284, 0.0
      %v1286 = vld [vmem:[#allocation7] sm:$0xff]
      %v1287 = vld [vmem:[#allocation7 + $0x8] sm:$0xff]
      %v1288 = vld [vmem:[#allocation7 + $0x10] sm:$0xff]
      %v1289 = vld [vmem:[#allocation7 + $0x18] sm:$0xff]
      %v1290 = vld [vmem:[#allocation7 + $0x20] sm:$0xff]
      %v1291 = vld [vmem:[#allocation7 + $0x28] sm:$0xff]
      %v1292 = vld [vmem:[#allocation7 + $0x30] sm:$0xff]
      %v1293 = vld [vmem:[#allocation7 + $0x38] sm:$0xff]
      %v1294 = vld [vmem:[#allocation7 + $0x40] sm:$0xff]
      %v1295 = vld [vmem:[#allocation7 + $0x48] sm:$0xff]
      %v1296 = vld [vmem:[#allocation7 + $0x50] sm:$0xff]
      %v1297 = vld [vmem:[#allocation7 + $0x58] sm:$0xff]
      %v1298 = vld [vmem:[#allocation7 + $0x60] sm:$0xff]
      %v1299 = vld [vmem:[#allocation7 + $0x68] sm:$0xff]
      %v1300 = vld [vmem:[#allocation7 + $0x70] sm:$0xff]
      %v1301 = vld [vmem:[#allocation7 + $0x78] sm:$0xff]
      %v1302 = vld [vmem:[#allocation7 + $0x80] sm:$0xff]
      %v1303 = vld [vmem:[#allocation7 + $0x88] sm:$0xff]
      %v1304 = vld [vmem:[#allocation7 + $0x90] sm:$0xff]
      %v1305 = vld [vmem:[#allocation7 + $0x98] sm:$0xff]
      %v1306 = vld [vmem:[#allocation7 + $0xa0] sm:$0xff]
      %v1307 = vld [vmem:[#allocation7 + $0xa8] sm:$0xff]
      %v1308 = vld [vmem:[#allocation7 + $0xb0] sm:$0xff]
      %v1309 = vld [vmem:[#allocation7 + $0xb8] sm:$0xff]
      %v1310 = vld [vmem:[#allocation7 + $0xc0] sm:$0xff]
      %v1311 = vld [vmem:[#allocation7 + $0xc8] sm:$0xff]
      %v1312 = vld [vmem:[#allocation7 + $0xd0] sm:$0xff]
      %v1313 = vld [vmem:[#allocation7 + $0xd8] sm:$0xff]
      %v1314 = vld [vmem:[#allocation7 + $0xe0] sm:$0xff]
      %v1315 = vld [vmem:[#allocation7 + $0xe8] sm:$0xff]
      %v1316 = vld [vmem:[#allocation7 + $0xf0] sm:$0xff]
      %v1317 = vld [vmem:[#allocation7 + $0xf8] sm:$0xff]
      %v1318 = vld [vmem:[#allocation7 + $0x100] sm:$0xff]
      %v1319 = vld [vmem:[#allocation7 + $0x108] sm:$0xff]
      %v1320 = vld [vmem:[#allocation7 + $0x110] sm:$0xff]
      %v1321 = vld [vmem:[#allocation7 + $0x118] sm:$0xff]
      %v1322 = vld [vmem:[#allocation7 + $0x120] sm:$0xff]
      %v1323 = vld [vmem:[#allocation7 + $0x128] sm:$0xff]
      %v1324 = vld [vmem:[#allocation7 + $0x130] sm:$0xff]
      %v1325 = vld [vmem:[#allocation7 + $0x138] sm:$0xff]
      %v1326 = vld [vmem:[#allocation7 + $0x140] sm:$0xff]
      %v1327 = vld [vmem:[#allocation7 + $0x148] sm:$0xff]
      %v1328 = vld [vmem:[#allocation7 + $0x150] sm:$0xff]
      %v1329 = vld [vmem:[#allocation7 + $0x158] sm:$0xff]
      %v1330 = vld [vmem:[#allocation7 + $0x160] sm:$0xff]
      %v1331 = vld [vmem:[#allocation7 + $0x168] sm:$0xff]
      %v1332 = vld [vmem:[#allocation7 + $0x170] sm:$0xff]
      %v1333 = vld [vmem:[#allocation7 + $0x178] sm:$0xff]
      %v1334 = vld [vmem:[#allocation7 + $0x180] sm:$0xff]
      %v1335 = vld [vmem:[#allocation7 + $0x188] sm:$0xff]
      %v1336 = vld [vmem:[#allocation7 + $0x190] sm:$0xff]
      %v1337 = vld [vmem:[#allocation7 + $0x198] sm:$0xff]
      %v1338 = vld [vmem:[#allocation7 + $0x1a0] sm:$0xff]
      %v1339 = vld [vmem:[#allocation7 + $0x1a8] sm:$0xff]
      %v1340 = vld [vmem:[#allocation7 + $0x1b0] sm:$0xff]
      %v1341 = vld [vmem:[#allocation7 + $0x1b8] sm:$0xff]
      %v1342 = vld [vmem:[#allocation7 + $0x1c0] sm:$0xff]
      %v1343 = vld [vmem:[#allocation7 + $0x1c8] sm:$0xff]
      %v1344 = vld [vmem:[#allocation7 + $0x1d0] sm:$0xff]
      %v1345 = vld [vmem:[#allocation7 + $0x1d8] sm:$0xff]
      %v1346 = vld [vmem:[#allocation7 + $0x1e0] sm:$0xff]
      %v1347 = vld [vmem:[#allocation7 + $0x1e8] sm:$0xff]
      %v1348 = vld [vmem:[#allocation7 + $0x1f0] sm:$0xff]
      %v1349 = vld [vmem:[#allocation7 + $0x1f8] sm:$0xff]
      %v1350 = vld [vmem:[#allocation7 + $0x200] sm:$0xff]
      %v1351 = vld [vmem:[#allocation7 + $0x208] sm:$0xff]
      %v1352 = vld [vmem:[#allocation7 + $0x210] sm:$0xff]
      %v1353 = vld [vmem:[#allocation7 + $0x218] sm:$0xff]
      %v1354 = vld [vmem:[#allocation7 + $0x220] sm:$0xff]
      %v1355 = vld [vmem:[#allocation7 + $0x228] sm:$0xff]
      %v1356 = vld [vmem:[#allocation7 + $0x230] sm:$0xff]
      %v1357 = vld [vmem:[#allocation7 + $0x238] sm:$0xff]
      %v1358 = vld [vmem:[#allocation7 + $0x240] sm:$0xff]
      %v1359 = vld [vmem:[#allocation7 + $0x248] sm:$0xff]
      %v1360 = vld [vmem:[#allocation7 + $0x250] sm:$0xff]
      %v1361 = vld [vmem:[#allocation7 + $0x258] sm:$0xff]
      %v1362 = vld [vmem:[#allocation7 + $0x260] sm:$0xff]
      %v1363 = vld [vmem:[#allocation7 + $0x268] sm:$0xff]
      %v1364 = vld [vmem:[#allocation7 + $0x270] sm:$0xff]
      %v1365 = vld [vmem:[#allocation7 + $0x278] sm:$0xff]
      %v1366 = vld [vmem:[#allocation7 + $0x280] sm:$0xff]
      %v1367 = vld [vmem:[#allocation7 + $0x288] sm:$0xff]
      %v1368 = vld [vmem:[#allocation7 + $0x290] sm:$0xff]
      %v1369 = vld [vmem:[#allocation7 + $0x298] sm:$0xff]
      %v1370 = vld [vmem:[#allocation7 + $0x2a0] sm:$0xff]
      %v1371 = vld [vmem:[#allocation7 + $0x2a8] sm:$0xff]
      %v1372 = vld [vmem:[#allocation7 + $0x2b0] sm:$0xff]
      %v1373 = vld [vmem:[#allocation7 + $0x2b8] sm:$0xff]
      %v1374 = vld [vmem:[#allocation7 + $0x2c0] sm:$0xff]
      %v1375 = vld [vmem:[#allocation7 + $0x2c8] sm:$0xff]
      %v1376 = vld [vmem:[#allocation7 + $0x2d0] sm:$0xff]
      %v1377 = vld [vmem:[#allocation7 + $0x2d8] sm:$0xff]
      %v1378 = vld [vmem:[#allocation7 + $0x2e0] sm:$0xff]
      %v1379 = vld [vmem:[#allocation7 + $0x2e8] sm:$0xff]
      %v1380 = vld [vmem:[#allocation7 + $0x2f0] sm:$0xff]
      %v1381 = vld [vmem:[#allocation7 + $0x2f8] sm:$0xff]
      %v1382 = vld [vmem:[#allocation7 + $0x300] sm:$0xff]
      %v1383 = vld [vmem:[#allocation7 + $0x308] sm:$0xff]
      %v1384 = vld [vmem:[#allocation7 + $0x310] sm:$0xff]
      %v1385 = vld [vmem:[#allocation7 + $0x318] sm:$0xff]
      %v1386 = vld [vmem:[#allocation7 + $0x320] sm:$0xff]
      %v1387 = vld [vmem:[#allocation7 + $0x328] sm:$0xff]
      %v1388 = vld [vmem:[#allocation7 + $0x330] sm:$0xff]
      %v1389 = vld [vmem:[#allocation7 + $0x338] sm:$0xff]
      %v1390 = vld [vmem:[#allocation7 + $0x340] sm:$0xff]
      %v1391 = vld [vmem:[#allocation7 + $0x348] sm:$0xff]
      %v1392 = vld [vmem:[#allocation7 + $0x350] sm:$0xff]
      %v1393 = vld [vmem:[#allocation7 + $0x358] sm:$0xff]
      %v1394 = vld [vmem:[#allocation7 + $0x360] sm:$0xff]
      %v1395 = vld [vmem:[#allocation7 + $0x368] sm:$0xff]
      %v1396 = vld [vmem:[#allocation7 + $0x370] sm:$0xff]
      %v1397 = vld [vmem:[#allocation7 + $0x378] sm:$0xff]
      %v1398 = vld [vmem:[#allocation7 + $0x380] sm:$0xff]
      %v1399 = vld [vmem:[#allocation7 + $0x388] sm:$0xff]
      %v1400 = vld [vmem:[#allocation7 + $0x390] sm:$0xff]
      %v1401 = vld [vmem:[#allocation7 + $0x398] sm:$0xff]
      %v1402 = vld [vmem:[#allocation7 + $0x3a0] sm:$0xff]
      %v1403 = vld [vmem:[#allocation7 + $0x3a8] sm:$0xff]
      %v1404 = vld [vmem:[#allocation7 + $0x3b0] sm:$0xff]
      %v1405 = vld [vmem:[#allocation7 + $0x3b8] sm:$0xff]
      %v1406 = vld [vmem:[#allocation7 + $0x3c0] sm:$0xff]
      %v1407 = vld [vmem:[#allocation7 + $0x3c8] sm:$0xff]
      %v1408 = vld [vmem:[#allocation7 + $0x3d0] sm:$0xff]
      %v1409 = vld [vmem:[#allocation7 + $0x3d8] sm:$0xff]
      %v1410 = vld [vmem:[#allocation7 + $0x3e0] sm:$0xff]
      %v1411 = vld [vmem:[#allocation7 + $0x3e8] sm:$0xff]
      %v1412 = vld [vmem:[#allocation7 + $0x3f0] sm:$0xff]
      %v1413 = vld [vmem:[#allocation7 + $0x3f8] sm:$0xff]
      %v1414 = vld [vmem:[#allocation8] sm:$0x3]
      %v1416 = vlaneseq
      %v1417 = vshrl.u32 %v1416, 7
      %v1418 = vsub.s32 0, %v1417
      %v1419 = vrot.slane %v1414, %v1418
      %v1420 = vlaneseq
      %v1421 = vshrl.u32 %v1420, 7
      %v1422 = vsub.s32 1, %v1421
      %v1423 = vrot.slane %v1414, %v1422
      %v1427 = vcombine.high %v1285, %v1285
      %v1429 = vunpack.c.l.s4 1983009808
      %v1430 = vunpack.c.0.s8 %v1429
      %v1431 = vlaneseq
      %v1432 = vshrl.u32 %v1431, 7
      %v1433 = vsub.s32 %v1430, %v1432
      %v1434 = vrot.slane %v1285, %v1433
      %v1436 = vunpack.c.l.s4 1983009808
      %v1437 = vunpack.c.0.s8 %v1436
      %v1438 = vlaneseq
      %v1439 = vshrl.u32 %v1438, 7
      %v1440 = vsub.s32 %v1437, %v1439
      %v1441 = vrot.slane %v1427, %v1440
      %v1442 = vcombine.high %v1434, %v1434
      %v1443 = vcombine.high %v1441, %v1441
      %1448 = vmatprep.subr.mxu0 %v1317
      %1449 = vmatpush1.msra.mxu0 %v1316
      %1450 = vmatprep.subr.mxu0 %v1315
      %1451 = vmatpush1.msra.mxu0 %v1314
      %1452 = vmatprep.subr.mxu0 %v1313
      %1453 = vmatpush1.msra.mxu0 %v1312
      %1454 = vmatprep.subr.mxu0 %v1311
      %1455 = vmatpush1.msra.mxu0 %v1310
      %1456 = vmatprep.subr.mxu0 %v1309
      %1457 = vmatpush1.msra.mxu0 %v1308
      %1458 = vmatprep.subr.mxu0 %v1307
      %1459 = vmatpush1.msra.mxu0 %v1306
      %1460 = vmatprep.subr.mxu0 %v1305
      %1461 = vmatpush1.msra.mxu0 %v1304
      %1462 = vmatprep.subr.mxu0 %v1303
      %1463 = vmatpush1.msra.mxu0 %v1302
      %1464 = vmatprep.subr.mxu0 %v1301
      %1465 = vmatpush1.msra.mxu0 %v1300
      %1466 = vmatprep.subr.mxu0 %v1299
      %1467 = vmatpush1.msra.mxu0 %v1298
      %1468 = vmatprep.subr.mxu0 %v1297
      %1469 = vmatpush1.msra.mxu0 %v1296
      %1470 = vmatprep.subr.mxu0 %v1295
      %1471 = vmatpush1.msra.mxu0 %v1294
      %1472 = vmatprep.subr.mxu0 %v1293
      %1473 = vmatpush1.msra.mxu0 %v1292
      %1474 = vmatprep.subr.mxu0 %v1291
      %1475 = vmatpush1.msra.mxu0 %v1290
      %1476 = vmatprep.subr.mxu0 %v1289
      %1477 = vmatpush1.msra.mxu0 %v1288
      %1478 = vmatprep.subr.mxu0 %v1287
      %1479 = vmatpush1.msra.mxu0 %v1286
      %1480 = vmatprep.subr.mxu0 %v1349
      %1481 = vmatpush2.msra.mxu0 %v1348
      %1482 = vmatprep.subr.mxu0 %v1347
      %1483 = vmatpush2.msra.mxu0 %v1346
      %1484 = vmatprep.subr.mxu0 %v1345
      %1485 = vmatpush2.msra.mxu0 %v1344
      %1486 = vmatprep.subr.mxu0 %v1343
      %1487 = vmatpush2.msra.mxu0 %v1342
      %1488 = vmatprep.subr.mxu0 %v1341
      %1489 = vmatpush2.msra.mxu0 %v1340
      %1490 = vmatprep.subr.mxu0 %v1339
      %1491 = vmatpush2.msra.mxu0 %v1338
      %1492 = vmatprep.subr.mxu0 %v1337
      %1493 = vmatpush2.msra.mxu0 %v1336
      %1494 = vmatprep.subr.mxu0 %v1335
      %1495 = vmatpush2.msra.mxu0 %v1334
      %1496 = vmatprep.subr.mxu0 %v1333
      %1497 = vmatpush2.msra.mxu0 %v1332
      %1498 = vmatprep.subr.mxu0 %v1331
      %1499 = vmatpush2.msra.mxu0 %v1330
      %1500 = vmatprep.subr.mxu0 %v1329
      %1501 = vmatpush2.msra.mxu0 %v1328
      %1502 = vmatprep.subr.mxu0 %v1327
      %1503 = vmatpush2.msra.mxu0 %v1326
      %1504 = vmatprep.subr.mxu0 %v1325
      %1505 = vmatpush2.msra.mxu0 %v1324
      %1506 = vmatprep.subr.mxu0 %v1323
      %1507 = vmatpush2.msra.mxu0 %v1322
      %1508 = vmatprep.subr.mxu0 %v1321
      %1509 = vmatpush2.msra.mxu0 %v1320
      %1510 = vmatprep.subr.mxu0 %v1319
      %1511 = vmatpush2.msra.mxu0 %v1318
      %1512 = vmatprep.mubr.f32.mxu0 %v1442
      %1513 = vmatmul.mubr.f32.gmra.mxu0 %v1434
      %v1514 = vpop.f32.mrf.mxu0
      %v1515 = vadd.f32 %v1419, %v1514
      %v1516 = vpop.f32.mrf.mxu0
      %v1517 = vadd.f32 %v1423, %v1516
      %1518 = vdwg.mxu0
      %1519 = vmatprep.subr.mxu0 %v1381
      %1520 = vmatpush1.msra.mxu0 %v1380
      %1521 = vmatprep.subr.mxu0 %v1379
      %1522 = vmatpush1.msra.mxu0 %v1378
      %1523 = vmatprep.subr.mxu0 %v1377
      %1524 = vmatpush1.msra.mxu0 %v1376
      %1525 = vmatprep.subr.mxu0 %v1375
      %1526 = vmatpush1.msra.mxu0 %v1374
      %1527 = vmatprep.subr.mxu0 %v1373
      %1528 = vmatpush1.msra.mxu0 %v1372
      %1529 = vmatprep.subr.mxu0 %v1371
      %1530 = vmatpush1.msra.mxu0 %v1370
      %1531 = vmatprep.subr.mxu0 %v1369
      %1532 = vmatpush1.msra.mxu0 %v1368
      %1533 = vmatprep.subr.mxu0 %v1367
      %1534 = vmatpush1.msra.mxu0 %v1366
      %1535 = vmatprep.subr.mxu0 %v1365
      %1536 = vmatpush1.msra.mxu0 %v1364
      %1537 = vmatprep.subr.mxu0 %v1363
      %1538 = vmatpush1.msra.mxu0 %v1362
      %1539 = vmatprep.subr.mxu0 %v1361
      %1540 = vmatpush1.msra.mxu0 %v1360
      %1541 = vmatprep.subr.mxu0 %v1359
      %1542 = vmatpush1.msra.mxu0 %v1358
      %1543 = vmatprep.subr.mxu0 %v1357
      %1544 = vmatpush1.msra.mxu0 %v1356
      %1545 = vmatprep.subr.mxu0 %v1355
      %1546 = vmatpush1.msra.mxu0 %v1354
      %1547 = vmatprep.subr.mxu0 %v1353
      %1548 = vmatpush1.msra.mxu0 %v1352
      %1549 = vmatprep.subr.mxu0 %v1351
      %1550 = vmatpush1.msra.mxu0 %v1350
      %1551 = vmatprep.subr.mxu0 %v1413
      %1552 = vmatpush2.msra.mxu0 %v1412
      %1553 = vmatprep.subr.mxu0 %v1411
      %1554 = vmatpush2.msra.mxu0 %v1410
      %1555 = vmatprep.subr.mxu0 %v1409
      %1556 = vmatpush2.msra.mxu0 %v1408
      %1557 = vmatprep.subr.mxu0 %v1407
      %1558 = vmatpush2.msra.mxu0 %v1406
      %1559 = vmatprep.subr.mxu0 %v1405
      %1560 = vmatpush2.msra.mxu0 %v1404
      %1561 = vmatprep.subr.mxu0 %v1403
      %1562 = vmatpush2.msra.mxu0 %v1402
      %1563 = vmatprep.subr.mxu0 %v1401
      %1564 = vmatpush2.msra.mxu0 %v1400
      %1565 = vmatprep.subr.mxu0 %v1399
      %1566 = vmatpush2.msra.mxu0 %v1398
      %1567 = vmatprep.subr.mxu0 %v1397
      %1568 = vmatpush2.msra.mxu0 %v1396
      %1569 = vmatprep.subr.mxu0 %v1395
      %1570 = vmatpush2.msra.mxu0 %v1394
      %1571 = vmatprep.subr.mxu0 %v1393
      %1572 = vmatpush2.msra.mxu0 %v1392
      %1573 = vmatprep.subr.mxu0 %v1391
      %1574 = vmatpush2.msra.mxu0 %v1390
      %1575 = vmatprep.subr.mxu0 %v1389
      %1576 = vmatpush2.msra.mxu0 %v1388
      %1577 = vmatprep.subr.mxu0 %v1387
      %1578 = vmatpush2.msra.mxu0 %v1386
      %1579 = vmatprep.subr.mxu0 %v1385
      %1580 = vmatpush2.msra.mxu0 %v1384
      %1581 = vmatprep.subr.mxu0 %v1383
      %1582 = vmatpush2.msra.mxu0 %v1382
      %1583 = vmatprep.mubr.f32.mxu0 %v1443
      %1584 = vmatmul.mubr.f32.gmra.mxu0 %v1441
      %v1585 = vpop.f32.mrf.mxu0
      %v1586 = vadd.f32 %v1515, %v1585
      %v1587 = vpop.f32.mrf.mxu0
      %v1588 = vadd.f32 %v1517, %v1587
      %1589 = vdwg.mxu0
      %v1590 = vmax.f32 %v1586, 0.0
      %v1591 = vmax.f32 %v1588, 0.0
      %v1592 = vld [vmem:[%s5] sm:$0xff]
      %v1593 = vld [vmem:[%s5 + $0x8] sm:$0xff]
      %v1594 = vld [vmem:[%s5 + $0x10] sm:$0xff]
      %v1595 = vld [vmem:[%s5 + $0x18] sm:$0xff]
      %v1596 = vld [vmem:[%s5 + $0x20] sm:$0xff]
      %v1597 = vld [vmem:[%s5 + $0x28] sm:$0xff]
      %v1598 = vld [vmem:[%s5 + $0x30] sm:$0xff]
      %v1599 = vld [vmem:[%s5 + $0x38] sm:$0xff]
      %v1600 = vld [vmem:[%s5 + $0x40] sm:$0xff]
      %v1601 = vld [vmem:[%s5 + $0x48] sm:$0xff]
      %v1602 = vld [vmem:[%s5 + $0x50] sm:$0xff]
      %v1603 = vld [vmem:[%s5 + $0x58] sm:$0xff]
      %v1604 = vld [vmem:[%s5 + $0x60] sm:$0xff]
      %v1605 = vld [vmem:[%s5 + $0x68] sm:$0xff]
      %v1606 = vld [vmem:[%s5 + $0x70] sm:$0xff]
      %v1607 = vld [vmem:[%s5 + $0x78] sm:$0xff]
      %v1608 = vld [vmem:[%s5 + $0x80] sm:$0xff]
      %v1609 = vld [vmem:[%s5 + $0x88] sm:$0xff]
      %v1610 = vld [vmem:[%s5 + $0x90] sm:$0xff]
      %v1611 = vld [vmem:[%s5 + $0x98] sm:$0xff]
      %v1612 = vld [vmem:[%s5 + $0xa0] sm:$0xff]
      %v1613 = vld [vmem:[%s5 + $0xa8] sm:$0xff]
      %v1614 = vld [vmem:[%s5 + $0xb0] sm:$0xff]
      %v1615 = vld [vmem:[%s5 + $0xb8] sm:$0xff]
      %v1616 = vld [vmem:[%s5 + $0xc0] sm:$0xff]
      %v1617 = vld [vmem:[%s5 + $0xc8] sm:$0xff]
      %v1618 = vld [vmem:[%s5 + $0xd0] sm:$0xff]
      %v1619 = vld [vmem:[%s5 + $0xd8] sm:$0xff]
      %v1620 = vld [vmem:[%s5 + $0xe0] sm:$0xff]
      %v1621 = vld [vmem:[%s5 + $0xe8] sm:$0xff]
      %v1622 = vld [vmem:[%s5 + $0xf0] sm:$0xff]
      %v1623 = vld [vmem:[%s5 + $0xf8] sm:$0xff]
      %v1624 = vld [vmem:[#allocation10] sm:$0x1]
      %v1626 = vlaneseq
      %v1627 = vshrl.u32 %v1626, 7
      %v1628 = vsub.s32 0, %v1627
      %v1629 = vrot.slane %v1624, %v1628
      %1631 = vmatprep.subr.mxu0 0.0
      %1632 = vmatpush1.msra.mxu0 %v1607
      %1633 = vmatprep.subr.mxu0 0.0
      %1634 = vmatpush1.msra.mxu0 %v1606
      %1635 = vmatprep.subr.mxu0 0.0
      %1636 = vmatpush1.msra.mxu0 %v1605
      %1637 = vmatprep.subr.mxu0 0.0
      %1638 = vmatpush1.msra.mxu0 %v1604
      %1639 = vmatprep.subr.mxu0 0.0
      %1640 = vmatpush1.msra.mxu0 %v1603
      %1641 = vmatprep.subr.mxu0 0.0
      %1642 = vmatpush1.msra.mxu0 %v1602
      %1643 = vmatprep.subr.mxu0 0.0
      %1644 = vmatpush1.msra.mxu0 %v1601
      %1645 = vmatprep.subr.mxu0 0.0
      %1646 = vmatpush1.msra.mxu0 %v1600
      %1647 = vmatprep.subr.mxu0 0.0
      %1648 = vmatpush1.msra.mxu0 %v1599
      %1649 = vmatprep.subr.mxu0 0.0
      %1650 = vmatpush1.msra.mxu0 %v1598
      %1651 = vmatprep.subr.mxu0 0.0
      %1652 = vmatpush1.msra.mxu0 %v1597
      %1653 = vmatprep.subr.mxu0 0.0
      %1654 = vmatpush1.msra.mxu0 %v1596
      %1655 = vmatprep.subr.mxu0 0.0
      %1656 = vmatpush1.msra.mxu0 %v1595
      %1657 = vmatprep.subr.mxu0 0.0
      %1658 = vmatpush1.msra.mxu0 %v1594
      %1659 = vmatprep.subr.mxu0 0.0
      %1660 = vmatpush1.msra.mxu0 %v1593
      %1661 = vmatprep.subr.mxu0 0.0
      %1662 = vmatpush1.msra.mxu0 %v1592
      %1663 = vmatprep.subr.mxu0 0.0
      %1664 = vmatpush2.msra.mxu0 %v1623
      %1665 = vmatprep.subr.mxu0 0.0
      %1666 = vmatpush2.msra.mxu0 %v1622
      %1667 = vmatprep.subr.mxu0 0.0
      %1668 = vmatpush2.msra.mxu0 %v1621
      %1669 = vmatprep.subr.mxu0 0.0
      %1670 = vmatpush2.msra.mxu0 %v1620
      %1671 = vmatprep.subr.mxu0 0.0
      %1672 = vmatpush2.msra.mxu0 %v1619
      %1673 = vmatprep.subr.mxu0 0.0
      %1674 = vmatpush2.msra.mxu0 %v1618
      %1675 = vmatprep.subr.mxu0 0.0
      %1676 = vmatpush2.msra.mxu0 %v1617
      %1677 = vmatprep.subr.mxu0 0.0
      %1678 = vmatpush2.msra.mxu0 %v1616
      %1679 = vmatprep.subr.mxu0 0.0
      %1680 = vmatpush2.msra.mxu0 %v1615
      %1681 = vmatprep.subr.mxu0 0.0
      %1682 = vmatpush2.msra.mxu0 %v1614
      %1683 = vmatprep.subr.mxu0 0.0
      %1684 = vmatpush2.msra.mxu0 %v1613
      %1685 = vmatprep.subr.mxu0 0.0
      %1686 = vmatpush2.msra.mxu0 %v1612
      %1687 = vmatprep.subr.mxu0 0.0
      %1688 = vmatpush2.msra.mxu0 %v1611
      %1689 = vmatprep.subr.mxu0 0.0
      %1690 = vmatpush2.msra.mxu0 %v1610
      %1691 = vmatprep.subr.mxu0 0.0
      %1692 = vmatpush2.msra.mxu0 %v1609
      %1693 = vmatprep.subr.mxu0 0.0
      %1694 = vmatpush2.msra.mxu0 %v1608
      %1695 = vmatprep.mubr.f32.mxu0 %v1591
      %1696 = vmatmul.mubr.f32.gmra.mxu0 %v1590
      %v1697 = vpop.f32.mrf.mxu0
      %v1698 = vadd.f32 %v1629, %v1697
      %v1699 = vpop.f32.mrf.mxu0
      %1700 = vdwg.mxu0
      %v1701 = vlaneseq
      %v1702 = vand.u32 %v1701, 127
      %v1703 = vsub.f32 0.0, %v1698
      %v1704 = vmul.f32 %v1703, 1.442695
      %v1705 = vpow.pop %v1704
      %v1706 = vadd.f32 %v1705, 1.0
      %v1707 = vrcp.pop %v1706
      %v1708 = vmul.f32 1.0, %v1707
      %vm1709 = vcmp.gt.f32.partialorder %v1698, 20.0
      %v1710 = vmin.f32 %v1698, 20.0
      %v1711 = vmul.f32 %v1710, 1.442695
      %v1712 = vpow.pop %v1711
      %v1713 = vadd.f32 %v1712, 1.0
      %v1714 = vlog2.pop %v1713
      %v1715 = vmul.f32 %v1714, 0.6931472
      %v1716 = vmul.f32 -0.5, %v1712
      %v1717 = vadd.f32 %v1716, 1.0
      %v1718 = vmul.f32 %v1717, %v1712
      %v1719 = vand.u32 2147483647, %v1712
      %vm1720 = vcmp.lt.f32.partialorder %v1719, 0.0004427343
      %v1721 = vsel %vm1720, %v1718, %v1715
      %v1722 = vsel %vm1709, %v1698, %v1721
      %vm1723 = vcmp.eq.s32.totalorder %v1702, 0
      %vm1724 = vcmp.eq.s32.totalorder %v1702, 24
      %v1725 = vsel %vm1724, %v1722, %v1698
      %v1726 = vsel %vm1723, %v1708, %v1725
      %vm1727 = vcmask 197632
      %1728 = vst.msk [vmem:[%s7] sm:$0x3] %vm1727, %v1726
    $region57: #{forward.3} parent=1 // pred_fallthru
      _
    // Predicated region
    $region58: #{forward.3} parent=1 // pred_check
      _
    $region59: #{forward.3} parent=1 // pred_check_branch
      %1730 = sbr.rel (0) target = $region61
    $region60: #{forward.3} parent=1 // pred_region
      _
    $region61: #{forward.3} parent=1 // pred_fallthru
      _
    // Predicated region
    $region62: #{forward.3} parent=1 // pred_check
      _
    $region63: #{forward.3} parent=1 // pred_check_branch
      %1732 = sbr.rel (0) target = $region65
    $region64: #{forward.3} parent=1 // pred_region
      _
    $region65: #{forward.3} parent=1 // pred_fallthru
      _
    %1733 = vsyncpa [#allocation4], 1
    %1734 = vsyncpa [#allocation6], 1
    %1735 = vsyncpa [#allocation9], 1

</llo_original>
